<compile_context>
chip_gen: v5e
topology: v5e:2x2
jax: 0.10.0
libtpu: 0.0.40
codegen_flags: <defaults>
</compile_context>

<pallas_src>
import functools

import jax
import jax.numpy as jnp
from jax import lax
from jax.experimental import pallas as pl
from jax.experimental.pallas import tpu as pltpu


TILE_PIXELS = 16384                   # lane-dense pixel tile for conv / loss kernels
LOSS_VMEM_LIMIT = 32 * 1024 * 1024    # raise v5e's 16 MiB scoped default; matches v6e/v7x


def _pixel_tile(hw, target=TILE_PIXELS):
    # Full pixel axis if it fits (always a legal block), otherwise a 128-multiple tile.
    if hw <= target:
        return hw
    return (target // 128) * 128


def resize_bilinear(x, out_h, out_w):
    # PyTorch F.upsample(mode='bilinear', align_corners=False) equivalent (dtype-preserving).
    n, c, _, _ = x.shape
    return jax.image.resize(x, (n, c, out_h, out_w), method="bilinear", antialias=False)


# ----------------------------------------------------------------------------
# Pallas kernel 1: 1x1 conv, channel-major  o[cout, p] = sum_cin w[cout,cin]*x[cin,p] + b[cout]
# bf16 operands, f32 MXU accumulate, out dtype selectable (bf16 by default -> half writeback).
# ----------------------------------------------------------------------------
def _conv1x1_kernel(x_ref, w_ref, b_ref, o_ref):
    acc = jnp.dot(w_ref[...], x_ref[...], preferred_element_type=jnp.float32) + b_ref[...]
    o_ref[...] = acc.astype(o_ref.dtype)


def conv1x1(x_nchw, w, b, out_dtype=jnp.bfloat16):
    n, cin, h, wd = x_nchw.shape
    cout = w.shape[0]
    hw = h * wd
    x = x_nchw.reshape(n, cin, hw).astype(jnp.bfloat16)
    wq = w.astype(jnp.bfloat16)
    tp = _pixel_tile(hw)
    nt = pl.cdiv(hw, tp)
    out = pl.pallas_call(
        _conv1x1_kernel,
        out_shape=jax.ShapeDtypeStruct((n, cout, hw), out_dtype),
        grid=(n, nt),
        in_specs=[
            pl.BlockSpec((None, cin, tp), lambda i, j: (i, 0, j)),
            pl.BlockSpec((cout, cin), lambda i, j: (0, 0)),
            pl.BlockSpec((cout, 1), lambda i, j: (0, 0)),
        ],
        out_specs=pl.BlockSpec((None, cout, tp), lambda i, j: (i, 0, j)),
        compiler_params=pltpu.CompilerParams(
            dimension_semantics=("parallel", "parallel")),
    )(x, wq, b)
    return out.reshape(n, cout, h, wd)


# ----------------------------------------------------------------------------
# shared CE tile math (channel-major): logits (C, TP) f32, tgt (1, TP) i32
# torch.nn.CrossEntropyLoss semantics: returns (sum_i w[y_i]*nll_i, sum_i w[y_i]) over valid i
# ----------------------------------------------------------------------------
def _ce_tile(logits, tgt, valid, wcol=None):
    m = jnp.max(logits, axis=0, keepdims=True)
    lse = m + jnp.log(jnp.sum(jnp.exp(logits - m), axis=0, keepdims=True))
    cls = lax.broadcasted_iota(jnp.int32, (logits.shape[0], 1), 0)       # (C,1)
    onehot = cls == tgt                                                  # (C,TP) via broadcast
    logit_t = jnp.sum(jnp.where(onehot, logits, 0.0), axis=0, keepdims=True)
    if wcol is None:
        w_t = jnp.ones_like(lse)
    else:
        w_t = jnp.sum(jnp.where(onehot, wcol, 0.0), axis=0, keepdims=True)
    nll = (lse - logit_t) * w_t
    loss_sum = jnp.sum(jnp.where(valid, nll, 0.0))
    w_sum = jnp.sum(jnp.where(valid, w_t, 0.0))
    return loss_sum, w_sum


# ----------------------------------------------------------------------------
# Pallas kernel 2: FUSED loss kernel — one pass over full-res pixels computes
#   loss_warp          = CE(prop, tgt, ignore=255)
#   loss_semantic      = CE(prop*(1-dm2) + cc*dm2, tgt, ignore=255), dm2 = 0.8*softmax(edge)[1]+0.2*dmf
#   loss_edge          = CE(edge, edge_label, weight=edge_w, ignore=255)
#   loss_edge_semantic = CE(argmax(edge)*cc, argmax(edge)*tgt, ignore=0)
# with per-(batch, pixel-half) accumulator outputs.
# ----------------------------------------------------------------------------
def _fused_loss_kernel(prop_ref, cc_ref, edge_ref, dmf_ref, tgt_ref, elab_ref, ew_ref,
                       lw_ref, ww_ref, ls_ref, ws_ref, le_ref, we_ref, les_ref, wes_ref,
                       *, hw, tp, nt, nt_half, split):
    j = pl.program_id(2)

    @pl.when(j == 0)
    def _():
        for r in (lw_ref, ww_ref, ls_ref, ws_ref, le_ref, we_ref, les_ref, wes_ref):
            r[...] = jnp.zeros_like(r)

    prop = prop_ref[...].astype(jnp.float32)    # (C, TP)
    cc = cc_ref[...].astype(jnp.float32)        # (C, TP)
    e = edge_ref[...].astype(jnp.float32)       # (2, TP)
    dmf = dmf_ref[...].astype(jnp.float32)      # (1, TP)
    tgt = tgt_ref[...]                          # (1, TP) int32
    elab = elab_ref[...]                        # (1, TP) int32
    ew = ew_ref[...].astype(jnp.float32)        # (2, 1)

    # bounds mask: elided at compile time when the pixel axis divides evenly and
    # the pixel-half split covers exactly nt tiles.
    need_pixel_mask = (hw % tp) != 0
    need_tile_mask = (split * nt_half) != nt
    base = None
    if need_pixel_mask or need_tile_mask:
        s = pl.program_id(1)
        tile = s * nt_half + j
        clamped = jnp.minimum(tile, nt - 1)
        lane = lax.broadcasted_iota(jnp.int32, (1, tp), 1)
        base = (clamped * tp + lane) < hw
        if need_tile_mask:
            base = base & (tile < nt)

    def with_base(v):
        return v if base is None else (v & base)

    # 1) loss_warp
    v12 = with_base(tgt != 255)
    l1, w1 = _ce_tile(prop, tgt, v12)
    lw_ref[...] += l1.reshape(1, 1)
    ww_ref[...] += w1.reshape(1, 1)

    # 2) loss_semantic (softmax over 2 edge channels == sigmoid(e1 - e0); reciprocal on EUP slot)
    p1 = pl.reciprocal(1.0 + jnp.exp(e[0:1, :] - e[1:2, :]), approx=True)
    dm2 = 0.8 * p1 + 0.2 * dmf                                   # (1, TP)
    merged = prop + (cc - prop) * dm2                            # == prop*(1-dm2)+cc*dm2
    l2, w2 = _ce_tile(merged, tgt, v12)
    ls_ref[...] += l2.reshape(1, 1)
    ws_ref[...] += w2.reshape(1, 1)

    # 3) loss_edge (pos/neg class-weighted)
    v3 = with_base(elab != 255)
    l3, w3 = _ce_tile(e, elab, v3, ew)
    le_ref[...] += l3.reshape(1, 1)
    we_ref[...] += w3.reshape(1, 1)

    # 4) loss_edge_semantic (edge argmax masking, ignore_index=0)
    eam = e[1:2, :] > e[0:1, :]                                  # argmax over 2 channels (ties -> 0)
    logits4 = jnp.where(eam, cc, 0.0)
    tgt4 = jnp.where(eam, tgt, 0)
    v4 = with_base(tgt4 != 0)
    l4, w4 = _ce_tile(logits4, tgt4, v4)
    les_ref[...] += l4.reshape(1, 1)
    wes_ref[...] += w4.reshape(1, 1)


def fused_losses(prop_nchw, cc_nchw, edge_nchw, dmf_nchw, target_nhw, edge_label_nhw, edge_w):
    n, c, h, w = prop_nchw.shape
    hw = h * w
    tp = _pixel_tile(hw)
    nt = pl.cdiv(hw, tp)
    split = 2 if nt >= 2 else 1        # pixel-half split keeps both v7x TCs busy even at N==1
    nt_half = pl.cdiv(nt, split)

    prop = prop_nchw.reshape(n, c, hw)
    cc = cc_nchw.reshape(n, c, hw)
    edge = edge_nchw.reshape(n, 2, hw)
    dmf = dmf_nchw.reshape(n, 1, hw)
    tgt = target_nhw.reshape(n, 1, hw).astype(jnp.int32)
    elab = edge_label_nhw.reshape(n, 1, hw).astype(jnp.int32)
    ew = edge_w.reshape(2, 1).astype(jnp.float32)

    if split * nt_half == nt:
        def tile_map(i, s, j):
            return (i, 0, s * nt_half + j)
    else:
        def tile_map(i, s, j):
            return (i, 0, jnp.minimum(s * nt_half + j, nt - 1))

    in_specs = [
        pl.BlockSpec((None, c, tp), tile_map),
        pl.BlockSpec((None, c, tp), tile_map),
        pl.BlockSpec((None, 2, tp), tile_map),
        pl.BlockSpec((None, 1, tp), tile_map),
        pl.BlockSpec((None, 1, tp), tile_map),
        pl.BlockSpec((None, 1, tp), tile_map),
        pl.BlockSpec((2, 1), lambda i, s, j: (0, 0)),
    ]
    acc_shape = jax.ShapeDtypeStruct((n * split, 1, 1), jnp.float32)
    acc_spec = pl.BlockSpec((None, 1, 1), lambda i, s, j: (i * split + s, 0, 0))

    kern = functools.partial(_fused_loss_kernel, hw=hw, tp=tp, nt=nt,
                             nt_half=nt_half, split=split)
    outs = pl.pallas_call(
        kern,
        out_shape=(acc_shape,) * 8,
        grid=(n, split, nt_half),
        in_specs=in_specs,
        out_specs=(acc_spec,) * 8,
        compiler_params=pltpu.CompilerParams(
            dimension_semantics=("parallel", "parallel", "arbitrary"),
            vmem_limit_bytes=LOSS_VMEM_LIMIT),
    )(prop, cc, edge, dmf, tgt, elab, ew)

    lw, ww, ls, ws, le, we, les, wes = outs
    # divide only AFTER summing partials over (batch, half) — keeps zero-weight items safe
    loss_warp = jnp.sum(lw) / jnp.sum(ww)
    loss_semantic = jnp.sum(ls) / jnp.sum(ws)
    loss_edge = jnp.sum(le) / jnp.sum(we)
    loss_edge_semantic = jnp.sum(les) / jnp.sum(wes)
    return loss_warp, loss_semantic, loss_edge, loss_edge_semantic


# ----------------------------------------------------------------------------
# JAX glue: backward bilinear warp (grid_sample-style, zero padding for OOB)
# ----------------------------------------------------------------------------
def bilinear_warp(x, flow):
    # TODO(synk): exact `warp` module / grid_sample normalization not provided in the reference;
    # standard FlowNet-style backward warp (zero OOB padding) assumed. Data-dependent gather is
    # kept in XLA (per-channel-shared index, one take_along_axis per corner).
    n, c, h, w = x.shape
    ys, xs = jnp.meshgrid(
        jnp.arange(h, dtype=jnp.float32), jnp.arange(w, dtype=jnp.float32), indexing="ij"
    )
    gx = xs[None] + flow[:, 0]
    gy = ys[None] + flow[:, 1]
    x0 = jnp.floor(gx)
    y0 = jnp.floor(gy)
    x1 = x0 + 1.0
    y1 = y0 + 1.0
    wx = gx - x0
    wy = gy - y0
    xf = x.reshape(n, c, h * w)

    def gather(xi, yi):
        valid = ((xi >= 0) & (xi <= w - 1) & (yi >= 0) & (yi <= h - 1)).astype(x.dtype)
        xi_c = jnp.clip(xi, 0, w - 1).astype(jnp.int32)
        yi_c = jnp.clip(yi, 0, h - 1).astype(jnp.int32)
        idx = (yi_c * w + xi_c).reshape(n, 1, h * w)
        g = jnp.take_along_axis(xf, jnp.broadcast_to(idx, (n, c, h * w)), axis=2)
        return g.reshape(n, c, h, w) * valid[:, None]

    return (
        gather(x0, y0) * ((1 - wx) * (1 - wy))[:, None]
        + gather(x1, y0) * (wx * (1 - wy))[:, None]
        + gather(x0, y1) * ((1 - wx) * wy)[:, None]
        + gather(x1, y1) * (wx * wy)[:, None]
    )


# ----------------------------------------------------------------------------
# VSSNet (Pallas) — forward-pass semantics of model/evss_citys.py::VSSNet.forward
# ----------------------------------------------------------------------------
def _forward_impl(params, img0, img1, edge_label):
    n, c, h, w = img0.shape
    h4, w4 = h // 4, w // 4

    # csrnet stand-in: 1/4-res class logits (bf16 transport)
    img_1_feat = conv1x1(resize_bilinear(img0, h4, w4), params["csr_w"], params["csr_b"])
    warp_img = resize_bilinear(img0, h4, w4)                             # parity; unused downstream
    img_1_mask = jnp.argmax(img_1_feat, axis=1)[:, None]

    img_2_logits = conv1x1(resize_bilinear(img1, h4, w4), params["csr_w"], params["csr_b"])
    img_2_mask = jnp.argmax(resize_bilinear(img_2_logits, h, w), axis=1).astype(jnp.int32)

    # flownet stand-in (flow kept f32 for warp-coordinate precision)
    flow_in = resize_bilinear(jnp.concatenate([img1, img0], axis=1), h4, w4)
    flow = conv1x1(flow_in, params["flow_w"], params["flow_b"], out_dtype=jnp.float32)
    flow = jnp.tanh(flow) * 2.0

    img_2_feat = bilinear_warp(img_1_feat, flow).astype(jnp.bfloat16)    # cast at 1/4 res
    img_2_mask_flow = jnp.argmax(img_2_feat, axis=1)[:, None]
    warp_img = bilinear_warp(warp_img, flow)                             # parity; unused downstream

    img_2_out_propagate = resize_bilinear(img_2_feat, h, w)              # bf16 full-res

    img_2_out_propagate_warp = jnp.argmax(img_2_out_propagate, axis=1, keepdims=True)
    label_dm2 = (img_2_out_propagate_warp != img_2_mask[:, None]).astype(jnp.float32)  # parity; unused
    dm_flow = (img_1_mask != img_2_mask_flow).astype(jnp.bfloat16)       # 1/4-res bf16

    # conet stand-in: edge + class-correction heads fused into ONE matmul (shared input read)
    co_in = jnp.concatenate(
        [resize_bilinear(img1, h4, w4).astype(jnp.bfloat16), img_2_feat], axis=1)
    co_out = conv1x1(co_in, params["co_w"], params["co_b"])              # (N, 2+nc, h/4, w/4) bf16
    edge_feat = co_out[:, :2]
    cc_feat = co_out[:, 2:]

    edge = resize_bilinear(edge_feat, h, w)                              # bf16 full-res
    img_2_out_cc = resize_bilinear(cc_feat, h, w)                        # bf16 full-res
    dm_flow_up = resize_bilinear(dm_flow, h, w)                          # bf16 full-res

    # Edge_criterion: pos/neg-balanced class weights, ignore_index=255
    pos_num = jnp.sum((edge_label == 1).astype(jnp.float32))
    neg_num = jnp.sum((edge_label == 0).astype(jnp.float32))
    weight_pos = neg_num / (pos_num + neg_num)
    weight_neg = pos_num / (pos_num + neg_num)
    edge_w = jnp.stack([weight_neg, weight_pos])

    # single fused pass over the full-res slabs computes all four losses
    loss_warp, loss_semantic, loss_edge, loss_edge_semantic = fused_losses(
        img_2_out_propagate, img_2_out_cc, edge, dm_flow_up,
        img_2_mask, edge_label, edge_w)

    del warp_img, label_dm2  # computed for parity with reference; unused (DCE'd under jit)
    return (loss_warp[None], loss_semantic[None], loss_edge[None], loss_edge_semantic[None])


_forward_jit = jax.jit(_forward_impl)


def _init_linear(key, cin, cout):
    k1, k2 = jax.random.split(key)
    w = jax.random.normal(k1, (cout, cin), jnp.float32) * (cin ** -0.5)
    b = jax.random.normal(k2, (cout, 1), jnp.float32) * 0.01
    return w, b


class VSSNetPallas:
    def __init__(self, n_classes=19, key=jax.random.PRNGKey(42)):
        self.n_classes = n_classes
        ks = jax.random.split(key, 3)
        # TODO(synk): resnet18/SemsegModel, FlowNets and CoNet definitions are not provided;
        # they are replaced by deterministic 1x1-conv stand-ins with the correct I/O contracts
        # (1/4-resolution class logits, 2-channel flow, 2-channel edge + class correction).
        csr_w, csr_b = _init_linear(ks[0], 3, n_classes)
        flow_w, flow_b = _init_linear(ks[1], 6, 2)
        co_w, co_b = _init_linear(ks[2], 3 + n_classes, 2 + n_classes)  # fused edge(2)+cc(nc) head
        self.params = {
            "csr_w": csr_w, "csr_b": csr_b,
            "flow_w": flow_w, "flow_b": flow_b,
            "co_w": co_w, "co_b": co_b,
        }

    def forward(self, img_list, label=None, edge_label=None):
        img0, img1 = img_list
        return _forward_jit(self.params, img0, img1, edge_label)


if __name__ == "__main__":
    key = jax.random.PRNGKey(0)
    k1, k2, k3, k4 = jax.random.split(key, 4)
    N, C, H, W = 2, 3, 16, 16
    n_classes = 19

    img0 = jax.random.normal(k1, (N, C, H, W), jnp.float32)
    img1 = jax.random.normal(k2, (N, C, H, W), jnp.float32)
    label = jax.random.randint(k3, (N, H, W), 0, n_classes)      # accepted for API parity
    edge_label = jax.random.randint(k4, (N, H, W), 0, 2)

    net = VSSNetPallas(n_classes=n_classes, key=jax.random.PRNGKey(42))
    losses = net.forward([img0, img1], label, edge_label)
    losses = jax.block_until_ready(losses)
    print("KERNEL_OK")
</pallas_src>

<mosaic_0001>
module attributes {stable_mosaic.version = 11 : i64} {
  func.func @_conv1x1_kernel(%arg0: i32, %arg1: i32, %arg2: memref<1x3x16xbf16, #tpu.memory_space<vmem>>, %arg3: memref<19x3xbf16, #tpu.memory_space<vmem>>, %arg4: memref<19x1xf32, #tpu.memory_space<vmem>>, %arg5: memref<1x19x16xbf16, #tpu.memory_space<vmem>>) attributes {dimension_semantics = [#tpu.dimension_semantics<parallel>, #tpu.dimension_semantics<parallel>], iteration_bounds = array<i64: 2, 1>, scalar_prefetch = 0 : i64, scratch_operands = 0 : i64, tpu.core_type = #tpu.core_type<tc>, window_params = [{transform_indices = @transform_0, window_bounds = array<i64: 1, 3, 16>}, {pipeline_mode = #tpu.pipeline_mode<synchronous>, transform_indices = @transform_1, window_bounds = array<i64: 19, 3>}, {pipeline_mode = #tpu.pipeline_mode<synchronous>, transform_indices = @transform_2, window_bounds = array<i64: 19, 1>}, {transform_indices = @transform_3, window_bounds = array<i64: 1, 19, 16>}]} {
    %c0 = arith.constant 0 : index
    %c0_0 = arith.constant 0 : index
    %0 = vector.load %arg3[%c0, %c0_0] : memref<19x3xbf16, #tpu.memory_space<vmem>>, vector<19x3xbf16>
    %c0_1 = arith.constant 0 : index
    %c0_2 = arith.constant 0 : index
    %c0_3 = arith.constant 0 : index
    %1 = vector.load %arg2[%c0_1, %c0_2, %c0_3] : memref<1x3x16xbf16, #tpu.memory_space<vmem>>, vector<1x3x16xbf16>
    %2 = vector.shape_cast %1 : vector<1x3x16xbf16> to vector<3x16xbf16>
    %cst = arith.constant dense<0.000000e+00> : vector<19x16xf32>
    %3 = tpu.matmul %0, %2, %cst {dimension_numbers = #tpu.dot_dimension_numbers<[1], [0], [0], [1], [0, 0, 1, 1], [], []>} : vector<19x3xbf16>, vector<3x16xbf16>, vector<19x16xf32> -> vector<19x16xf32>
    %c0_4 = arith.constant 0 : index
    %c0_5 = arith.constant 0 : index
    %4 = vector.load %arg4[%c0_4, %c0_5] : memref<19x1xf32, #tpu.memory_space<vmem>>, vector<19x1xf32>
    %5 = vector.broadcast %4 : vector<19x1xf32> to vector<19x16xf32>
    %6 = arith.addf %3, %5 : vector<19x16xf32>
    %7 = arith.truncf %6 : vector<19x16xf32> to vector<19x16xbf16>
    %c0_6 = arith.constant 0 : index
    %c0_7 = arith.constant 0 : index
    %c0_8 = arith.constant 0 : index
    %8 = vector.load %arg5[%c0_6, %c0_7, %c0_8] : memref<1x19x16xbf16, #tpu.memory_space<vmem>>, vector<1x19x16xbf16>
    %9 = vector.shape_cast %8 : vector<1x19x16xbf16> to vector<19x16xbf16>
    %10 = vector.shape_cast %7 : vector<19x16xbf16> to vector<1x19x16xbf16>
    tpu.vector_store %arg5[%c0_6, %c0_7, %c0_8], %10 {strides = array<i32>} : memref<1x19x16xbf16, #tpu.memory_space<vmem>>, vector<1x19x16xbf16>,
    return
  }
  func.func @transform_0(%arg0: i32, %arg1: i32) -> (i32, i32, i32) {
    %c0_i32 = arith.constant 0 : i32
    %c0_i32_0 = arith.constant 0 : i32
    return %arg0, %c0_i32, %arg1 : i32, i32, i32
  }
  func.func @transform_1(%arg0: i32, %arg1: i32) -> (i32, i32) {
    %c0_i32 = arith.constant 0 : i32
    %c0_i32_0 = arith.constant 0 : i32
    %c0_i32_1 = arith.constant 0 : i32
    return %c0_i32, %c0_i32_0 : i32, i32
  }
  func.func @transform_2(%arg0: i32, %arg1: i32) -> (i32, i32) {
    %c0_i32 = arith.constant 0 : i32
    %c0_i32_0 = arith.constant 0 : i32
    %c0_i32_1 = arith.constant 0 : i32
    return %c0_i32, %c0_i32_0 : i32, i32
  }
  func.func @transform_3(%arg0: i32, %arg1: i32) -> (i32, i32, i32) {
    %c0_i32 = arith.constant 0 : i32
    %c0_i32_0 = arith.constant 0 : i32
    return %arg0, %c0_i32, %arg1 : i32, i32, i32
  }
}

module attributes {stable_mosaic.version = 11 : i64} {
  func.func @_conv1x1_kernel(%arg0: i32, %arg1: i32, %arg2: memref<1x6x16xbf16, #tpu.memory_space<vmem>>, %arg3: memref<2x6xbf16, #tpu.memory_space<vmem>>, %arg4: memref<2x1xf32, #tpu.memory_space<vmem>>, %arg5: memref<1x2x16xf32, #tpu.memory_space<vmem>>) attributes {dimension_semantics = [#tpu.dimension_semantics<parallel>, #tpu.dimension_semantics<parallel>], iteration_bounds = array<i64: 2, 1>, scalar_prefetch = 0 : i64, scratch_operands = 0 : i64, tpu.core_type = #tpu.core_type<tc>, window_params = [{transform_indices = @transform_0, window_bounds = array<i64: 1, 6, 16>}, {pipeline_mode = #tpu.pipeline_mode<synchronous>, transform_indices = @transform_1, window_bounds = array<i64: 2, 6>}, {pipeline_mode = #tpu.pipeline_mode<synchronous>, transform_indices = @transform_2, window_bounds = array<i64: 2, 1>}, {transform_indices = @transform_3, window_bounds = array<i64: 1, 2, 16>}]} {
    %c0 = arith.constant 0 : index
    %c0_0 = arith.constant 0 : index
    %0 = vector.load %arg3[%c0, %c0_0] : memref<2x6xbf16, #tpu.memory_space<vmem>>, vector<2x6xbf16>
    %c0_1 = arith.constant 0 : index
    %c0_2 = arith.constant 0 : index
    %c0_3 = arith.constant 0 : index
    %1 = vector.load %arg2[%c0_1, %c0_2, %c0_3] : memref<1x6x16xbf16, #tpu.memory_space<vmem>>, vector<1x6x16xbf16>
    %2 = vector.shape_cast %1 : vector<1x6x16xbf16> to vector<6x16xbf16>
    %cst = arith.constant dense<0.000000e+00> : vector<2x16xf32>
    %3 = tpu.matmul %0, %2, %cst {dimension_numbers = #tpu.dot_dimension_numbers<[1], [0], [0], [1], [0, 0, 1, 1], [], []>} : vector<2x6xbf16>, vector<6x16xbf16>, vector<2x16xf32> -> vector<2x16xf32>
    %c0_4 = arith.constant 0 : index
    %c0_5 = arith.constant 0 : index
    %4 = vector.load %arg4[%c0_4, %c0_5] : memref<2x1xf32, #tpu.memory_space<vmem>>, vector<2x1xf32>
    %5 = vector.broadcast %4 : vector<2x1xf32> to vector<2x16xf32>
    %6 = arith.addf %3, %5 : vector<2x16xf32>
    %c0_6 = arith.constant 0 : index
    %c0_7 = arith.constant 0 : index
    %c0_8 = arith.constant 0 : index
    %7 = vector.load %arg5[%c0_6, %c0_7, %c0_8] : memref<1x2x16xf32, #tpu.memory_space<vmem>>, vector<1x2x16xf32>
    %8 = vector.shape_cast %7 : vector<1x2x16xf32> to vector<2x16xf32>
    %9 = vector.shape_cast %6 : vector<2x16xf32> to vector<1x2x16xf32>
    tpu.vector_store %arg5[%c0_6, %c0_7, %c0_8], %9 {strides = array<i32>} : memref<1x2x16xf32, #tpu.memory_space<vmem>>, vector<1x2x16xf32>,
    return
  }
  func.func @transform_0(%arg0: i32, %arg1: i32) -> (i32, i32, i32) {
    %c0_i32 = arith.constant 0 : i32
    %c0_i32_0 = arith.constant 0 : i32
    return %arg0, %c0_i32, %arg1 : i32, i32, i32
  }
  func.func @transform_1(%arg0: i32, %arg1: i32) -> (i32, i32) {
    %c0_i32 = arith.constant 0 : i32
    %c0_i32_0 = arith.constant 0 : i32
    %c0_i32_1 = arith.constant 0 : i32
    return %c0_i32, %c0_i32_0 : i32, i32
  }
  func.func @transform_2(%arg0: i32, %arg1: i32) -> (i32, i32) {
    %c0_i32 = arith.constant 0 : i32
    %c0_i32_0 = arith.constant 0 : i32
    %c0_i32_1 = arith.constant 0 : i32
    return %c0_i32, %c0_i32_0 : i32, i32
  }
  func.func @transform_3(%arg0: i32, %arg1: i32) -> (i32, i32, i32) {
    %c0_i32 = arith.constant 0 : i32
    %c0_i32_0 = arith.constant 0 : i32
    return %arg0, %c0_i32, %arg1 : i32, i32, i32
  }
}

module attributes {stable_mosaic.version = 11 : i64} {
  func.func @_conv1x1_kernel(%arg0: i32, %arg1: i32, %arg2: memref<1x22x16xbf16, #tpu.memory_space<vmem>>, %arg3: memref<21x22xbf16, #tpu.memory_space<vmem>>, %arg4: memref<21x1xf32, #tpu.memory_space<vmem>>, %arg5: memref<1x21x16xbf16, #tpu.memory_space<vmem>>) attributes {dimension_semantics = [#tpu.dimension_semantics<parallel>, #tpu.dimension_semantics<parallel>], iteration_bounds = array<i64: 2, 1>, scalar_prefetch = 0 : i64, scratch_operands = 0 : i64, tpu.core_type = #tpu.core_type<tc>, window_params = [{transform_indices = @transform_0, window_bounds = array<i64: 1, 22, 16>}, {pipeline_mode = #tpu.pipeline_mode<synchronous>, transform_indices = @transform_1, window_bounds = array<i64: 21, 22>}, {pipeline_mode = #tpu.pipeline_mode<synchronous>, transform_indices = @transform_2, window_bounds = array<i64: 21, 1>}, {transform_indices = @transform_3, window_bounds = array<i64: 1, 21, 16>}]} {
    %c0 = arith.constant 0 : index
    %c0_0 = arith.constant 0 : index
    %0 = vector.load %arg3[%c0, %c0_0] : memref<21x22xbf16, #tpu.memory_space<vmem>>, vector<21x22xbf16>
    %c0_1 = arith.constant 0 : index
    %c0_2 = arith.constant 0 : index
    %c0_3 = arith.constant 0 : index
    %1 = vector.load %arg2[%c0_1, %c0_2, %c0_3] : memref<1x22x16xbf16, #tpu.memory_space<vmem>>, vector<1x22x16xbf16>
    %2 = vector.shape_cast %1 : vector<1x22x16xbf16> to vector<22x16xbf16>
    %cst = arith.constant dense<0.000000e+00> : vector<21x16xf32>
    %3 = tpu.matmul %0, %2, %cst {dimension_numbers = #tpu.dot_dimension_numbers<[1], [0], [0], [1], [0, 0, 1, 1], [], []>} : vector<21x22xbf16>, vector<22x16xbf16>, vector<21x16xf32> -> vector<21x16xf32>
    %c0_4 = arith.constant 0 : index
    %c0_5 = arith.constant 0 : index
    %4 = vector.load %arg4[%c0_4, %c0_5] : memref<21x1xf32, #tpu.memory_space<vmem>>, vector<21x1xf32>
    %5 = vector.broadcast %4 : vector<21x1xf32> to vector<21x16xf32>
    %6 = arith.addf %3, %5 : vector<21x16xf32>
    %7 = arith.truncf %6 : vector<21x16xf32> to vector<21x16xbf16>
    %c0_6 = arith.constant 0 : index
    %c0_7 = arith.constant 0 : index
    %c0_8 = arith.constant 0 : index
    %8 = vector.load %arg5[%c0_6, %c0_7, %c0_8] : memref<1x21x16xbf16, #tpu.memory_space<vmem>>, vector<1x21x16xbf16>
    %9 = vector.shape_cast %8 : vector<1x21x16xbf16> to vector<21x16xbf16>
    %10 = vector.shape_cast %7 : vector<21x16xbf16> to vector<1x21x16xbf16>
    tpu.vector_store %arg5[%c0_6, %c0_7, %c0_8], %10 {strides = array<i32>} : memref<1x21x16xbf16, #tpu.memory_space<vmem>>, vector<1x21x16xbf16>,
    return
  }
  func.func @transform_0(%arg0: i32, %arg1: i32) -> (i32, i32, i32) {
    %c0_i32 = arith.constant 0 : i32
    %c0_i32_0 = arith.constant 0 : i32
    return %arg0, %c0_i32, %arg1 : i32, i32, i32
  }
  func.func @transform_1(%arg0: i32, %arg1: i32) -> (i32, i32) {
    %c0_i32 = arith.constant 0 : i32
    %c0_i32_0 = arith.constant 0 : i32
    %c0_i32_1 = arith.constant 0 : i32
    return %c0_i32, %c0_i32_0 : i32, i32
  }
  func.func @transform_2(%arg0: i32, %arg1: i32) -> (i32, i32) {
    %c0_i32 = arith.constant 0 : i32
    %c0_i32_0 = arith.constant 0 : i32
    %c0_i32_1 = arith.constant 0 : i32
    return %c0_i32, %c0_i32_0 : i32, i32
  }
  func.func @transform_3(%arg0: i32, %arg1: i32) -> (i32, i32, i32) {
    %c0_i32 = arith.constant 0 : i32
    %c0_i32_0 = arith.constant 0 : i32
    return %arg0, %c0_i32, %arg1 : i32, i32, i32
  }
}

module attributes {stable_mosaic.version = 11 : i64} {
  func.func @_fused_loss_kernel(%arg0: i32, %arg1: i32, %arg2: i32, %arg3: memref<1x19x256xbf16, #tpu.memory_space<vmem>>, %arg4: memref<1x19x256xbf16, #tpu.memory_space<vmem>>, %arg5: memref<1x2x256xbf16, #tpu.memory_space<vmem>>, %arg6: memref<1x1x256xbf16, #tpu.memory_space<vmem>>, %arg7: memref<1x1x256xi32, #tpu.memory_space<vmem>>, %arg8: memref<1x1x256xi32, #tpu.memory_space<vmem>>, %arg9: memref<2x1xf32, #tpu.memory_space<vmem>>, %arg10: memref<1x1x1xf32, #tpu.memory_space<vmem>>, %arg11: memref<1x1x1xf32, #tpu.memory_space<vmem>>, %arg12: memref<1x1x1xf32, #tpu.memory_space<vmem>>, %arg13: memref<1x1x1xf32, #tpu.memory_space<vmem>>, %arg14: memref<1x1x1xf32, #tpu.memory_space<vmem>>, %arg15: memref<1x1x1xf32, #tpu.memory_space<vmem>>, %arg16: memref<1x1x1xf32, #tpu.memory_space<vmem>>, %arg17: memref<1x1x1xf32, #tpu.memory_space<vmem>>) attributes {dimension_semantics = [#tpu.dimension_semantics<parallel>, #tpu.dimension_semantics<parallel>, #tpu.dimension_semantics<arbitrary>], iteration_bounds = array<i64: 2, 1, 1>, scalar_prefetch = 0 : i64, scratch_operands = 0 : i64, tpu.core_type = #tpu.core_type<tc>, window_params = [{transform_indices = @transform_0, window_bounds = array<i64: 1, 19, 256>}, {transform_indices = @transform_1, window_bounds = array<i64: 1, 19, 256>}, {transform_indices = @transform_2, window_bounds = array<i64: 1, 2, 256>}, {transform_indices = @transform_3, window_bounds = array<i64: 1, 1, 256>}, {transform_indices = @transform_4, window_bounds = array<i64: 1, 1, 256>}, {transform_indices = @transform_5, window_bounds = array<i64: 1, 1, 256>}, {pipeline_mode = #tpu.pipeline_mode<synchronous>, transform_indices = @transform_6, window_bounds = array<i64: 2, 1>}, {transform_indices = @transform_7, window_bounds = array<i64: 1, 1, 1>}, {transform_indices = @transform_8, window_bounds = array<i64: 1, 1, 1>}, {transform_indices = @transform_9, window_bounds = array<i64: 1, 1, 1>}, {transform_indices = @transform_10, window_bounds = array<i64: 1, 1, 1>}, {transform_indices = @transform_11, window_bounds = array<i64: 1, 1, 1>}, {transform_indices = @transform_12, window_bounds = array<i64: 1, 1, 1>}, {transform_indices = @transform_13, window_bounds = array<i64: 1, 1, 1>}, {transform_indices = @transform_14, window_bounds = array<i64: 1, 1, 1>}]} {
    %c0_i32 = arith.constant 0 : i32
    %0 = arith.cmpi eq, %arg2, %c0_i32 : i32
    %1 = arith.extui %0 : i1 to i32
    %c0_i32_0 = arith.constant 0 : i32
    %2 = arith.cmpi ne, %1, %c0_i32_0 : i32
    scf.if %2 {
      %cst_111 = arith.constant 0.000000e+00 : f32
      %240 = vector.broadcast %cst_111 : f32 to vector<1x1xf32>
      %c0_112 = arith.constant 0 : index
      %c0_113 = arith.constant 0 : index
      %c0_114 = arith.constant 0 : index
      %241 = vector.load %arg10[%c0_112, %c0_113, %c0_114] : memref<1x1x1xf32, #tpu.memory_space<vmem>>, vector<1x1x1xf32>
      %242 = vector.shape_cast %241 : vector<1x1x1xf32> to vector<1x1xf32>
      %243 = vector.shape_cast %240 : vector<1x1xf32> to vector<1x1x1xf32>
      tpu.vector_store %arg10[%c0_112, %c0_113, %c0_114], %243 {strides = array<i32>} : memref<1x1x1xf32, #tpu.memory_space<vmem>>, vector<1x1x1xf32>,
      %cst_115 = arith.constant 0.000000e+00 : f32
      %244 = vector.broadcast %cst_115 : f32 to vector<1x1xf32>
      %c0_116 = arith.constant 0 : index
      %c0_117 = arith.constant 0 : index
      %c0_118 = arith.constant 0 : index
      %245 = vector.load %arg11[%c0_116, %c0_117, %c0_118] : memref<1x1x1xf32, #tpu.memory_space<vmem>>, vector<1x1x1xf32>
      %246 = vector.shape_cast %245 : vector<1x1x1xf32> to vector<1x1xf32>
      %247 = vector.shape_cast %244 : vector<1x1xf32> to vector<1x1x1xf32>
      tpu.vector_store %arg11[%c0_116, %c0_117, %c0_118], %247 {strides = array<i32>} : memref<1x1x1xf32, #tpu.memory_space<vmem>>, vector<1x1x1xf32>,
      %cst_119 = arith.constant 0.000000e+00 : f32
      %248 = vector.broadcast %cst_119 : f32 to vector<1x1xf32>
      %c0_120 = arith.constant 0 : index
      %c0_121 = arith.constant 0 : index
      %c0_122 = arith.constant 0 : index
      %249 = vector.load %arg12[%c0_120, %c0_121, %c0_122] : memref<1x1x1xf32, #tpu.memory_space<vmem>>, vector<1x1x1xf32>
      %250 = vector.shape_cast %249 : vector<1x1x1xf32> to vector<1x1xf32>
      %251 = vector.shape_cast %248 : vector<1x1xf32> to vector<1x1x1xf32>
      tpu.vector_store %arg12[%c0_120, %c0_121, %c0_122], %251 {strides = array<i32>} : memref<1x1x1xf32, #tpu.memory_space<vmem>>, vector<1x1x1xf32>,
      %cst_123 = arith.constant 0.000000e+00 : f32
      %252 = vector.broadcast %cst_123 : f32 to vector<1x1xf32>
      %c0_124 = arith.constant 0 : index
      %c0_125 = arith.constant 0 : index
      %c0_126 = arith.constant 0 : index
      %253 = vector.load %arg13[%c0_124, %c0_125, %c0_126] : memref<1x1x1xf32, #tpu.memory_space<vmem>>, vector<1x1x1xf32>
      %254 = vector.shape_cast %253 : vector<1x1x1xf32> to vector<1x1xf32>
      %255 = vector.shape_cast %252 : vector<1x1xf32> to vector<1x1x1xf32>
      tpu.vector_store %arg13[%c0_124, %c0_125, %c0_126], %255 {strides = array<i32>} : memref<1x1x1xf32, #tpu.memory_space<vmem>>, vector<1x1x1xf32>,
      %cst_127 = arith.constant 0.000000e+00 : f32
      %256 = vector.broadcast %cst_127 : f32 to vector<1x1xf32>
      %c0_128 = arith.constant 0 : index
      %c0_129 = arith.constant 0 : index
      %c0_130 = arith.constant 0 : index
      %257 = vector.load %arg14[%c0_128, %c0_129, %c0_130] : memref<1x1x1xf32, #tpu.memory_space<vmem>>, vector<1x1x1xf32>
      %258 = vector.shape_cast %257 : vector<1x1x1xf32> to vector<1x1xf32>
      %259 = vector.shape_cast %256 : vector<1x1xf32> to vector<1x1x1xf32>
      tpu.vector_store %arg14[%c0_128, %c0_129, %c0_130], %259 {strides = array<i32>} : memref<1x1x1xf32, #tpu.memory_space<vmem>>, vector<1x1x1xf32>,
      %cst_131 = arith.constant 0.000000e+00 : f32
      %260 = vector.broadcast %cst_131 : f32 to vector<1x1xf32>
      %c0_132 = arith.constant 0 : index
      %c0_133 = arith.constant 0 : index
      %c0_134 = arith.constant 0 : index
      %261 = vector.load %arg15[%c0_132, %c0_133, %c0_134] : memref<1x1x1xf32, #tpu.memory_space<vmem>>, vector<1x1x1xf32>
      %262 = vector.shape_cast %261 : vector<1x1x1xf32> to vector<1x1xf32>
      %263 = vector.shape_cast %260 : vector<1x1xf32> to vector<1x1x1xf32>
      tpu.vector_store %arg15[%c0_132, %c0_133, %c0_134], %263 {strides = array<i32>} : memref<1x1x1xf32, #tpu.memory_space<vmem>>, vector<1x1x1xf32>,
      %cst_135 = arith.constant 0.000000e+00 : f32
      %264 = vector.broadcast %cst_135 : f32 to vector<1x1xf32>
      %c0_136 = arith.constant 0 : index
      %c0_137 = arith.constant 0 : index
      %c0_138 = arith.constant 0 : index
      %265 = vector.load %arg16[%c0_136, %c0_137, %c0_138] : memref<1x1x1xf32, #tpu.memory_space<vmem>>, vector<1x1x1xf32>
      %266 = vector.shape_cast %265 : vector<1x1x1xf32> to vector<1x1xf32>
      %267 = vector.shape_cast %264 : vector<1x1xf32> to vector<1x1x1xf32>
      tpu.vector_store %arg16[%c0_136, %c0_137, %c0_138], %267 {strides = array<i32>} : memref<1x1x1xf32, #tpu.memory_space<vmem>>, vector<1x1x1xf32>,
      %cst_139 = arith.constant 0.000000e+00 : f32
      %268 = vector.broadcast %cst_139 : f32 to vector<1x1xf32>
      %c0_140 = arith.constant 0 : index
      %c0_141 = arith.constant 0 : index
      %c0_142 = arith.constant 0 : index
      %269 = vector.load %arg17[%c0_140, %c0_141, %c0_142] : memref<1x1x1xf32, #tpu.memory_space<vmem>>, vector<1x1x1xf32>
      %270 = vector.shape_cast %269 : vector<1x1x1xf32> to vector<1x1xf32>
      %271 = vector.shape_cast %268 : vector<1x1xf32> to vector<1x1x1xf32>
      tpu.vector_store %arg17[%c0_140, %c0_141, %c0_142], %271 {strides = array<i32>} : memref<1x1x1xf32, #tpu.memory_space<vmem>>, vector<1x1x1xf32>,
    } else {
    }
    %c0 = arith.constant 0 : index
    %c0_1 = arith.constant 0 : index
    %c0_2 = arith.constant 0 : index
    %3 = vector.load %arg3[%c0, %c0_1, %c0_2] : memref<1x19x256xbf16, #tpu.memory_space<vmem>>, vector<1x19x256xbf16>
    %4 = vector.shape_cast %3 : vector<1x19x256xbf16> to vector<19x256xbf16>
    %5 = arith.extf %4 : vector<19x256xbf16> to vector<19x256xf32>
    %c0_3 = arith.constant 0 : index
    %c0_4 = arith.constant 0 : index
    %c0_5 = arith.constant 0 : index
    %6 = vector.load %arg4[%c0_3, %c0_4, %c0_5] : memref<1x19x256xbf16, #tpu.memory_space<vmem>>, vector<1x19x256xbf16>
    %7 = vector.shape_cast %6 : vector<1x19x256xbf16> to vector<19x256xbf16>
    %8 = arith.extf %7 : vector<19x256xbf16> to vector<19x256xf32>
    %c0_6 = arith.constant 0 : index
    %c0_7 = arith.constant 0 : index
    %c0_8 = arith.constant 0 : index
    %9 = vector.load %arg5[%c0_6, %c0_7, %c0_8] : memref<1x2x256xbf16, #tpu.memory_space<vmem>>, vector<1x2x256xbf16>
    %10 = vector.shape_cast %9 : vector<1x2x256xbf16> to vector<2x256xbf16>
    %11 = arith.extf %10 : vector<2x256xbf16> to vector<2x256xf32>
    %c0_9 = arith.constant 0 : index
    %c0_10 = arith.constant 0 : index
    %c0_11 = arith.constant 0 : index
    %12 = vector.load %arg6[%c0_9, %c0_10, %c0_11] : memref<1x1x256xbf16, #tpu.memory_space<vmem>>, vector<1x1x256xbf16>
    %13 = vector.shape_cast %12 : vector<1x1x256xbf16> to vector<1x256xbf16>
    %14 = arith.extf %13 : vector<1x256xbf16> to vector<1x256xf32>
    %c0_12 = arith.constant 0 : index
    %c0_13 = arith.constant 0 : index
    %c0_14 = arith.constant 0 : index
    %15 = vector.load %arg7[%c0_12, %c0_13, %c0_14] : memref<1x1x256xi32, #tpu.memory_space<vmem>>, vector<1x1x256xi32>
    %16 = vector.shape_cast %15 : vector<1x1x256xi32> to vector<1x256xi32>
    %c0_15 = arith.constant 0 : index
    %c0_16 = arith.constant 0 : index
    %c0_17 = arith.constant 0 : index
    %17 = vector.load %arg8[%c0_15, %c0_16, %c0_17] : memref<1x1x256xi32, #tpu.memory_space<vmem>>, vector<1x1x256xi32>
    %18 = vector.shape_cast %17 : vector<1x1x256xi32> to vector<1x256xi32>
    %c0_18 = arith.constant 0 : index
    %c0_19 = arith.constant 0 : index
    %19 = vector.load %arg9[%c0_18, %c0_19] : memref<2x1xf32, #tpu.memory_space<vmem>>, vector<2x1xf32>
    %c255_i32 = arith.constant 255 : i32
    %20 = vector.broadcast %c255_i32 : i32 to vector<1x256xi32>
    %21 = arith.cmpi ne, %16, %20 : vector<1x256xi32>
    %cst = arith.constant dense<0xFF800000> : vector<256xf32>
    %22 = vector.multi_reduction <maximumf>, %5, %cst [0] : vector<19x256xf32> to vector<256xf32>
    %23 = vector.shape_cast %22 : vector<256xf32> to vector<1x256xf32>
    %24 = vector.broadcast %23 : vector<1x256xf32> to vector<19x256xf32>
    %25 = arith.subf %5, %24 : vector<19x256xf32>
    %26 = math.exp %25 : vector<19x256xf32>
    %cst_20 = arith.constant dense<0.000000e+00> : vector<256xf32>
    %27 = vector.multi_reduction <add>, %26, %cst_20 [0] : vector<19x256xf32> to vector<256xf32>
    %28 = vector.shape_cast %27 : vector<256xf32> to vector<1x256xf32>
    %29 = math.log %28 : vector<1x256xf32>
    %30 = arith.addf %23, %29 : vector<1x256xf32>
    %31 = tpu.iota {dimensions = array<i32: 0>} : vector<19x1xi32>
    %32 = vector.broadcast %31 : vector<19x1xi32> to vector<19x256xi32>
    %33 = vector.broadcast %16 : vector<1x256xi32> to vector<19x256xi32>
    %34 = arith.cmpi eq, %32, %33 : vector<19x256xi32>
    %cst_21 = arith.constant 0.000000e+00 : f32
    %35 = vector.broadcast %cst_21 : f32 to vector<19x256xf32>
    %36 = arith.select %34, %5, %35 : vector<19x256xi1>, vector<19x256xf32>
    %cst_22 = arith.constant dense<0.000000e+00> : vector<256xf32>
    %37 = vector.multi_reduction <add>, %36, %cst_22 [0] : vector<19x256xf32> to vector<256xf32>
    %38 = vector.shape_cast %37 : vector<256xf32> to vector<1x256xf32>
    %cst_23 = arith.constant 1.000000e+00 : f32
    %39 = vector.broadcast %cst_23 : f32 to vector<1x256xf32>
    %40 = arith.subf %30, %38 : vector<1x256xf32>
    %41 = arith.mulf %40, %39 : vector<1x256xf32>
    %cst_24 = arith.constant 0.000000e+00 : f32
    %42 = vector.broadcast %cst_24 : f32 to vector<1x256xf32>
    %43 = arith.select %21, %41, %42 : vector<1x256xi1>, vector<1x256xf32>
    %44 = vector.shape_cast %43 : vector<1x256xf32> to vector<1x1x256xf32>
    %cst_25 = arith.constant dense<0.000000e+00> : vector<1xf32>
    %45 = vector.multi_reduction <add>, %44, %cst_25 [1, 2] : vector<1x1x256xf32> to vector<1xf32>
    %46 = vector.shape_cast %45 : vector<1xf32> to vector<1x1x1xf32>
    %47 = vector.extract %46[0, 0, 0] : f32 from vector<1x1x1xf32>
    %cst_26 = arith.constant 0.000000e+00 : f32
    %48 = vector.broadcast %cst_26 : f32 to vector<1x256xf32>
    %49 = arith.select %21, %39, %48 : vector<1x256xi1>, vector<1x256xf32>
    %50 = vector.shape_cast %49 : vector<1x256xf32> to vector<1x1x256xf32>
    %cst_27 = arith.constant dense<0.000000e+00> : vector<1xf32>
    %51 = vector.multi_reduction <add>, %50, %cst_27 [1, 2] : vector<1x1x256xf32> to vector<1xf32>
    %52 = vector.shape_cast %51 : vector<1xf32> to vector<1x1x1xf32>
    %53 = vector.extract %52[0, 0, 0] : f32 from vector<1x1x1xf32>
    %c0_28 = arith.constant 0 : index
    %c0_29 = arith.constant 0 : index
    %c0_30 = arith.constant 0 : index
    %54 = vector.load %arg10[%c0_28, %c0_29, %c0_30] : memref<1x1x1xf32, #tpu.memory_space<vmem>>, vector<1x1x1xf32>
    %55 = vector.shape_cast %54 : vector<1x1x1xf32> to vector<1x1xf32>
    %56 = vector.broadcast %47 : f32 to vector<1x1xf32>
    %57 = arith.addf %55, %56 : vector<1x1xf32>
    %c0_31 = arith.constant 0 : index
    %c0_32 = arith.constant 0 : index
    %c0_33 = arith.constant 0 : index
    %58 = vector.load %arg10[%c0_31, %c0_32, %c0_33] : memref<1x1x1xf32, #tpu.memory_space<vmem>>, vector<1x1x1xf32>
    %59 = vector.shape_cast %58 : vector<1x1x1xf32> to vector<1x1xf32>
    %60 = vector.shape_cast %57 : vector<1x1xf32> to vector<1x1x1xf32>
    tpu.vector_store %arg10[%c0_31, %c0_32, %c0_33], %60 {strides = array<i32>} : memref<1x1x1xf32, #tpu.memory_space<vmem>>, vector<1x1x1xf32>,
    %c0_34 = arith.constant 0 : index
    %c0_35 = arith.constant 0 : index
    %c0_36 = arith.constant 0 : index
    %61 = vector.load %arg11[%c0_34, %c0_35, %c0_36] : memref<1x1x1xf32, #tpu.memory_space<vmem>>, vector<1x1x1xf32>
    %62 = vector.shape_cast %61 : vector<1x1x1xf32> to vector<1x1xf32>
    %63 = vector.broadcast %53 : f32 to vector<1x1xf32>
    %64 = arith.addf %62, %63 : vector<1x1xf32>
    %c0_37 = arith.constant 0 : index
    %c0_38 = arith.constant 0 : index
    %c0_39 = arith.constant 0 : index
    %65 = vector.load %arg11[%c0_37, %c0_38, %c0_39] : memref<1x1x1xf32, #tpu.memory_space<vmem>>, vector<1x1x1xf32>
    %66 = vector.shape_cast %65 : vector<1x1x1xf32> to vector<1x1xf32>
    %67 = vector.shape_cast %64 : vector<1x1xf32> to vector<1x1x1xf32>
    tpu.vector_store %arg11[%c0_37, %c0_38, %c0_39], %67 {strides = array<i32>} : memref<1x1x1xf32, #tpu.memory_space<vmem>>, vector<1x1x1xf32>,
    %68 = vector.extract_strided_slice %11 {offsets = [0, 0], sizes = [1, 256], strides = [1, 1]} : vector<2x256xf32> to vector<1x256xf32>
    %69 = vector.extract_strided_slice %11 {offsets = [1, 0], sizes = [1, 256], strides = [1, 1]} : vector<2x256xf32> to vector<1x256xf32>
    %70 = arith.subf %68, %69 : vector<1x256xf32>
    %71 = math.exp %70 : vector<1x256xf32>
    %cst_40 = arith.constant 1.000000e+00 : f32
    %72 = vector.broadcast %cst_40 : f32 to vector<1x256xf32>
    %73 = arith.addf %72, %71 : vector<1x256xf32>
    %74 = tpu.reciprocal %73 {approx = true} : vector<1x256xf32> -> vector<1x256xf32>
    %cst_41 = arith.constant 8.000000e-01 : f32
    %75 = vector.broadcast %cst_41 : f32 to vector<1x256xf32>
    %76 = arith.mulf %75, %74 : vector<1x256xf32>
    %cst_42 = arith.constant 2.000000e-01 : f32
    %77 = vector.broadcast %cst_42 : f32 to vector<1x256xf32>
    %78 = arith.mulf %77, %14 : vector<1x256xf32>
    %79 = arith.addf %76, %78 : vector<1x256xf32>
    %80 = arith.subf %8, %5 : vector<19x256xf32>
    %81 = vector.broadcast %79 : vector<1x256xf32> to vector<19x256xf32>
    %82 = arith.mulf %80, %81 : vector<19x256xf32>
    %83 = arith.addf %5, %82 : vector<19x256xf32>
    %cst_43 = arith.constant dense<0xFF800000> : vector<256xf32>
    %84 = vector.multi_reduction <maximumf>, %83, %cst_43 [0] : vector<19x256xf32> to vector<256xf32>
    %85 = vector.shape_cast %84 : vector<256xf32> to vector<1x256xf32>
    %86 = vector.broadcast %85 : vector<1x256xf32> to vector<19x256xf32>
    %87 = arith.subf %83, %86 : vector<19x256xf32>
    %88 = math.exp %87 : vector<19x256xf32>
    %cst_44 = arith.constant dense<0.000000e+00> : vector<256xf32>
    %89 = vector.multi_reduction <add>, %88, %cst_44 [0] : vector<19x256xf32> to vector<256xf32>
    %90 = vector.shape_cast %89 : vector<256xf32> to vector<1x256xf32>
    %91 = math.log %90 : vector<1x256xf32>
    %92 = arith.addf %85, %91 : vector<1x256xf32>
    %93 = tpu.iota {dimensions = array<i32: 0>} : vector<19x1xi32>
    %94 = vector.broadcast %93 : vector<19x1xi32> to vector<19x256xi32>
    %95 = vector.broadcast %16 : vector<1x256xi32> to vector<19x256xi32>
    %96 = arith.cmpi eq, %94, %95 : vector<19x256xi32>
    %cst_45 = arith.constant 0.000000e+00 : f32
    %97 = vector.broadcast %cst_45 : f32 to vector<19x256xf32>
    %98 = arith.select %96, %83, %97 : vector<19x256xi1>, vector<19x256xf32>
    %cst_46 = arith.constant dense<0.000000e+00> : vector<256xf32>
    %99 = vector.multi_reduction <add>, %98, %cst_46 [0] : vector<19x256xf32> to vector<256xf32>
    %100 = vector.shape_cast %99 : vector<256xf32> to vector<1x256xf32>
    %cst_47 = arith.constant 1.000000e+00 : f32
    %101 = vector.broadcast %cst_47 : f32 to vector<1x256xf32>
    %102 = arith.subf %92, %100 : vector<1x256xf32>
    %103 = arith.mulf %102, %101 : vector<1x256xf32>
    %cst_48 = arith.constant 0.000000e+00 : f32
    %104 = vector.broadcast %cst_48 : f32 to vector<1x256xf32>
    %105 = arith.select %21, %103, %104 : vector<1x256xi1>, vector<1x256xf32>
    %106 = vector.shape_cast %105 : vector<1x256xf32> to vector<1x1x256xf32>
    %cst_49 = arith.constant dense<0.000000e+00> : vector<1xf32>
    %107 = vector.multi_reduction <add>, %106, %cst_49 [1, 2] : vector<1x1x256xf32> to vector<1xf32>
    %108 = vector.shape_cast %107 : vector<1xf32> to vector<1x1x1xf32>
    %109 = vector.extract %108[0, 0, 0] : f32 from vector<1x1x1xf32>
    %cst_50 = arith.constant 0.000000e+00 : f32
    %110 = vector.broadcast %cst_50 : f32 to vector<1x256xf32>
    %111 = arith.select %21, %101, %110 : vector<1x256xi1>, vector<1x256xf32>
    %112 = vector.shape_cast %111 : vector<1x256xf32> to vector<1x1x256xf32>
    %cst_51 = arith.constant dense<0.000000e+00> : vector<1xf32>
    %113 = vector.multi_reduction <add>, %112, %cst_51 [1, 2] : vector<1x1x256xf32> to vector<1xf32>
    %114 = vector.shape_cast %113 : vector<1xf32> to vector<1x1x1xf32>
    %115 = vector.extract %114[0, 0, 0] : f32 from vector<1x1x1xf32>
    %c0_52 = arith.constant 0 : index
    %c0_53 = arith.constant 0 : index
    %c0_54 = arith.constant 0 : index
    %116 = vector.load %arg12[%c0_52, %c0_53, %c0_54] : memref<1x1x1xf32, #tpu.memory_space<vmem>>, vector<1x1x1xf32>
    %117 = vector.shape_cast %116 : vector<1x1x1xf32> to vector<1x1xf32>
    %118 = vector.broadcast %109 : f32 to vector<1x1xf32>
    %119 = arith.addf %117, %118 : vector<1x1xf32>
    %c0_55 = arith.constant 0 : index
    %c0_56 = arith.constant 0 : index
    %c0_57 = arith.constant 0 : index
    %120 = vector.load %arg12[%c0_55, %c0_56, %c0_57] : memref<1x1x1xf32, #tpu.memory_space<vmem>>, vector<1x1x1xf32>
    %121 = vector.shape_cast %120 : vector<1x1x1xf32> to vector<1x1xf32>
    %122 = vector.shape_cast %119 : vector<1x1xf32> to vector<1x1x1xf32>
    tpu.vector_store %arg12[%c0_55, %c0_56, %c0_57], %122 {strides = array<i32>} : memref<1x1x1xf32, #tpu.memory_space<vmem>>, vector<1x1x1xf32>,
    %c0_58 = arith.constant 0 : index
    %c0_59 = arith.constant 0 : index
    %c0_60 = arith.constant 0 : index
    %123 = vector.load %arg13[%c0_58, %c0_59, %c0_60] : memref<1x1x1xf32, #tpu.memory_space<vmem>>, vector<1x1x1xf32>
    %124 = vector.shape_cast %123 : vector<1x1x1xf32> to vector<1x1xf32>
    %125 = vector.broadcast %115 : f32 to vector<1x1xf32>
    %126 = arith.addf %124, %125 : vector<1x1xf32>
    %c0_61 = arith.constant 0 : index
    %c0_62 = arith.constant 0 : index
    %c0_63 = arith.constant 0 : index
    %127 = vector.load %arg13[%c0_61, %c0_62, %c0_63] : memref<1x1x1xf32, #tpu.memory_space<vmem>>, vector<1x1x1xf32>
    %128 = vector.shape_cast %127 : vector<1x1x1xf32> to vector<1x1xf32>
    %129 = vector.shape_cast %126 : vector<1x1xf32> to vector<1x1x1xf32>
    tpu.vector_store %arg13[%c0_61, %c0_62, %c0_63], %129 {strides = array<i32>} : memref<1x1x1xf32, #tpu.memory_space<vmem>>, vector<1x1x1xf32>,
    %c255_i32_64 = arith.constant 255 : i32
    %130 = vector.broadcast %c255_i32_64 : i32 to vector<1x256xi32>
    %131 = arith.cmpi ne, %18, %130 : vector<1x256xi32>
    %cst_65 = arith.constant dense<0xFF800000> : vector<256xf32>
    %132 = vector.multi_reduction <maximumf>, %11, %cst_65 [0] : vector<2x256xf32> to vector<256xf32>
    %133 = vector.shape_cast %132 : vector<256xf32> to vector<1x256xf32>
    %134 = vector.broadcast %133 : vector<1x256xf32> to vector<2x256xf32>
    %135 = arith.subf %11, %134 : vector<2x256xf32>
    %136 = math.exp %135 : vector<2x256xf32>
    %cst_66 = arith.constant dense<0.000000e+00> : vector<256xf32>
    %137 = vector.multi_reduction <add>, %136, %cst_66 [0] : vector<2x256xf32> to vector<256xf32>
    %138 = vector.shape_cast %137 : vector<256xf32> to vector<1x256xf32>
    %139 = math.log %138 : vector<1x256xf32>
    %140 = arith.addf %133, %139 : vector<1x256xf32>
    %141 = tpu.iota {dimensions = array<i32: 0>} : vector<2x1xi32>
    %142 = vector.broadcast %141 : vector<2x1xi32> to vector<2x256xi32>
    %143 = vector.broadcast %18 : vector<1x256xi32> to vector<2x256xi32>
    %144 = arith.cmpi eq, %142, %143 : vector<2x256xi32>
    %cst_67 = arith.constant 0.000000e+00 : f32
    %145 = vector.broadcast %cst_67 : f32 to vector<2x256xf32>
    %146 = arith.select %144, %11, %145 : vector<2x256xi1>, vector<2x256xf32>
    %cst_68 = arith.constant dense<0.000000e+00> : vector<256xf32>
    %147 = vector.multi_reduction <add>, %146, %cst_68 [0] : vector<2x256xf32> to vector<256xf32>
    %148 = vector.shape_cast %147 : vector<256xf32> to vector<1x256xf32>
    %cst_69 = arith.constant 0.000000e+00 : f32
    %149 = vector.shape_cast %19 : vector<2x1xf32> to vector<2x1xf32>
    %150 = vector.broadcast %149 : vector<2x1xf32> to vector<2x256xf32>
    %151 = vector.broadcast %cst_69 : f32 to vector<2x256xf32>
    %152 = arith.select %144, %150, %151 : vector<2x256xi1>, vector<2x256xf32>
    %cst_70 = arith.constant dense<0.000000e+00> : vector<256xf32>
    %153 = vector.multi_reduction <add>, %152, %cst_70 [0] : vector<2x256xf32> to vector<256xf32>
    %154 = vector.shape_cast %153 : vector<256xf32> to vector<1x256xf32>
    %155 = arith.subf %140, %148 : vector<1x256xf32>
    %156 = arith.mulf %155, %154 : vector<1x256xf32>
    %cst_71 = arith.constant 0.000000e+00 : f32
    %157 = vector.broadcast %cst_71 : f32 to vector<1x256xf32>
    %158 = arith.select %131, %156, %157 : vector<1x256xi1>, vector<1x256xf32>
    %159 = vector.shape_cast %158 : vector<1x256xf32> to vector<1x1x256xf32>
    %cst_72 = arith.constant dense<0.000000e+00> : vector<1xf32>
    %160 = vector.multi_reduction <add>, %159, %cst_72 [1, 2] : vector<1x1x256xf32> to vector<1xf32>
    %161 = vector.shape_cast %160 : vector<1xf32> to vector<1x1x1xf32>
    %162 = vector.extract %161[0, 0, 0] : f32 from vector<1x1x1xf32>
    %cst_73 = arith.constant 0.000000e+00 : f32
    %163 = vector.broadcast %cst_73 : f32 to vector<1x256xf32>
    %164 = arith.select %131, %154, %163 : vector<1x256xi1>, vector<1x256xf32>
    %165 = vector.shape_cast %164 : vector<1x256xf32> to vector<1x1x256xf32>
    %cst_74 = arith.constant dense<0.000000e+00> : vector<1xf32>
    %166 = vector.multi_reduction <add>, %165, %cst_74 [1, 2] : vector<1x1x256xf32> to vector<1xf32>
    %167 = vector.shape_cast %166 : vector<1xf32> to vector<1x1x1xf32>
    %168 = vector.extract %167[0, 0, 0] : f32 from vector<1x1x1xf32>
    %c0_75 = arith.constant 0 : index
    %c0_76 = arith.constant 0 : index
    %c0_77 = arith.constant 0 : index
    %169 = vector.load %arg14[%c0_75, %c0_76, %c0_77] : memref<1x1x1xf32, #tpu.memory_space<vmem>>, vector<1x1x1xf32>
    %170 = vector.shape_cast %169 : vector<1x1x1xf32> to vector<1x1xf32>
    %171 = vector.broadcast %162 : f32 to vector<1x1xf32>
    %172 = arith.addf %170, %171 : vector<1x1xf32>
    %c0_78 = arith.constant 0 : index
    %c0_79 = arith.constant 0 : index
    %c0_80 = arith.constant 0 : index
    %173 = vector.load %arg14[%c0_78, %c0_79, %c0_80] : memref<1x1x1xf32, #tpu.memory_space<vmem>>, vector<1x1x1xf32>
    %174 = vector.shape_cast %173 : vector<1x1x1xf32> to vector<1x1xf32>
    %175 = vector.shape_cast %172 : vector<1x1xf32> to vector<1x1x1xf32>
    tpu.vector_store %arg14[%c0_78, %c0_79, %c0_80], %175 {strides = array<i32>} : memref<1x1x1xf32, #tpu.memory_space<vmem>>, vector<1x1x1xf32>,
    %c0_81 = arith.constant 0 : index
    %c0_82 = arith.constant 0 : index
    %c0_83 = arith.constant 0 : index
    %176 = vector.load %arg15[%c0_81, %c0_82, %c0_83] : memref<1x1x1xf32, #tpu.memory_space<vmem>>, vector<1x1x1xf32>
    %177 = vector.shape_cast %176 : vector<1x1x1xf32> to vector<1x1xf32>
    %178 = vector.broadcast %168 : f32 to vector<1x1xf32>
    %179 = arith.addf %177, %178 : vector<1x1xf32>
    %c0_84 = arith.constant 0 : index
    %c0_85 = arith.constant 0 : index
    %c0_86 = arith.constant 0 : index
    %180 = vector.load %arg15[%c0_84, %c0_85, %c0_86] : memref<1x1x1xf32, #tpu.memory_space<vmem>>, vector<1x1x1xf32>
    %181 = vector.shape_cast %180 : vector<1x1x1xf32> to vector<1x1xf32>
    %182 = vector.shape_cast %179 : vector<1x1xf32> to vector<1x1x1xf32>
    tpu.vector_store %arg15[%c0_84, %c0_85, %c0_86], %182 {strides = array<i32>} : memref<1x1x1xf32, #tpu.memory_space<vmem>>, vector<1x1x1xf32>,
    %183 = vector.extract_strided_slice %11 {offsets = [1, 0], sizes = [1, 256], strides = [1, 1]} : vector<2x256xf32> to vector<1x256xf32>
    %184 = vector.extract_strided_slice %11 {offsets = [0, 0], sizes = [1, 256], strides = [1, 1]} : vector<2x256xf32> to vector<1x256xf32>
    %185 = arith.cmpf ogt, %183, %184 : vector<1x256xf32>
    %cst_87 = arith.constant 0.000000e+00 : f32
    %186 = vector.shape_cast %185 : vector<1x256xi1> to vector<1x256xi1>
    %187 = vector.broadcast %186 : vector<1x256xi1> to vector<19x256xi1>
    %188 = vector.broadcast %cst_87 : f32 to vector<19x256xf32>
    %189 = arith.select %187, %8, %188 : vector<19x256xi1>, vector<19x256xf32>
    %c0_i32_88 = arith.constant 0 : i32
    %190 = vector.broadcast %c0_i32_88 : i32 to vector<1x256xi32>
    %191 = arith.select %185, %16, %190 : vector<1x256xi1>, vector<1x256xi32>
    %c0_i32_89 = arith.constant 0 : i32
    %192 = vector.broadcast %c0_i32_89 : i32 to vector<1x256xi32>
    %193 = arith.cmpi ne, %191, %192 : vector<1x256xi32>
    %cst_90 = arith.constant dense<0xFF800000> : vector<256xf32>
    %194 = vector.multi_reduction <maximumf>, %189, %cst_90 [0] : vector<19x256xf32> to vector<256xf32>
    %195 = vector.shape_cast %194 : vector<256xf32> to vector<1x256xf32>
    %196 = vector.broadcast %195 : vector<1x256xf32> to vector<19x256xf32>
    %197 = arith.subf %189, %196 : vector<19x256xf32>
    %198 = math.exp %197 : vector<19x256xf32>
    %cst_91 = arith.constant dense<0.000000e+00> : vector<256xf32>
    %199 = vector.multi_reduction <add>, %198, %cst_91 [0] : vector<19x256xf32> to vector<256xf32>
    %200 = vector.shape_cast %199 : vector<256xf32> to vector<1x256xf32>
    %201 = math.log %200 : vector<1x256xf32>
    %202 = arith.addf %195, %201 : vector<1x256xf32>
    %203 = tpu.iota {dimensions = array<i32: 0>} : vector<19x1xi32>
    %204 = vector.broadcast %203 : vector<19x1xi32> to vector<19x256xi32>
    %205 = vector.broadcast %191 : vector<1x256xi32> to vector<19x256xi32>
    %206 = arith.cmpi eq, %204, %205 : vector<19x256xi32>
    %cst_92 = arith.constant 0.000000e+00 : f32
    %207 = vector.broadcast %cst_92 : f32 to vector<19x256xf32>
    %208 = arith.select %206, %189, %207 : vector<19x256xi1>, vector<19x256xf32>
    %cst_93 = arith.constant dense<0.000000e+00> : vector<256xf32>
    %209 = vector.multi_reduction <add>, %208, %cst_93 [0] : vector<19x256xf32> to vector<256xf32>
    %210 = vector.shape_cast %209 : vector<256xf32> to vector<1x256xf32>
    %cst_94 = arith.constant 1.000000e+00 : f32
    %211 = vector.broadcast %cst_94 : f32 to vector<1x256xf32>
    %212 = arith.subf %202, %210 : vector<1x256xf32>
    %213 = arith.mulf %212, %211 : vector<1x256xf32>
    %cst_95 = arith.constant 0.000000e+00 : f32
    %214 = vector.broadcast %cst_95 : f32 to vector<1x256xf32>
    %215 = arith.select %193, %213, %214 : vector<1x256xi1>, vector<1x256xf32>
    %216 = vector.shape_cast %215 : vector<1x256xf32> to vector<1x1x256xf32>
    %cst_96 = arith.constant dense<0.000000e+00> : vector<1xf32>
    %217 = vector.multi_reduction <add>, %216, %cst_96 [1, 2] : vector<1x1x256xf32> to vector<1xf32>
    %218 = vector.shape_cast %217 : vector<1xf32> to vector<1x1x1xf32>
    %219 = vector.extract %218[0, 0, 0] : f32 from vector<1x1x1xf32>
    %cst_97 = arith.constant 0.000000e+00 : f32
    %220 = vector.broadcast %cst_97 : f32 to vector<1x256xf32>
    %221 = arith.select %193, %211, %220 : vector<1x256xi1>, vector<1x256xf32>
    %222 = vector.shape_cast %221 : vector<1x256xf32> to vector<1x1x256xf32>
    %cst_98 = arith.constant dense<0.000000e+00> : vector<1xf32>
    %223 = vector.multi_reduction <add>, %222, %cst_98 [1, 2] : vector<1x1x256xf32> to vector<1xf32>
    %224 = vector.shape_cast %223 : vector<1xf32> to vector<1x1x1xf32>
    %225 = vector.extract %224[0, 0, 0] : f32 from vector<1x1x1xf32>
    %c0_99 = arith.constant 0 : index
    %c0_100 = arith.constant 0 : index
    %c0_101 = arith.constant 0 : index
    %226 = vector.load %arg16[%c0_99, %c0_100, %c0_101] : memref<1x1x1xf32, #tpu.memory_space<vmem>>, vector<1x1x1xf32>
    %227 = vector.shape_cast %226 : vector<1x1x1xf32> to vector<1x1xf32>
    %228 = vector.broadcast %219 : f32 to vector<1x1xf32>
    %229 = arith.addf %227, %228 : vector<1x1xf32>
    %c0_102 = arith.constant 0 : index
    %c0_103 = arith.constant 0 : index
    %c0_104 = arith.constant 0 : index
    %230 = vector.load %arg16[%c0_102, %c0_103, %c0_104] : memref<1x1x1xf32, #tpu.memory_space<vmem>>, vector<1x1x1xf32>
    %231 = vector.shape_cast %230 : vector<1x1x1xf32> to vector<1x1xf32>
    %232 = vector.shape_cast %229 : vector<1x1xf32> to vector<1x1x1xf32>
    tpu.vector_store %arg16[%c0_102, %c0_103, %c0_104], %232 {strides = array<i32>} : memref<1x1x1xf32, #tpu.memory_space<vmem>>, vector<1x1x1xf32>,
    %c0_105 = arith.constant 0 : index
    %c0_106 = arith.constant 0 : index
    %c0_107 = arith.constant 0 : index
    %233 = vector.load %arg17[%c0_105, %c0_106, %c0_107] : memref<1x1x1xf32, #tpu.memory_space<vmem>>, vector<1x1x1xf32>
    %234 = vector.shape_cast %233 : vector<1x1x1xf32> to vector<1x1xf32>
    %235 = vector.broadcast %225 : f32 to vector<1x1xf32>
    %236 = arith.addf %234, %235 : vector<1x1xf32>
    %c0_108 = arith.constant 0 : index
    %c0_109 = arith.constant 0 : index
    %c0_110 = arith.constant 0 : index
    %237 = vector.load %arg17[%c0_108, %c0_109, %c0_110] : memref<1x1x1xf32, #tpu.memory_space<vmem>>, vector<1x1x1xf32>
    %238 = vector.shape_cast %237 : vector<1x1x1xf32> to vector<1x1xf32>
    %239 = vector.shape_cast %236 : vector<1x1xf32> to vector<1x1x1xf32>
    tpu.vector_store %arg17[%c0_108, %c0_109, %c0_110], %239 {strides = array<i32>} : memref<1x1x1xf32, #tpu.memory_space<vmem>>, vector<1x1x1xf32>,
    return
  }
  func.func @transform_0(%arg0: i32, %arg1: i32, %arg2: i32) -> (i32, i32, i32) {
    %c1_i32 = arith.constant 1 : i32
    %0 = arith.muli %arg1, %c1_i32 : i32
    %1 = arith.addi %0, %arg2 : i32
    %c0_i32 = arith.constant 0 : i32
    %c0_i32_0 = arith.constant 0 : i32
    return %arg0, %c0_i32, %1 : i32, i32, i32
  }
  func.func @transform_1(%arg0: i32, %arg1: i32, %arg2: i32) -> (i32, i32, i32) {
    %c1_i32 = arith.constant 1 : i32
    %0 = arith.muli %arg1, %c1_i32 : i32
    %1 = arith.addi %0, %arg2 : i32
    %c0_i32 = arith.constant 0 : i32
    %c0_i32_0 = arith.constant 0 : i32
    return %arg0, %c0_i32, %1 : i32, i32, i32
  }
  func.func @transform_2(%arg0: i32, %arg1: i32, %arg2: i32) -> (i32, i32, i32) {
    %c1_i32 = arith.constant 1 : i32
    %0 = arith.muli %arg1, %c1_i32 : i32
    %1 = arith.addi %0, %arg2 : i32
    %c0_i32 = arith.constant 0 : i32
    %c0_i32_0 = arith.constant 0 : i32
    return %arg0, %c0_i32, %1 : i32, i32, i32
  }
  func.func @transform_3(%arg0: i32, %arg1: i32, %arg2: i32) -> (i32, i32, i32) {
    %c1_i32 = arith.constant 1 : i32
    %0 = arith.muli %arg1, %c1_i32 : i32
    %1 = arith.addi %0, %arg2 : i32
    %c0_i32 = arith.constant 0 : i32
    %c0_i32_0 = arith.constant 0 : i32
    return %arg0, %c0_i32, %1 : i32, i32, i32
  }
  func.func @transform_4(%arg0: i32, %arg1: i32, %arg2: i32) -> (i32, i32, i32) {
    %c1_i32 = arith.constant 1 : i32
    %0 = arith.muli %arg1, %c1_i32 : i32
    %1 = arith.addi %0, %arg2 : i32
    %c0_i32 = arith.constant 0 : i32
    %c0_i32_0 = arith.constant 0 : i32
    return %arg0, %c0_i32, %1 : i32, i32, i32
  }
  func.func @transform_5(%arg0: i32, %arg1: i32, %arg2: i32) -> (i32, i32, i32) {
    %c1_i32 = arith.constant 1 : i32
    %0 = arith.muli %arg1, %c1_i32 : i32
    %1 = arith.addi %0, %arg2 : i32
    %c0_i32 = arith.constant 0 : i32
    %c0_i32_0 = arith.constant 0 : i32
    return %arg0, %c0_i32, %1 : i32, i32, i32
  }
  func.func @transform_6(%arg0: i32, %arg1: i32, %arg2: i32) -> (i32, i32) {
    %c0_i32 = arith.constant 0 : i32
    %c0_i32_0 = arith.constant 0 : i32
    %c0_i32_1 = arith.constant 0 : i32
    return %c0_i32, %c0_i32_0 : i32, i32
  }
  func.func @transform_7(%arg0: i32, %arg1: i32, %arg2: i32) -> (i32, i32, i32) {
    %c1_i32 = arith.constant 1 : i32
    %0 = arith.muli %arg0, %c1_i32 : i32
    %1 = arith.addi %0, %arg1 : i32
    %c0_i32 = arith.constant 0 : i32
    %c0_i32_0 = arith.constant 0 : i32
    %c0_i32_1 = arith.constant 0 : i32
    return %1, %c0_i32, %c0_i32_0 : i32, i32, i32
  }
  func.func @transform_8(%arg0: i32, %arg1: i32, %arg2: i32) -> (i32, i32, i32) {
    %c1_i32 = arith.constant 1 : i32
    %0 = arith.muli %arg0, %c1_i32 : i32
    %1 = arith.addi %0, %arg1 : i32
    %c0_i32 = arith.constant 0 : i32
    %c0_i32_0 = arith.constant 0 : i32
    %c0_i32_1 = arith.constant 0 : i32
    return %1, %c0_i32, %c0_i32_0 : i32, i32, i32
  }
  func.func @transform_9(%arg0: i32, %arg1: i32, %arg2: i32) -> (i32, i32, i32) {
    %c1_i32 = arith.constant 1 : i32
    %0 = arith.muli %arg0, %c1_i32 : i32
    %1 = arith.addi %0, %arg1 : i32
    %c0_i32 = arith.constant 0 : i32
    %c0_i32_0 = arith.constant 0 : i32
    %c0_i32_1 = arith.constant 0 : i32
    return %1, %c0_i32, %c0_i32_0 : i32, i32, i32
  }
  func.func @transform_10(%arg0: i32, %arg1: i32, %arg2: i32) -> (i32, i32, i32) {
    %c1_i32 = arith.constant 1 : i32
    %0 = arith.muli %arg0, %c1_i32 : i32
    %1 = arith.addi %0, %arg1 : i32
    %c0_i32 = arith.constant 0 : i32
    %c0_i32_0 = arith.constant 0 : i32
    %c0_i32_1 = arith.constant 0 : i32
    return %1, %c0_i32, %c0_i32_0 : i32, i32, i32
  }
  func.func @transform_11(%arg0: i32, %arg1: i32, %arg2: i32) -> (i32, i32, i32) {
    %c1_i32 = arith.constant 1 : i32
    %0 = arith.muli %arg0, %c1_i32 : i32
    %1 = arith.addi %0, %arg1 : i32
    %c0_i32 = arith.constant 0 : i32
    %c0_i32_0 = arith.constant 0 : i32
    %c0_i32_1 = arith.constant 0 : i32
    return %1, %c0_i32, %c0_i32_0 : i32, i32, i32
  }
  func.func @transform_12(%arg0: i32, %arg1: i32, %arg2: i32) -> (i32, i32, i32) {
    %c1_i32 = arith.constant 1 : i32
    %0 = arith.muli %arg0, %c1_i32 : i32
    %1 = arith.addi %0, %arg1 : i32
    %c0_i32 = arith.constant 0 : i32
    %c0_i32_0 = arith.constant 0 : i32
    %c0_i32_1 = arith.constant 0 : i32
    return %1, %c0_i32, %c0_i32_0 : i32, i32, i32
  }
  func.func @transform_13(%arg0: i32, %arg1: i32, %arg2: i32) -> (i32, i32, i32) {
    %c1_i32 = arith.constant 1 : i32
    %0 = arith.muli %arg0, %c1_i32 : i32
    %1 = arith.addi %0, %arg1 : i32
    %c0_i32 = arith.constant 0 : i32
    %c0_i32_0 = arith.constant 0 : i32
    %c0_i32_1 = arith.constant 0 : i32
    return %1, %c0_i32, %c0_i32_0 : i32, i32, i32
  }
  func.func @transform_14(%arg0: i32, %arg1: i32, %arg2: i32) -> (i32, i32, i32) {
    %c1_i32 = arith.constant 1 : i32
    %0 = arith.muli %arg0, %c1_i32 : i32
    %1 = arith.addi %0, %arg1 : i32
    %c0_i32 = arith.constant 0 : i32
    %c0_i32_0 = arith.constant 0 : i32
    %c0_i32_1 = arith.constant 0 : i32
    return %1, %c0_i32, %c0_i32_0 : i32, i32, i32
  }
}

</mosaic_0001>

<llo_original>
// kernel: _forward_impl.5
$region0: #{_forward_impl.5}
  #allocation0 [shape = 'u32[]', space=smem, size = 0x4, offset = 0x4, fixed_abs, tag = 'smem constant byte address 0x4 - core index']
  #allocation1 [shape = 'u32[72,128]{1,0:T(1,128)}', space=vmem, size = 0x9000, scoped, tag = 'internal scratch']
  %s0 = inlined_call_operand.vmem [shape: bf16[2,3,16], index: 0, kind: input, shape index: {}]
  %s1 = inlined_call_operand.vmem [shape: bf16[19,3], index: 1, kind: input, shape index: {}]
  %s2 = inlined_call_operand.vmem [shape: f32[19,1], index: 2, kind: input, shape index: {}]
  %s3 = inlined_call_operand.vmem [shape: bf16[2,19,16], index: 3, kind: output, shape index: {}]
  %s4 = sld [smem:[#allocation0]]
  $region45: #{_forward_impl.5} parent=0
    _
  %s6 = ssub.s32 1, %s4
  %s7 = scalar_select 0, %s6, %s4
  loop: start=0, step=1, limit=4
  $region2: #{_forward_impl.5} parent=0 // loop_pre_header
    _
  $region3: #{_forward_impl.5} parent=0 // loop_header
    %s9 = sphi 0, %s13
    %p10 = scmp.ge.s32.totalorder %s9, 4
    %s16 = sphi 0, %s28
    %s17 = sphi 0, %s24
    %s18 = sphi 0, %s16
    %s19 = sphi 0, %s17
    %s20 = sphi 0, %s18
    %s21 = sphi 0, %s19
    %s33 = sphi 0, %s35
    %s36 = sphi 0, %s33
    %s37 = sphi 0, %s36
    %s53 = sphi 0, %s37
    %s57 = sphi 0, %s57
    %s59 = sphi 0, %s57
    %s60 = sphi 0, %s59
    %s74 = sphi 0, %s60
    %s78 = sphi 0, %s78
    %s80 = sphi 0, %s78
    %s81 = sphi 0, %s80
    %s95 = sphi 0, %s81
    %s103 = sphi 0, %s105
    %s106 = sphi 0, %s103
    %s107 = sphi 0, %s106
    %s123 = sphi 0, %s107
  $region4: #{_forward_impl.5} parent=0 // loop_header_branch
    %12 = sbr.rel (%p10) target = $region8
  $region5: #{_forward_impl.5} parent=0 // loop_body
    %s14 = ssub.s32 %s9, 1
    %s15 = ssub.s32 %s9, 2
    %s22 = sadd.s32 1, %s17
    %p23 = scmp.ge.s32.totalorder %s22, 1
    %s24 = scalar_select %p23, 0, %s22
    %s25 = sadd.s32 1, %s16
    %s26 = scalar_select %p23, %s25, %s16
    %p27 = scmp.ge.s32.totalorder %s26, 2
    %s28 = scalar_select %p27, 0, %s26
    %s29 = ssub.s32 %s16, %s28
    %s30 = ssub.s32 %s17, %s24
    %s31 = sor.u32 %s29, %s30
    %p32 = scmp.eq.s32.totalorder %s31, 0
    %s34 = sadd.s32 %s33, 1
    %s35 = scalar_select %p32, %s33, %s34
    %p38 = pneg %p32
    %p39 = scmp.eq.s32.totalorder %s9, 1
    %p40 = por %p38, %p39
    %p41 = scmp.ne.s32.totalorder %s33, %s36
    %p42 = scmp.eq.s32.totalorder %s9, 0
    %p43 = por %p41, %p42
    %p44 = scmp.ne.s32.totalorder %s33, %s36
    %p45 = scmp.eq.s32.totalorder %s14, 1
    %p46 = por %p44, %p45
    %p47 = scmp.ne.s32.totalorder %s36, %s37
    %p48 = scmp.eq.s32.totalorder %s14, 0
    %p49 = por %p47, %p48
    %p50 = scmp.ne.s32.totalorder %s36, %s37
    %p51 = scmp.eq.s32.totalorder %s15, 1
    %p52 = por %p50, %p51
    %p54 = scmp.ne.s32.totalorder %s37, %s53
    %p55 = scmp.eq.s32.totalorder %s15, 0
    %p56 = por %p54, %p55
    %s58 = sadd.s32 %s57, 1
    %p61 = scmp.eq.s32.totalorder %s9, 1
    %p62 = scmp.ne.s32.totalorder %s57, %s59
    %p63 = scmp.eq.s32.totalorder %s9, 0
    %p64 = por %p62, %p63
    %p65 = scmp.ne.s32.totalorder %s57, %s59
    %p66 = scmp.eq.s32.totalorder %s14, 1
    %p67 = por %p65, %p66
    %p68 = scmp.ne.s32.totalorder %s59, %s60
    %p69 = scmp.eq.s32.totalorder %s14, 0
    %p70 = por %p68, %p69
    %p71 = scmp.ne.s32.totalorder %s59, %s60
    %p72 = scmp.eq.s32.totalorder %s15, 1
    %p73 = por %p71, %p72
    %p75 = scmp.ne.s32.totalorder %s60, %s74
    %p76 = scmp.eq.s32.totalorder %s15, 0
    %p77 = por %p75, %p76
    %s79 = sadd.s32 %s78, 1
    %p82 = scmp.eq.s32.totalorder %s9, 1
    %p83 = scmp.ne.s32.totalorder %s78, %s80
    %p84 = scmp.eq.s32.totalorder %s9, 0
    %p85 = por %p83, %p84
    %p86 = scmp.ne.s32.totalorder %s78, %s80
    %p87 = scmp.eq.s32.totalorder %s14, 1
    %p88 = por %p86, %p87
    %p89 = scmp.ne.s32.totalorder %s80, %s81
    %p90 = scmp.eq.s32.totalorder %s14, 0
    %p91 = por %p89, %p90
    %p92 = scmp.ne.s32.totalorder %s80, %s81
    %p93 = scmp.eq.s32.totalorder %s15, 1
    %p94 = por %p92, %p93
    %p96 = scmp.ne.s32.totalorder %s81, %s95
    %p97 = scmp.eq.s32.totalorder %s15, 0
    %p98 = por %p96, %p97
    %s99 = ssub.s32 %s16, %s28
    %s100 = ssub.s32 %s17, %s24
    %s101 = sor.u32 %s99, %s100
    %p102 = scmp.eq.s32.totalorder %s101, 0
    %s104 = sadd.s32 %s103, 1
    %s105 = scalar_select %p102, %s103, %s104
    %p108 = pneg %p102
    %p109 = scmp.eq.s32.totalorder %s9, 1
    %p110 = por %p108, %p109
    %p111 = scmp.ne.s32.totalorder %s103, %s106
    %p112 = scmp.eq.s32.totalorder %s9, 0
    %p113 = por %p111, %p112
    %p114 = scmp.ne.s32.totalorder %s103, %s106
    %p115 = scmp.eq.s32.totalorder %s14, 1
    %p116 = por %p114, %p115
    %p117 = scmp.ne.s32.totalorder %s106, %s107
    %p118 = scmp.eq.s32.totalorder %s14, 0
    %p119 = por %p117, %p118
    %p120 = scmp.ne.s32.totalorder %s106, %s107
    %p121 = scmp.eq.s32.totalorder %s15, 1
    %p122 = por %p120, %p121
    %p124 = scmp.ne.s32.totalorder %s107, %s123
    %p125 = scmp.eq.s32.totalorder %s15, 0
    %p126 = por %p124, %p125
    %p127 = scmp.le.s32.totalorder 1, %s9
    %p128 = scmp.lt.s32.totalorder %s9, 3
    %p129 = pnand %p127, %p128
    %p130 = pneg %p129
    // Predicated region
    $region9: #{_forward_impl.5} parent=5 // pred_check
      _
    $region10: #{_forward_impl.5} parent=5 // pred_check_branch
      %132 = sbr.rel (%p129) target = $region12
    $region11: #{_forward_impl.5} parent=5 // pred_region
      %s133 = ssub.s32 %s9, 1
      // Predicated region
      $region13: #{_forward_impl.5} parent=11 // pred_check
        %p134 = pneg %p70
      $region14: #{_forward_impl.5} parent=11 // pred_check_branch
        %136 = sbr.rel (%p134) target = $region16
      $region15: #{_forward_impl.5} parent=11 // pred_region
        _
      $region16: #{_forward_impl.5} parent=11 // pred_fallthru
        _
      // Predicated region
      $region17: #{_forward_impl.5} parent=11 // pred_check
        %p137 = pneg %p91
      $region18: #{_forward_impl.5} parent=11 // pred_check_branch
        %139 = sbr.rel (%p137) target = $region20
      $region19: #{_forward_impl.5} parent=11 // pred_region
        _
      $region20: #{_forward_impl.5} parent=11 // pred_fallthru
        _
    $region12: #{_forward_impl.5} parent=5 // pred_fallthru
      _
    %p140 = scmp.lt.s32.totalorder %s9, 2
    // Predicated region
    $region21: #{_forward_impl.5} parent=5 // pred_check
      %p141 = pneg %p140
    $region22: #{_forward_impl.5} parent=5 // pred_check_branch
      %143 = sbr.rel (%p141) target = $region24
    $region23: #{_forward_impl.5} parent=5 // pred_region
      // Predicated region
      $region25: #{_forward_impl.5} parent=23 // pred_check
        %p144 = pneg %p43
      $region26: #{_forward_impl.5} parent=23 // pred_check_branch
        %146 = sbr.rel (%p144) target = $region28
      $region27: #{_forward_impl.5} parent=23 // pred_region
        %p147 = scmp.lt.s32.totalorder %s16, 1
        %s148 = scalar_select %p147, %s16, 1
        %p149 = scmp.lt.s32.totalorder %s17, 0
        %s150 = scalar_select %p149, %s17, 0
        %s151 = sadd.s32 %s150, %s148
        %s152 = smul.addr %s151, 2
        %s153 = scalar_lea.vmem %s0, %s152
      $region28: #{_forward_impl.5} parent=23 // pred_fallthru
        _
    $region24: #{_forward_impl.5} parent=5 // pred_fallthru
      _
    %p154 = scmp.le.s32.totalorder 1, %s9
    %p155 = scmp.lt.s32.totalorder %s9, 3
    %p156 = pnand %p154, %p155
    %p157 = pneg %p156
    // Predicated region
    $region29: #{_forward_impl.5} parent=5 // pred_check
      _
    $region30: #{_forward_impl.5} parent=5 // pred_check_branch
      %159 = sbr.rel (%p156) target = $region32
    $region31: #{_forward_impl.5} parent=5 // pred_region
      %s160 = ssub.s32 %s9, 1
      %p161 = scmp.lt.s32.totalorder %s18, 1
      %s162 = scalar_select %p161, %s18, 1
      %p163 = scmp.lt.s32.totalorder %s19, 0
      %s164 = scalar_select %p163, %s19, 0
      %s165 = sadd.s32 %s164, %s162
      %s166 = smul.addr %s165, 2
      %s167 = scalar_lea.vmem %s0, %s166
      %p168 = pneg %p49
      %p169 = pneg %p46
      %p170 = pneg %p70
      %p171 = pneg %p67
      %p172 = pneg %p91
      %p173 = pneg %p88
      %p174 = pneg %p119
      %p175 = pneg %p116
      %p176 = scmp.lt.s32.totalorder %s18, 1
      %s177 = scalar_select %p176, %s18, 1
      %p178 = scmp.lt.s32.totalorder %s19, 0
      %s179 = scalar_select %p178, %s19, 0
      %s180 = smul.addr %s177, 3
      %s181 = sadd.s32 %s179, %s180
      %s182 = smul.addr %s181, 4
      %s183 = scalar_lea.vmem %s3, %s182
      %p184 = scmp.lt.s32.totalorder %s18, 1
      %s185 = scalar_select %p184, %s18, 1
      %p186 = scmp.lt.s32.totalorder %s19, 0
      %s187 = scalar_select %p186, %s19, 0
      %s188 = sadd.s32 %s187, %s185
      %s189 = smul.addr %s188, 2
      %s190 = scalar_lea.vmem %s0, %s189
      %p191 = scmp.lt.s32.totalorder %s18, 1
      %s192 = scalar_select %p191, %s18, 1
      %p193 = scmp.lt.s32.totalorder %s19, 0
      %s194 = scalar_select %p193, %s19, 0
      %s195 = smul.addr %s192, 3
      %s196 = sadd.s32 %s194, %s195
      %s197 = smul.addr %s196, 4
      %s198 = scalar_lea.vmem %s3, %s197
      %v200 = vld [vmem:[%s1] sm:$0xf]
      %v201 = vld [vmem:[%s1 + $0x4] sm:$0xf]
      %v202 = vld [vmem:[%s1 + $0x8] sm:$0x3]
      %v203 = vld [vmem:[%s190] sm:$0x3]
      %v204 = vld [vmem:[%s2] sm:$0xff]
      %v205 = vld [vmem:[%s2 + $0x8] sm:$0xff]
      %v206 = vld [vmem:[%s2 + $0x10] sm:$0x7]
      %208 = vset.pattern.permute.xlu0 0
      %209 = vperm.xlu0 %208, %v204
      %v210 = vpop.permute.xlu0 %209
      %213 = vset.pattern.permute.xlu0 0
      %214 = vperm.xlu0 %213, %v205
      %v215 = vpop.permute.xlu0 %214
      %218 = vset.pattern.permute.xlu0 0
      %219 = vperm.xlu0 %218, %v206
      %v220 = vpop.permute.xlu0 %219
      %v225 = vunpack.c.l.b16 %v200
      %v226 = vunpack.c.l.b16 %v201
      %v227 = vunpack.c.l.b16 %v202
      %v228 = vpack.c.b16 %v226, %v225
      %v229 = vpack.c.b16 %v227, %v227
      %vm230 = vcmask 23552
      %v232 = vsel %vm230, %v228, 0
      %v235 = vsel %vm230, %v229, 0
      %vm237 = vcmask 1040384
      %vm238 = vcmask 1041408
      %v239 = vsel %vm237, 4294967295, 65535
      %v240 = vsel %vm238, %v239, 0
      %v242 = vand.u32 %v203, %v240
      %244 = vmatpush.bf16.msra.mxu0 0
      %245 = vmatpush.bf16.msra.mxu0 0
      %246 = vmatpush.bf16.msra.mxu0 0
      %247 = vmatpush.bf16.msra.mxu0 0
      %248 = vmatpush.bf16.msra.mxu0 0
      %249 = vmatpush.bf16.msra.mxu0 0
      %250 = vmatpush.bf16.msra.mxu0 0
      %251 = vmatpush.bf16.msra.mxu0 %v242
      %252 = vmatmul.bf16.gmra.mxu0 %v232
      %v253 = vpop.f32.mrf.mxu0
      %v254 = vadd.f32 %v210, %v253
      %v255 = vpop.f32.mrf.mxu0
      %v256 = vadd.f32 %v215, %v255
      %257 = vmatmul.bf16.gmra.mxu0 %v235
      %v258 = vpop.f32.mrf.mxu0
      %v259 = vadd.f32 %v220, %v258
      %v260 = vpop.f32.mrf.mxu0
      %261 = vdwg.mxu0
      %v262 = vpack.c.bf16 %v254, %v254
      %v263 = vpack.c.bf16 %v256, %v256
      %v264 = vpack.c.bf16 %v259, %v259
      %vm265 = vcmask 125952
      %266 = vst.msk [vmem:[%s198] sm:$0xf] %vm265, %v262
      %267 = vst.msk [vmem:[%s198 + $0x4] sm:$0xf] %vm265, %v263
      %vm268 = vcmask 123904
      %vm269 = vsmask.f32 1280
      %vm270 = vmand %vm268, %vm269
      %v271 = vld [vmem:[%s198 + $0x8] sm:$0x3]
      %v272 = vsel %vm270, %v264, %v271
      %273 = vst [vmem:[%s198 + $0x8] sm:$0x3] %v272
      %p274 = scmp.lt.s32.totalorder %s18, 1
      %s275 = scalar_select %p274, %s18, 1
      %p276 = scmp.lt.s32.totalorder %s19, 0
      %s277 = scalar_select %p276, %s19, 0
      %s278 = smul.addr %s275, 3
      %s279 = sadd.s32 %s277, %s278
      %s280 = smul.addr %s279, 4
      %s281 = scalar_lea.vmem %s3, %s280
      // Predicated region
      $region33: #{_forward_impl.5} parent=31 // pred_check
        %p282 = pneg %p116
      $region34: #{_forward_impl.5} parent=31 // pred_check_branch
        %284 = sbr.rel (%p282) target = $region36
      $region35: #{_forward_impl.5} parent=31 // pred_region
        _
      $region36: #{_forward_impl.5} parent=31 // pred_fallthru
        _
    $region32: #{_forward_impl.5} parent=5 // pred_fallthru
      _
    %p285 = scmp.le.s32.totalorder 2, %s9
    // Predicated region
    $region37: #{_forward_impl.5} parent=5 // pred_check
      %p286 = pneg %p285
    $region38: #{_forward_impl.5} parent=5 // pred_check_branch
      %288 = sbr.rel (%p286) target = $region40
    $region39: #{_forward_impl.5} parent=5 // pred_region
      %s289 = ssub.s32 %s9, 2
      // Predicated region
      $region41: #{_forward_impl.5} parent=39 // pred_check
        %p290 = pneg %p122
      $region42: #{_forward_impl.5} parent=39 // pred_check_branch
        %292 = sbr.rel (%p290) target = $region44
      $region43: #{_forward_impl.5} parent=39 // pred_region
        %p293 = scmp.lt.s32.totalorder %s20, 1
        %s294 = scalar_select %p293, %s20, 1
        %p295 = scmp.lt.s32.totalorder %s21, 0
        %s296 = scalar_select %p295, %s21, 0
        %s297 = smul.addr %s294, 3
        %s298 = sadd.s32 %s296, %s297
        %s299 = smul.addr %s298, 4
        %s300 = scalar_lea.vmem %s3, %s299
      $region44: #{_forward_impl.5} parent=39 // pred_fallthru
        _
    $region40: #{_forward_impl.5} parent=5 // pred_fallthru
      _
  $region6: #{_forward_impl.5} parent=0 // loop_footer
    %s13 = sadd.s32 1, %s9
  $region7: #{_forward_impl.5} parent=0 // loop_footer_branch
    %8 = sbr.rel target = $region3
  $region8: #{_forward_impl.5} parent=0 // loop_exit
    _

// kernel: _forward_impl.7
$region0: #{_forward_impl.7}
  #allocation0 [shape = 'u32[]', space=smem, size = 0x4, offset = 0x4, fixed_abs, tag = 'smem constant byte address 0x4 - core index']
  #allocation1 [shape = 'u32[72,128]{1,0:T(1,128)}', space=vmem, size = 0x9000, scoped, tag = 'internal scratch']
  %s0 = inlined_call_operand.vmem [shape: bf16[2,6,16], index: 0, kind: input, shape index: {}]
  %s1 = inlined_call_operand.vmem [shape: bf16[2,6], index: 1, kind: input, shape index: {}]
  %s2 = inlined_call_operand.vmem [shape: f32[2,1], index: 2, kind: input, shape index: {}]
  %s3 = inlined_call_operand.vmem [shape: f32[2,2,16], index: 3, kind: output, shape index: {}]
  %s4 = sld [smem:[#allocation0]]
  $region45: #{_forward_impl.7} parent=0
    _
  %s6 = ssub.s32 1, %s4
  %s7 = scalar_select 0, %s6, %s4
  loop: start=0, step=1, limit=4
  $region2: #{_forward_impl.7} parent=0 // loop_pre_header
    _
  $region3: #{_forward_impl.7} parent=0 // loop_header
    %s9 = sphi 0, %s13
    %p10 = scmp.ge.s32.totalorder %s9, 4
    %s16 = sphi 0, %s28
    %s17 = sphi 0, %s24
    %s18 = sphi 0, %s16
    %s19 = sphi 0, %s17
    %s20 = sphi 0, %s18
    %s21 = sphi 0, %s19
    %s33 = sphi 0, %s35
    %s36 = sphi 0, %s33
    %s37 = sphi 0, %s36
    %s53 = sphi 0, %s37
    %s57 = sphi 0, %s57
    %s59 = sphi 0, %s57
    %s60 = sphi 0, %s59
    %s74 = sphi 0, %s60
    %s78 = sphi 0, %s78
    %s80 = sphi 0, %s78
    %s81 = sphi 0, %s80
    %s95 = sphi 0, %s81
    %s103 = sphi 0, %s105
    %s106 = sphi 0, %s103
    %s107 = sphi 0, %s106
    %s123 = sphi 0, %s107
  $region4: #{_forward_impl.7} parent=0 // loop_header_branch
    %12 = sbr.rel (%p10) target = $region8
  $region5: #{_forward_impl.7} parent=0 // loop_body
    %s14 = ssub.s32 %s9, 1
    %s15 = ssub.s32 %s9, 2
    %s22 = sadd.s32 1, %s17
    %p23 = scmp.ge.s32.totalorder %s22, 1
    %s24 = scalar_select %p23, 0, %s22
    %s25 = sadd.s32 1, %s16
    %s26 = scalar_select %p23, %s25, %s16
    %p27 = scmp.ge.s32.totalorder %s26, 2
    %s28 = scalar_select %p27, 0, %s26
    %s29 = ssub.s32 %s16, %s28
    %s30 = ssub.s32 %s17, %s24
    %s31 = sor.u32 %s29, %s30
    %p32 = scmp.eq.s32.totalorder %s31, 0
    %s34 = sadd.s32 %s33, 1
    %s35 = scalar_select %p32, %s33, %s34
    %p38 = pneg %p32
    %p39 = scmp.eq.s32.totalorder %s9, 1
    %p40 = por %p38, %p39
    %p41 = scmp.ne.s32.totalorder %s33, %s36
    %p42 = scmp.eq.s32.totalorder %s9, 0
    %p43 = por %p41, %p42
    %p44 = scmp.ne.s32.totalorder %s33, %s36
    %p45 = scmp.eq.s32.totalorder %s14, 1
    %p46 = por %p44, %p45
    %p47 = scmp.ne.s32.totalorder %s36, %s37
    %p48 = scmp.eq.s32.totalorder %s14, 0
    %p49 = por %p47, %p48
    %p50 = scmp.ne.s32.totalorder %s36, %s37
    %p51 = scmp.eq.s32.totalorder %s15, 1
    %p52 = por %p50, %p51
    %p54 = scmp.ne.s32.totalorder %s37, %s53
    %p55 = scmp.eq.s32.totalorder %s15, 0
    %p56 = por %p54, %p55
    %s58 = sadd.s32 %s57, 1
    %p61 = scmp.eq.s32.totalorder %s9, 1
    %p62 = scmp.ne.s32.totalorder %s57, %s59
    %p63 = scmp.eq.s32.totalorder %s9, 0
    %p64 = por %p62, %p63
    %p65 = scmp.ne.s32.totalorder %s57, %s59
    %p66 = scmp.eq.s32.totalorder %s14, 1
    %p67 = por %p65, %p66
    %p68 = scmp.ne.s32.totalorder %s59, %s60
    %p69 = scmp.eq.s32.totalorder %s14, 0
    %p70 = por %p68, %p69
    %p71 = scmp.ne.s32.totalorder %s59, %s60
    %p72 = scmp.eq.s32.totalorder %s15, 1
    %p73 = por %p71, %p72
    %p75 = scmp.ne.s32.totalorder %s60, %s74
    %p76 = scmp.eq.s32.totalorder %s15, 0
    %p77 = por %p75, %p76
    %s79 = sadd.s32 %s78, 1
    %p82 = scmp.eq.s32.totalorder %s9, 1
    %p83 = scmp.ne.s32.totalorder %s78, %s80
    %p84 = scmp.eq.s32.totalorder %s9, 0
    %p85 = por %p83, %p84
    %p86 = scmp.ne.s32.totalorder %s78, %s80
    %p87 = scmp.eq.s32.totalorder %s14, 1
    %p88 = por %p86, %p87
    %p89 = scmp.ne.s32.totalorder %s80, %s81
    %p90 = scmp.eq.s32.totalorder %s14, 0
    %p91 = por %p89, %p90
    %p92 = scmp.ne.s32.totalorder %s80, %s81
    %p93 = scmp.eq.s32.totalorder %s15, 1
    %p94 = por %p92, %p93
    %p96 = scmp.ne.s32.totalorder %s81, %s95
    %p97 = scmp.eq.s32.totalorder %s15, 0
    %p98 = por %p96, %p97
    %s99 = ssub.s32 %s16, %s28
    %s100 = ssub.s32 %s17, %s24
    %s101 = sor.u32 %s99, %s100
    %p102 = scmp.eq.s32.totalorder %s101, 0
    %s104 = sadd.s32 %s103, 1
    %s105 = scalar_select %p102, %s103, %s104
    %p108 = pneg %p102
    %p109 = scmp.eq.s32.totalorder %s9, 1
    %p110 = por %p108, %p109
    %p111 = scmp.ne.s32.totalorder %s103, %s106
    %p112 = scmp.eq.s32.totalorder %s9, 0
    %p113 = por %p111, %p112
    %p114 = scmp.ne.s32.totalorder %s103, %s106
    %p115 = scmp.eq.s32.totalorder %s14, 1
    %p116 = por %p114, %p115
    %p117 = scmp.ne.s32.totalorder %s106, %s107
    %p118 = scmp.eq.s32.totalorder %s14, 0
    %p119 = por %p117, %p118
    %p120 = scmp.ne.s32.totalorder %s106, %s107
    %p121 = scmp.eq.s32.totalorder %s15, 1
    %p122 = por %p120, %p121
    %p124 = scmp.ne.s32.totalorder %s107, %s123
    %p125 = scmp.eq.s32.totalorder %s15, 0
    %p126 = por %p124, %p125
    %p127 = scmp.le.s32.totalorder 1, %s9
    %p128 = scmp.lt.s32.totalorder %s9, 3
    %p129 = pnand %p127, %p128
    %p130 = pneg %p129
    // Predicated region
    $region9: #{_forward_impl.7} parent=5 // pred_check
      _
    $region10: #{_forward_impl.7} parent=5 // pred_check_branch
      %132 = sbr.rel (%p129) target = $region12
    $region11: #{_forward_impl.7} parent=5 // pred_region
      %s133 = ssub.s32 %s9, 1
      // Predicated region
      $region13: #{_forward_impl.7} parent=11 // pred_check
        %p134 = pneg %p70
      $region14: #{_forward_impl.7} parent=11 // pred_check_branch
        %136 = sbr.rel (%p134) target = $region16
      $region15: #{_forward_impl.7} parent=11 // pred_region
        _
      $region16: #{_forward_impl.7} parent=11 // pred_fallthru
        _
      // Predicated region
      $region17: #{_forward_impl.7} parent=11 // pred_check
        %p137 = pneg %p91
      $region18: #{_forward_impl.7} parent=11 // pred_check_branch
        %139 = sbr.rel (%p137) target = $region20
      $region19: #{_forward_impl.7} parent=11 // pred_region
        _
      $region20: #{_forward_impl.7} parent=11 // pred_fallthru
        _
    $region12: #{_forward_impl.7} parent=5 // pred_fallthru
      _
    %p140 = scmp.lt.s32.totalorder %s9, 2
    // Predicated region
    $region21: #{_forward_impl.7} parent=5 // pred_check
      %p141 = pneg %p140
    $region22: #{_forward_impl.7} parent=5 // pred_check_branch
      %143 = sbr.rel (%p141) target = $region24
    $region23: #{_forward_impl.7} parent=5 // pred_region
      // Predicated region
      $region25: #{_forward_impl.7} parent=23 // pred_check
        %p144 = pneg %p43
      $region26: #{_forward_impl.7} parent=23 // pred_check_branch
        %146 = sbr.rel (%p144) target = $region28
      $region27: #{_forward_impl.7} parent=23 // pred_region
        %p147 = scmp.lt.s32.totalorder %s16, 1
        %s148 = scalar_select %p147, %s16, 1
        %p149 = scmp.lt.s32.totalorder %s17, 0
        %s150 = scalar_select %p149, %s17, 0
        %s151 = sadd.s32 %s150, %s148
        %s152 = smul.addr %s151, 4
        %s153 = scalar_lea.vmem %s0, %s152
      $region28: #{_forward_impl.7} parent=23 // pred_fallthru
        _
    $region24: #{_forward_impl.7} parent=5 // pred_fallthru
      _
    %p154 = scmp.le.s32.totalorder 1, %s9
    %p155 = scmp.lt.s32.totalorder %s9, 3
    %p156 = pnand %p154, %p155
    %p157 = pneg %p156
    // Predicated region
    $region29: #{_forward_impl.7} parent=5 // pred_check
      _
    $region30: #{_forward_impl.7} parent=5 // pred_check_branch
      %159 = sbr.rel (%p156) target = $region32
    $region31: #{_forward_impl.7} parent=5 // pred_region
      %s160 = ssub.s32 %s9, 1
      %p161 = scmp.lt.s32.totalorder %s18, 1
      %s162 = scalar_select %p161, %s18, 1
      %p163 = scmp.lt.s32.totalorder %s19, 0
      %s164 = scalar_select %p163, %s19, 0
      %s165 = sadd.s32 %s164, %s162
      %s166 = smul.addr %s165, 4
      %s167 = scalar_lea.vmem %s0, %s166
      %p168 = pneg %p49
      %p169 = pneg %p46
      %p170 = pneg %p70
      %p171 = pneg %p67
      %p172 = pneg %p91
      %p173 = pneg %p88
      %p174 = pneg %p119
      %p175 = pneg %p116
      %p176 = scmp.lt.s32.totalorder %s18, 1
      %s177 = scalar_select %p176, %s18, 1
      %p178 = scmp.lt.s32.totalorder %s19, 0
      %s179 = scalar_select %p178, %s19, 0
      %s180 = sadd.s32 %s179, %s177
      %s181 = smul.addr %s180, 2
      %s182 = scalar_lea.vmem %s3, %s181
      %p183 = scmp.lt.s32.totalorder %s18, 1
      %s184 = scalar_select %p183, %s18, 1
      %p185 = scmp.lt.s32.totalorder %s19, 0
      %s186 = scalar_select %p185, %s19, 0
      %s187 = sadd.s32 %s186, %s184
      %s188 = smul.addr %s187, 4
      %s189 = scalar_lea.vmem %s0, %s188
      %p190 = scmp.lt.s32.totalorder %s18, 1
      %s191 = scalar_select %p190, %s18, 1
      %p192 = scmp.lt.s32.totalorder %s19, 0
      %s193 = scalar_select %p192, %s19, 0
      %s194 = sadd.s32 %s193, %s191
      %s195 = smul.addr %s194, 2
      %s196 = scalar_lea.vmem %s3, %s195
      %v198 = vld [vmem:[%s1] sm:$0x1]
      %v199 = vld [vmem:[%s189] sm:$0x7]
      %v200 = vld [vmem:[%s2] sm:$0x3]
      %202 = vset.pattern.permute.xlu0 0
      %203 = vperm.xlu0 %202, %v200
      %v204 = vpop.permute.xlu0 %203
      %vm206 = vcmask 48128
      %v208 = vsel %vm206, %v198, 0
      %vm210 = vcmask 1042432
      %v212 = vsel %vm210, %v199, 0
      %214 = vmatpush.bf16.msra.mxu0 0
      %215 = vmatpush.bf16.msra.mxu0 0
      %216 = vmatpush.bf16.msra.mxu0 0
      %217 = vmatpush.bf16.msra.mxu0 0
      %218 = vmatpush.bf16.msra.mxu0 0
      %219 = vmatpush.bf16.msra.mxu0 0
      %220 = vmatpush.bf16.msra.mxu0 0
      %221 = vmatpush.bf16.msra.mxu0 %v212
      %222 = vmatmul.bf16.gmra.mxu0 %v208
      %v223 = vpop.f32.mrf.mxu0
      %v224 = vadd.f32 %v204, %v223
      %v225 = vpop.f32.mrf.mxu0
      %226 = vdwg.mxu0
      %vm227 = vcmask 123904
      %228 = vst.msk [vmem:[%s196] sm:$0x3] %vm227, %v224
      %p229 = scmp.lt.s32.totalorder %s18, 1
      %s230 = scalar_select %p229, %s18, 1
      %p231 = scmp.lt.s32.totalorder %s19, 0
      %s232 = scalar_select %p231, %s19, 0
      %s233 = sadd.s32 %s232, %s230
      %s234 = smul.addr %s233, 2
      %s235 = scalar_lea.vmem %s3, %s234
      // Predicated region
      $region33: #{_forward_impl.7} parent=31 // pred_check
        %p236 = pneg %p116
      $region34: #{_forward_impl.7} parent=31 // pred_check_branch
        %238 = sbr.rel (%p236) target = $region36
      $region35: #{_forward_impl.7} parent=31 // pred_region
        _
      $region36: #{_forward_impl.7} parent=31 // pred_fallthru
        _
    $region32: #{_forward_impl.7} parent=5 // pred_fallthru
      _
    %p239 = scmp.le.s32.totalorder 2, %s9
    // Predicated region
    $region37: #{_forward_impl.7} parent=5 // pred_check
      %p240 = pneg %p239
    $region38: #{_forward_impl.7} parent=5 // pred_check_branch
      %242 = sbr.rel (%p240) target = $region40
    $region39: #{_forward_impl.7} parent=5 // pred_region
      %s243 = ssub.s32 %s9, 2
      // Predicated region
      $region41: #{_forward_impl.7} parent=39 // pred_check
        %p244 = pneg %p122
      $region42: #{_forward_impl.7} parent=39 // pred_check_branch
        %246 = sbr.rel (%p244) target = $region44
      $region43: #{_forward_impl.7} parent=39 // pred_region
        %p247 = scmp.lt.s32.totalorder %s20, 1
        %s248 = scalar_select %p247, %s20, 1
        %p249 = scmp.lt.s32.totalorder %s21, 0
        %s250 = scalar_select %p249, %s21, 0
        %s251 = sadd.s32 %s250, %s248
        %s252 = smul.addr %s251, 2
        %s253 = scalar_lea.vmem %s3, %s252
      $region44: #{_forward_impl.7} parent=39 // pred_fallthru
        _
    $region40: #{_forward_impl.7} parent=5 // pred_fallthru
      _
  $region6: #{_forward_impl.7} parent=0 // loop_footer
    %s13 = sadd.s32 1, %s9
  $region7: #{_forward_impl.7} parent=0 // loop_footer_branch
    %8 = sbr.rel target = $region3
  $region8: #{_forward_impl.7} parent=0 // loop_exit
    _

// kernel: _forward_impl.8
$region0: #{_forward_impl.8}
  #allocation0 [shape = 'u32[]', space=smem, size = 0x4, offset = 0x4, fixed_abs, tag = 'smem constant byte address 0x4 - core index']
  #allocation1 [shape = 'u32[72,128]{1,0:T(1,128)}', space=vmem, size = 0x9000, scoped, tag = 'internal scratch']
  %s0 = inlined_call_operand.vmem [shape: bf16[2,22,16], index: 0, kind: input, shape index: {}]
  %s1 = inlined_call_operand.vmem [shape: bf16[21,22], index: 1, kind: input, shape index: {}]
  %s2 = inlined_call_operand.vmem [shape: f32[21,1], index: 2, kind: input, shape index: {}]
  %s3 = inlined_call_operand.vmem [shape: bf16[2,21,16], index: 3, kind: output, shape index: {}]
  %s4 = sld [smem:[#allocation0]]
  $region45: #{_forward_impl.8} parent=0
    _
  %s6 = ssub.s32 1, %s4
  %s7 = scalar_select 0, %s6, %s4
  loop: start=0, step=1, limit=4
  $region2: #{_forward_impl.8} parent=0 // loop_pre_header
    _
  $region3: #{_forward_impl.8} parent=0 // loop_header
    %s9 = sphi 0, %s13
    %p10 = scmp.ge.s32.totalorder %s9, 4
    %s16 = sphi 0, %s28
    %s17 = sphi 0, %s24
    %s18 = sphi 0, %s16
    %s19 = sphi 0, %s17
    %s20 = sphi 0, %s18
    %s21 = sphi 0, %s19
    %s33 = sphi 0, %s35
    %s36 = sphi 0, %s33
    %s37 = sphi 0, %s36
    %s53 = sphi 0, %s37
    %s57 = sphi 0, %s57
    %s59 = sphi 0, %s57
    %s60 = sphi 0, %s59
    %s74 = sphi 0, %s60
    %s78 = sphi 0, %s78
    %s80 = sphi 0, %s78
    %s81 = sphi 0, %s80
    %s95 = sphi 0, %s81
    %s103 = sphi 0, %s105
    %s106 = sphi 0, %s103
    %s107 = sphi 0, %s106
    %s123 = sphi 0, %s107
  $region4: #{_forward_impl.8} parent=0 // loop_header_branch
    %12 = sbr.rel (%p10) target = $region8
  $region5: #{_forward_impl.8} parent=0 // loop_body
    %s14 = ssub.s32 %s9, 1
    %s15 = ssub.s32 %s9, 2
    %s22 = sadd.s32 1, %s17
    %p23 = scmp.ge.s32.totalorder %s22, 1
    %s24 = scalar_select %p23, 0, %s22
    %s25 = sadd.s32 1, %s16
    %s26 = scalar_select %p23, %s25, %s16
    %p27 = scmp.ge.s32.totalorder %s26, 2
    %s28 = scalar_select %p27, 0, %s26
    %s29 = ssub.s32 %s16, %s28
    %s30 = ssub.s32 %s17, %s24
    %s31 = sor.u32 %s29, %s30
    %p32 = scmp.eq.s32.totalorder %s31, 0
    %s34 = sadd.s32 %s33, 1
    %s35 = scalar_select %p32, %s33, %s34
    %p38 = pneg %p32
    %p39 = scmp.eq.s32.totalorder %s9, 1
    %p40 = por %p38, %p39
    %p41 = scmp.ne.s32.totalorder %s33, %s36
    %p42 = scmp.eq.s32.totalorder %s9, 0
    %p43 = por %p41, %p42
    %p44 = scmp.ne.s32.totalorder %s33, %s36
    %p45 = scmp.eq.s32.totalorder %s14, 1
    %p46 = por %p44, %p45
    %p47 = scmp.ne.s32.totalorder %s36, %s37
    %p48 = scmp.eq.s32.totalorder %s14, 0
    %p49 = por %p47, %p48
    %p50 = scmp.ne.s32.totalorder %s36, %s37
    %p51 = scmp.eq.s32.totalorder %s15, 1
    %p52 = por %p50, %p51
    %p54 = scmp.ne.s32.totalorder %s37, %s53
    %p55 = scmp.eq.s32.totalorder %s15, 0
    %p56 = por %p54, %p55
    %s58 = sadd.s32 %s57, 1
    %p61 = scmp.eq.s32.totalorder %s9, 1
    %p62 = scmp.ne.s32.totalorder %s57, %s59
    %p63 = scmp.eq.s32.totalorder %s9, 0
    %p64 = por %p62, %p63
    %p65 = scmp.ne.s32.totalorder %s57, %s59
    %p66 = scmp.eq.s32.totalorder %s14, 1
    %p67 = por %p65, %p66
    %p68 = scmp.ne.s32.totalorder %s59, %s60
    %p69 = scmp.eq.s32.totalorder %s14, 0
    %p70 = por %p68, %p69
    %p71 = scmp.ne.s32.totalorder %s59, %s60
    %p72 = scmp.eq.s32.totalorder %s15, 1
    %p73 = por %p71, %p72
    %p75 = scmp.ne.s32.totalorder %s60, %s74
    %p76 = scmp.eq.s32.totalorder %s15, 0
    %p77 = por %p75, %p76
    %s79 = sadd.s32 %s78, 1
    %p82 = scmp.eq.s32.totalorder %s9, 1
    %p83 = scmp.ne.s32.totalorder %s78, %s80
    %p84 = scmp.eq.s32.totalorder %s9, 0
    %p85 = por %p83, %p84
    %p86 = scmp.ne.s32.totalorder %s78, %s80
    %p87 = scmp.eq.s32.totalorder %s14, 1
    %p88 = por %p86, %p87
    %p89 = scmp.ne.s32.totalorder %s80, %s81
    %p90 = scmp.eq.s32.totalorder %s14, 0
    %p91 = por %p89, %p90
    %p92 = scmp.ne.s32.totalorder %s80, %s81
    %p93 = scmp.eq.s32.totalorder %s15, 1
    %p94 = por %p92, %p93
    %p96 = scmp.ne.s32.totalorder %s81, %s95
    %p97 = scmp.eq.s32.totalorder %s15, 0
    %p98 = por %p96, %p97
    %s99 = ssub.s32 %s16, %s28
    %s100 = ssub.s32 %s17, %s24
    %s101 = sor.u32 %s99, %s100
    %p102 = scmp.eq.s32.totalorder %s101, 0
    %s104 = sadd.s32 %s103, 1
    %s105 = scalar_select %p102, %s103, %s104
    %p108 = pneg %p102
    %p109 = scmp.eq.s32.totalorder %s9, 1
    %p110 = por %p108, %p109
    %p111 = scmp.ne.s32.totalorder %s103, %s106
    %p112 = scmp.eq.s32.totalorder %s9, 0
    %p113 = por %p111, %p112
    %p114 = scmp.ne.s32.totalorder %s103, %s106
    %p115 = scmp.eq.s32.totalorder %s14, 1
    %p116 = por %p114, %p115
    %p117 = scmp.ne.s32.totalorder %s106, %s107
    %p118 = scmp.eq.s32.totalorder %s14, 0
    %p119 = por %p117, %p118
    %p120 = scmp.ne.s32.totalorder %s106, %s107
    %p121 = scmp.eq.s32.totalorder %s15, 1
    %p122 = por %p120, %p121
    %p124 = scmp.ne.s32.totalorder %s107, %s123
    %p125 = scmp.eq.s32.totalorder %s15, 0
    %p126 = por %p124, %p125
    %p127 = scmp.le.s32.totalorder 1, %s9
    %p128 = scmp.lt.s32.totalorder %s9, 3
    %p129 = pnand %p127, %p128
    %p130 = pneg %p129
    // Predicated region
    $region9: #{_forward_impl.8} parent=5 // pred_check
      _
    $region10: #{_forward_impl.8} parent=5 // pred_check_branch
      %132 = sbr.rel (%p129) target = $region12
    $region11: #{_forward_impl.8} parent=5 // pred_region
      %s133 = ssub.s32 %s9, 1
      // Predicated region
      $region13: #{_forward_impl.8} parent=11 // pred_check
        %p134 = pneg %p70
      $region14: #{_forward_impl.8} parent=11 // pred_check_branch
        %136 = sbr.rel (%p134) target = $region16
      $region15: #{_forward_impl.8} parent=11 // pred_region
        _
      $region16: #{_forward_impl.8} parent=11 // pred_fallthru
        _
      // Predicated region
      $region17: #{_forward_impl.8} parent=11 // pred_check
        %p137 = pneg %p91
      $region18: #{_forward_impl.8} parent=11 // pred_check_branch
        %139 = sbr.rel (%p137) target = $region20
      $region19: #{_forward_impl.8} parent=11 // pred_region
        _
      $region20: #{_forward_impl.8} parent=11 // pred_fallthru
        _
    $region12: #{_forward_impl.8} parent=5 // pred_fallthru
      _
    %p140 = scmp.lt.s32.totalorder %s9, 2
    // Predicated region
    $region21: #{_forward_impl.8} parent=5 // pred_check
      %p141 = pneg %p140
    $region22: #{_forward_impl.8} parent=5 // pred_check_branch
      %143 = sbr.rel (%p141) target = $region24
    $region23: #{_forward_impl.8} parent=5 // pred_region
      // Predicated region
      $region25: #{_forward_impl.8} parent=23 // pred_check
        %p144 = pneg %p43
      $region26: #{_forward_impl.8} parent=23 // pred_check_branch
        %146 = sbr.rel (%p144) target = $region28
      $region27: #{_forward_impl.8} parent=23 // pred_region
        %p147 = scmp.lt.s32.totalorder %s16, 1
        %s148 = scalar_select %p147, %s16, 1
        %p149 = scmp.lt.s32.totalorder %s17, 0
        %s150 = scalar_select %p149, %s17, 0
        %s151 = smul.addr %s148, 3
        %s152 = sadd.s32 %s150, %s151
        %s153 = smul.addr %s152, 4
        %s154 = scalar_lea.vmem %s0, %s153
      $region28: #{_forward_impl.8} parent=23 // pred_fallthru
        _
    $region24: #{_forward_impl.8} parent=5 // pred_fallthru
      _
    %p155 = scmp.le.s32.totalorder 1, %s9
    %p156 = scmp.lt.s32.totalorder %s9, 3
    %p157 = pnand %p155, %p156
    %p158 = pneg %p157
    // Predicated region
    $region29: #{_forward_impl.8} parent=5 // pred_check
      _
    $region30: #{_forward_impl.8} parent=5 // pred_check_branch
      %160 = sbr.rel (%p157) target = $region32
    $region31: #{_forward_impl.8} parent=5 // pred_region
      %s161 = ssub.s32 %s9, 1
      %p162 = scmp.lt.s32.totalorder %s18, 1
      %s163 = scalar_select %p162, %s18, 1
      %p164 = scmp.lt.s32.totalorder %s19, 0
      %s165 = scalar_select %p164, %s19, 0
      %s166 = smul.addr %s163, 3
      %s167 = sadd.s32 %s165, %s166
      %s168 = smul.addr %s167, 4
      %s169 = scalar_lea.vmem %s0, %s168
      %p170 = pneg %p49
      %p171 = pneg %p46
      %p172 = pneg %p70
      %p173 = pneg %p67
      %p174 = pneg %p91
      %p175 = pneg %p88
      %p176 = pneg %p119
      %p177 = pneg %p116
      %p178 = scmp.lt.s32.totalorder %s18, 1
      %s179 = scalar_select %p178, %s18, 1
      %p180 = scmp.lt.s32.totalorder %s19, 0
      %s181 = scalar_select %p180, %s19, 0
      %s182 = smul.addr %s179, 3
      %s183 = sadd.s32 %s181, %s182
      %s184 = smul.addr %s183, 4
      %s185 = scalar_lea.vmem %s3, %s184
      %p186 = scmp.lt.s32.totalorder %s18, 1
      %s187 = scalar_select %p186, %s18, 1
      %p188 = scmp.lt.s32.totalorder %s19, 0
      %s189 = scalar_select %p188, %s19, 0
      %s190 = smul.addr %s187, 3
      %s191 = sadd.s32 %s189, %s190
      %s192 = smul.addr %s191, 4
      %s193 = scalar_lea.vmem %s0, %s192
      %p194 = scmp.lt.s32.totalorder %s18, 1
      %s195 = scalar_select %p194, %s18, 1
      %p196 = scmp.lt.s32.totalorder %s19, 0
      %s197 = scalar_select %p196, %s19, 0
      %s198 = smul.addr %s195, 3
      %s199 = sadd.s32 %s197, %s198
      %s200 = smul.addr %s199, 4
      %s201 = scalar_lea.vmem %s3, %s200
      %v203 = vld [vmem:[%s1] sm:$0xf]
      %v204 = vld [vmem:[%s1 + $0x4] sm:$0xf]
      %v205 = vld [vmem:[%s1 + $0x8] sm:$0x7]
      %v206 = vld [vmem:[%s193] sm:$0xf]
      %v207 = vld [vmem:[%s193 + $0x4] sm:$0xf]
      %v208 = vld [vmem:[%s193 + $0x8] sm:$0x7]
      %v209 = vld [vmem:[%s2] sm:$0xff]
      %v210 = vld [vmem:[%s2 + $0x8] sm:$0xff]
      %v211 = vld [vmem:[%s2 + $0x10] sm:$0x1f]
      %213 = vset.pattern.permute.xlu0 0
      %214 = vperm.xlu0 %213, %v209
      %v215 = vpop.permute.xlu0 %214
      %218 = vset.pattern.permute.xlu0 0
      %219 = vperm.xlu0 %218, %v210
      %v220 = vpop.permute.xlu0 %219
      %223 = vset.pattern.permute.xlu0 0
      %224 = vperm.xlu0 %223, %v211
      %v225 = vpop.permute.xlu0 %224
      %v230 = vunpack.c.l.b16 %v203
      %v231 = vunpack.c.l.b16 %v204
      %v232 = vunpack.c.l.b16 %v205
      %v233 = vpack.c.b16 %v231, %v230
      %v234 = vpack.c.b16 %v232, %v232
      %v238 = vunpack.c.l.b16 %v206
      %v239 = vunpack.c.l.b16 %v207
      %v240 = vunpack.c.l.b16 %v208
      %v241 = vpack.c.b16 %v239, %v238
      %v242 = vpack.c.b16 %v240, %v240
      %vm244 = vcmask 179200
      %v246 = vsel %vm244, %v233, 0
      %v249 = vsel %vm244, %v234, 0
      %vm251 = vcmask 1042432
      %v253 = vsel %vm251, %v242, 0
      %255 = vmatpush.bf16.msra.mxu0 0
      %256 = vmatpush.bf16.msra.mxu0 0
      %257 = vmatpush.bf16.msra.mxu0 0
      %258 = vmatpush.bf16.msra.mxu0 0
      %259 = vmatpush.bf16.msra.mxu0 0
      %260 = vmatpush.bf16.msra.mxu0 0
      %261 = vmatpush.bf16.msra.mxu0 %v253
      %262 = vmatpush.bf16.msra.mxu0 %v241
      %263 = vmatmul.bf16.gmra.mxu0 %v246
      %v264 = vpop.f32.mrf.mxu0
      %v265 = vadd.f32 %v215, %v264
      %v266 = vpop.f32.mrf.mxu0
      %v267 = vadd.f32 %v220, %v266
      %268 = vmatmul.bf16.gmra.mxu0 %v249
      %v269 = vpop.f32.mrf.mxu0
      %v270 = vadd.f32 %v225, %v269
      %v271 = vpop.f32.mrf.mxu0
      %272 = vdwg.mxu0
      %v273 = vpack.c.bf16 %v265, %v265
      %v274 = vpack.c.bf16 %v267, %v267
      %v275 = vpack.c.bf16 %v270, %v270
      %vm276 = vcmask 125952
      %277 = vst.msk [vmem:[%s201] sm:$0xf] %vm276, %v273
      %278 = vst.msk [vmem:[%s201 + $0x4] sm:$0xf] %vm276, %v274
      %vm279 = vcmask 124928
      %vm280 = vsmask.f32 2304
      %vm281 = vmand %vm279, %vm280
      %v282 = vld [vmem:[%s201 + $0x8] sm:$0x7]
      %v283 = vsel %vm281, %v275, %v282
      %284 = vst [vmem:[%s201 + $0x8] sm:$0x7] %v283
      %p285 = scmp.lt.s32.totalorder %s18, 1
      %s286 = scalar_select %p285, %s18, 1
      %p287 = scmp.lt.s32.totalorder %s19, 0
      %s288 = scalar_select %p287, %s19, 0
      %s289 = smul.addr %s286, 3
      %s290 = sadd.s32 %s288, %s289
      %s291 = smul.addr %s290, 4
      %s292 = scalar_lea.vmem %s3, %s291
      // Predicated region
      $region33: #{_forward_impl.8} parent=31 // pred_check
        %p293 = pneg %p116
      $region34: #{_forward_impl.8} parent=31 // pred_check_branch
        %295 = sbr.rel (%p293) target = $region36
      $region35: #{_forward_impl.8} parent=31 // pred_region
        _
      $region36: #{_forward_impl.8} parent=31 // pred_fallthru
        _
    $region32: #{_forward_impl.8} parent=5 // pred_fallthru
      _
    %p296 = scmp.le.s32.totalorder 2, %s9
    // Predicated region
    $region37: #{_forward_impl.8} parent=5 // pred_check
      %p297 = pneg %p296
    $region38: #{_forward_impl.8} parent=5 // pred_check_branch
      %299 = sbr.rel (%p297) target = $region40
    $region39: #{_forward_impl.8} parent=5 // pred_region
      %s300 = ssub.s32 %s9, 2
      // Predicated region
      $region41: #{_forward_impl.8} parent=39 // pred_check
        %p301 = pneg %p122
      $region42: #{_forward_impl.8} parent=39 // pred_check_branch
        %303 = sbr.rel (%p301) target = $region44
      $region43: #{_forward_impl.8} parent=39 // pred_region
        %p304 = scmp.lt.s32.totalorder %s20, 1
        %s305 = scalar_select %p304, %s20, 1
        %p306 = scmp.lt.s32.totalorder %s21, 0
        %s307 = scalar_select %p306, %s21, 0
        %s308 = smul.addr %s305, 3
        %s309 = sadd.s32 %s307, %s308
        %s310 = smul.addr %s309, 4
        %s311 = scalar_lea.vmem %s3, %s310
      $region44: #{_forward_impl.8} parent=39 // pred_fallthru
        _
    $region40: #{_forward_impl.8} parent=5 // pred_fallthru
      _
  $region6: #{_forward_impl.8} parent=0 // loop_footer
    %s13 = sadd.s32 1, %s9
  $region7: #{_forward_impl.8} parent=0 // loop_footer_branch
    %8 = sbr.rel target = $region3
  $region8: #{_forward_impl.8} parent=0 // loop_exit
    _

// kernel: _forward_impl.9
$region0: #{_forward_impl.9}
  #allocation0 [shape = 'u32[]', space=smem, size = 0x4, offset = 0x4, fixed_abs, tag = 'smem constant byte address 0x4 - core index']
  #allocation1 [shape = 'u32[72,128]{1,0:T(1,128)}', space=vmem, size = 0x9000, scoped, tag = 'internal scratch']
  %s0 = inlined_call_operand.vmem [shape: bf16[2,19,256], index: 0, kind: input, shape index: {}]
  %s1 = inlined_call_operand.vmem [shape: bf16[2,19,256], index: 1, kind: input, shape index: {}]
  %s2 = inlined_call_operand.vmem [shape: bf16[2,2,256], index: 2, kind: input, shape index: {}]
  %s3 = inlined_call_operand.vmem [shape: bf16[2,1,256], index: 3, kind: input, shape index: {}]
  %s4 = inlined_call_operand.vmem [shape: s32[2,1,256], index: 4, kind: input, shape index: {}]
  %s5 = inlined_call_operand.vmem [shape: s32[2,1,256], index: 5, kind: input, shape index: {}]
  %s6 = inlined_call_operand.vmem [shape: f32[2,1], index: 6, kind: input, shape index: {}]
  %s7 = inlined_call_operand.vmem [shape: f32[2,1,1], index: 7, kind: output, shape index: {0}]
  %s8 = inlined_call_operand.vmem [shape: f32[2,1,1], index: 8, kind: output, shape index: {1}]
  %s9 = inlined_call_operand.vmem [shape: f32[2,1,1], index: 9, kind: output, shape index: {2}]
  %s10 = inlined_call_operand.vmem [shape: f32[2,1,1], index: 10, kind: output, shape index: {3}]
  %s11 = inlined_call_operand.vmem [shape: f32[2,1,1], index: 11, kind: output, shape index: {4}]
  %s12 = inlined_call_operand.vmem [shape: f32[2,1,1], index: 12, kind: output, shape index: {5}]
  %s13 = inlined_call_operand.vmem [shape: f32[2,1,1], index: 13, kind: output, shape index: {6}]
  %s14 = inlined_call_operand.vmem [shape: f32[2,1,1], index: 14, kind: output, shape index: {7}]
  %15 = xla_tuple %s7, %s8, %s9, %s10, %s11, %s12, %s13, %s14
  %s16 = sld [smem:[#allocation0]]
  $region121: #{_forward_impl.9} parent=0
    _
  %s18 = ssub.s32 1, %s16
  %s19 = scalar_select 0, %s18, %s16
  loop: start=0, step=1, limit=4
  $region2: #{_forward_impl.9} parent=0 // loop_pre_header
    _
  $region3: #{_forward_impl.9} parent=0 // loop_header
    %s21 = sphi 0, %s25
    %p22 = scmp.ge.s32.totalorder %s21, 4
    %s28 = sphi 0, %s47
    %s29 = sphi 0, %s43
    %s30 = sphi 0, %s39
    %s31 = sphi 0, %s28
    %s32 = sphi 0, %s29
    %s33 = sphi 0, %s30
    %s34 = sphi 0, %s31
    %s35 = sphi 0, %s32
    %s36 = sphi 0, %s33
    %s54 = sphi 0, %s56
    %s57 = sphi 0, %s54
    %s58 = sphi 0, %s57
    %s74 = sphi 0, %s58
    %s84 = sphi 0, %s86
    %s87 = sphi 0, %s84
    %s88 = sphi 0, %s87
    %s104 = sphi 0, %s88
    %s114 = sphi 0, %s116
    %s117 = sphi 0, %s114
    %s118 = sphi 0, %s117
    %s134 = sphi 0, %s118
    %s144 = sphi 0, %s146
    %s147 = sphi 0, %s144
    %s148 = sphi 0, %s147
    %s164 = sphi 0, %s148
    %s174 = sphi 0, %s176
    %s177 = sphi 0, %s174
    %s178 = sphi 0, %s177
    %s194 = sphi 0, %s178
    %s204 = sphi 0, %s206
    %s207 = sphi 0, %s204
    %s208 = sphi 0, %s207
    %s224 = sphi 0, %s208
    %s228 = sphi 0, %s228
    %s230 = sphi 0, %s228
    %s231 = sphi 0, %s230
    %s245 = sphi 0, %s231
    %s253 = sphi 0, %s255
    %s256 = sphi 0, %s253
    %s257 = sphi 0, %s256
    %s273 = sphi 0, %s257
    %s281 = sphi 0, %s283
    %s284 = sphi 0, %s281
    %s285 = sphi 0, %s284
    %s301 = sphi 0, %s285
    %s309 = sphi 0, %s311
    %s312 = sphi 0, %s309
    %s313 = sphi 0, %s312
    %s329 = sphi 0, %s313
    %s337 = sphi 0, %s339
    %s340 = sphi 0, %s337
    %s341 = sphi 0, %s340
    %s357 = sphi 0, %s341
    %s365 = sphi 0, %s367
    %s368 = sphi 0, %s365
    %s369 = sphi 0, %s368
    %s385 = sphi 0, %s369
    %s393 = sphi 0, %s395
    %s396 = sphi 0, %s393
    %s397 = sphi 0, %s396
    %s413 = sphi 0, %s397
    %s421 = sphi 0, %s423
    %s424 = sphi 0, %s421
    %s425 = sphi 0, %s424
    %s441 = sphi 0, %s425
    %s449 = sphi 0, %s451
    %s452 = sphi 0, %s449
    %s453 = sphi 0, %s452
    %s469 = sphi 0, %s453
  $region4: #{_forward_impl.9} parent=0 // loop_header_branch
    %24 = sbr.rel (%p22) target = $region8
  $region5: #{_forward_impl.9} parent=0 // loop_body
    %s26 = ssub.s32 %s21, 1
    %s27 = ssub.s32 %s21, 2
    %s37 = sadd.s32 1, %s30
    %p38 = scmp.ge.s32.totalorder %s37, 1
    %s39 = scalar_select %p38, 0, %s37
    %s40 = sadd.s32 1, %s29
    %s41 = scalar_select %p38, %s40, %s29
    %p42 = scmp.ge.s32.totalorder %s41, 1
    %s43 = scalar_select %p42, 0, %s41
    %s44 = sadd.s32 1, %s28
    %s45 = scalar_select %p42, %s44, %s28
    %p46 = scmp.ge.s32.totalorder %s45, 2
    %s47 = scalar_select %p46, 0, %s45
    %s48 = sadd.s32 %s29, %s30
    %s49 = sadd.s32 %s43, %s39
    %s50 = ssub.s32 %s28, %s47
    %s51 = ssub.s32 %s48, %s49
    %s52 = sor.u32 %s50, %s51
    %p53 = scmp.eq.s32.totalorder %s52, 0
    %s55 = sadd.s32 %s54, 1
    %s56 = scalar_select %p53, %s54, %s55
    %p59 = pneg %p53
    %p60 = scmp.eq.s32.totalorder %s21, 1
    %p61 = por %p59, %p60
    %p62 = scmp.ne.s32.totalorder %s54, %s57
    %p63 = scmp.eq.s32.totalorder %s21, 0
    %p64 = por %p62, %p63
    %p65 = scmp.ne.s32.totalorder %s54, %s57
    %p66 = scmp.eq.s32.totalorder %s26, 1
    %p67 = por %p65, %p66
    %p68 = scmp.ne.s32.totalorder %s57, %s58
    %p69 = scmp.eq.s32.totalorder %s26, 0
    %p70 = por %p68, %p69
    %p71 = scmp.ne.s32.totalorder %s57, %s58
    %p72 = scmp.eq.s32.totalorder %s27, 1
    %p73 = por %p71, %p72
    %p75 = scmp.ne.s32.totalorder %s58, %s74
    %p76 = scmp.eq.s32.totalorder %s27, 0
    %p77 = por %p75, %p76
    %s78 = sadd.s32 %s29, %s30
    %s79 = sadd.s32 %s43, %s39
    %s80 = ssub.s32 %s28, %s47
    %s81 = ssub.s32 %s78, %s79
    %s82 = sor.u32 %s80, %s81
    %p83 = scmp.eq.s32.totalorder %s82, 0
    %s85 = sadd.s32 %s84, 1
    %s86 = scalar_select %p83, %s84, %s85
    %p89 = pneg %p83
    %p90 = scmp.eq.s32.totalorder %s21, 1
    %p91 = por %p89, %p90
    %p92 = scmp.ne.s32.totalorder %s84, %s87
    %p93 = scmp.eq.s32.totalorder %s21, 0
    %p94 = por %p92, %p93
    %p95 = scmp.ne.s32.totalorder %s84, %s87
    %p96 = scmp.eq.s32.totalorder %s26, 1
    %p97 = por %p95, %p96
    %p98 = scmp.ne.s32.totalorder %s87, %s88
    %p99 = scmp.eq.s32.totalorder %s26, 0
    %p100 = por %p98, %p99
    %p101 = scmp.ne.s32.totalorder %s87, %s88
    %p102 = scmp.eq.s32.totalorder %s27, 1
    %p103 = por %p101, %p102
    %p105 = scmp.ne.s32.totalorder %s88, %s104
    %p106 = scmp.eq.s32.totalorder %s27, 0
    %p107 = por %p105, %p106
    %s108 = sadd.s32 %s29, %s30
    %s109 = sadd.s32 %s43, %s39
    %s110 = ssub.s32 %s28, %s47
    %s111 = ssub.s32 %s108, %s109
    %s112 = sor.u32 %s110, %s111
    %p113 = scmp.eq.s32.totalorder %s112, 0
    %s115 = sadd.s32 %s114, 1
    %s116 = scalar_select %p113, %s114, %s115
    %p119 = pneg %p113
    %p120 = scmp.eq.s32.totalorder %s21, 1
    %p121 = por %p119, %p120
    %p122 = scmp.ne.s32.totalorder %s114, %s117
    %p123 = scmp.eq.s32.totalorder %s21, 0
    %p124 = por %p122, %p123
    %p125 = scmp.ne.s32.totalorder %s114, %s117
    %p126 = scmp.eq.s32.totalorder %s26, 1
    %p127 = por %p125, %p126
    %p128 = scmp.ne.s32.totalorder %s117, %s118
    %p129 = scmp.eq.s32.totalorder %s26, 0
    %p130 = por %p128, %p129
    %p131 = scmp.ne.s32.totalorder %s117, %s118
    %p132 = scmp.eq.s32.totalorder %s27, 1
    %p133 = por %p131, %p132
    %p135 = scmp.ne.s32.totalorder %s118, %s134
    %p136 = scmp.eq.s32.totalorder %s27, 0
    %p137 = por %p135, %p136
    %s138 = sadd.s32 %s29, %s30
    %s139 = sadd.s32 %s43, %s39
    %s140 = ssub.s32 %s28, %s47
    %s141 = ssub.s32 %s138, %s139
    %s142 = sor.u32 %s140, %s141
    %p143 = scmp.eq.s32.totalorder %s142, 0
    %s145 = sadd.s32 %s144, 1
    %s146 = scalar_select %p143, %s144, %s145
    %p149 = pneg %p143
    %p150 = scmp.eq.s32.totalorder %s21, 1
    %p151 = por %p149, %p150
    %p152 = scmp.ne.s32.totalorder %s144, %s147
    %p153 = scmp.eq.s32.totalorder %s21, 0
    %p154 = por %p152, %p153
    %p155 = scmp.ne.s32.totalorder %s144, %s147
    %p156 = scmp.eq.s32.totalorder %s26, 1
    %p157 = por %p155, %p156
    %p158 = scmp.ne.s32.totalorder %s147, %s148
    %p159 = scmp.eq.s32.totalorder %s26, 0
    %p160 = por %p158, %p159
    %p161 = scmp.ne.s32.totalorder %s147, %s148
    %p162 = scmp.eq.s32.totalorder %s27, 1
    %p163 = por %p161, %p162
    %p165 = scmp.ne.s32.totalorder %s148, %s164
    %p166 = scmp.eq.s32.totalorder %s27, 0
    %p167 = por %p165, %p166
    %s168 = sadd.s32 %s29, %s30
    %s169 = sadd.s32 %s43, %s39
    %s170 = ssub.s32 %s28, %s47
    %s171 = ssub.s32 %s168, %s169
    %s172 = sor.u32 %s170, %s171
    %p173 = scmp.eq.s32.totalorder %s172, 0
    %s175 = sadd.s32 %s174, 1
    %s176 = scalar_select %p173, %s174, %s175
    %p179 = pneg %p173
    %p180 = scmp.eq.s32.totalorder %s21, 1
    %p181 = por %p179, %p180
    %p182 = scmp.ne.s32.totalorder %s174, %s177
    %p183 = scmp.eq.s32.totalorder %s21, 0
    %p184 = por %p182, %p183
    %p185 = scmp.ne.s32.totalorder %s174, %s177
    %p186 = scmp.eq.s32.totalorder %s26, 1
    %p187 = por %p185, %p186
    %p188 = scmp.ne.s32.totalorder %s177, %s178
    %p189 = scmp.eq.s32.totalorder %s26, 0
    %p190 = por %p188, %p189
    %p191 = scmp.ne.s32.totalorder %s177, %s178
    %p192 = scmp.eq.s32.totalorder %s27, 1
    %p193 = por %p191, %p192
    %p195 = scmp.ne.s32.totalorder %s178, %s194
    %p196 = scmp.eq.s32.totalorder %s27, 0
    %p197 = por %p195, %p196
    %s198 = sadd.s32 %s29, %s30
    %s199 = sadd.s32 %s43, %s39
    %s200 = ssub.s32 %s28, %s47
    %s201 = ssub.s32 %s198, %s199
    %s202 = sor.u32 %s200, %s201
    %p203 = scmp.eq.s32.totalorder %s202, 0
    %s205 = sadd.s32 %s204, 1
    %s206 = scalar_select %p203, %s204, %s205
    %p209 = pneg %p203
    %p210 = scmp.eq.s32.totalorder %s21, 1
    %p211 = por %p209, %p210
    %p212 = scmp.ne.s32.totalorder %s204, %s207
    %p213 = scmp.eq.s32.totalorder %s21, 0
    %p214 = por %p212, %p213
    %p215 = scmp.ne.s32.totalorder %s204, %s207
    %p216 = scmp.eq.s32.totalorder %s26, 1
    %p217 = por %p215, %p216
    %p218 = scmp.ne.s32.totalorder %s207, %s208
    %p219 = scmp.eq.s32.totalorder %s26, 0
    %p220 = por %p218, %p219
    %p221 = scmp.ne.s32.totalorder %s207, %s208
    %p222 = scmp.eq.s32.totalorder %s27, 1
    %p223 = por %p221, %p222
    %p225 = scmp.ne.s32.totalorder %s208, %s224
    %p226 = scmp.eq.s32.totalorder %s27, 0
    %p227 = por %p225, %p226
    %s229 = sadd.s32 %s228, 1
    %p232 = scmp.eq.s32.totalorder %s21, 1
    %p233 = scmp.ne.s32.totalorder %s228, %s230
    %p234 = scmp.eq.s32.totalorder %s21, 0
    %p235 = por %p233, %p234
    %p236 = scmp.ne.s32.totalorder %s228, %s230
    %p237 = scmp.eq.s32.totalorder %s26, 1
    %p238 = por %p236, %p237
    %p239 = scmp.ne.s32.totalorder %s230, %s231
    %p240 = scmp.eq.s32.totalorder %s26, 0
    %p241 = por %p239, %p240
    %p242 = scmp.ne.s32.totalorder %s230, %s231
    %p243 = scmp.eq.s32.totalorder %s27, 1
    %p244 = por %p242, %p243
    %p246 = scmp.ne.s32.totalorder %s231, %s245
    %p247 = scmp.eq.s32.totalorder %s27, 0
    %p248 = por %p246, %p247
    %s249 = sadd.s32 %s28, %s29
    %s250 = sadd.s32 %s47, %s43
    %s251 = ssub.s32 %s249, %s250
    %p252 = scmp.eq.s32.totalorder %s251, 0
    %s254 = sadd.s32 %s253, 1
    %s255 = scalar_select %p252, %s253, %s254
    %p258 = pneg %p252
    %p259 = scmp.eq.s32.totalorder %s21, 1
    %p260 = por %p258, %p259
    %p261 = scmp.ne.s32.totalorder %s253, %s256
    %p262 = scmp.eq.s32.totalorder %s21, 0
    %p263 = por %p261, %p262
    %p264 = scmp.ne.s32.totalorder %s253, %s256
    %p265 = scmp.eq.s32.totalorder %s26, 1
    %p266 = por %p264, %p265
    %p267 = scmp.ne.s32.totalorder %s256, %s257
    %p268 = scmp.eq.s32.totalorder %s26, 0
    %p269 = por %p267, %p268
    %p270 = scmp.ne.s32.totalorder %s256, %s257
    %p271 = scmp.eq.s32.totalorder %s27, 1
    %p272 = por %p270, %p271
    %p274 = scmp.ne.s32.totalorder %s257, %s273
    %p275 = scmp.eq.s32.totalorder %s27, 0
    %p276 = por %p274, %p275
    %s277 = sadd.s32 %s28, %s29
    %s278 = sadd.s32 %s47, %s43
    %s279 = ssub.s32 %s277, %s278
    %p280 = scmp.eq.s32.totalorder %s279, 0
    %s282 = sadd.s32 %s281, 1
    %s283 = scalar_select %p280, %s281, %s282
    %p286 = pneg %p280
    %p287 = scmp.eq.s32.totalorder %s21, 1
    %p288 = por %p286, %p287
    %p289 = scmp.ne.s32.totalorder %s281, %s284
    %p290 = scmp.eq.s32.totalorder %s21, 0
    %p291 = por %p289, %p290
    %p292 = scmp.ne.s32.totalorder %s281, %s284
    %p293 = scmp.eq.s32.totalorder %s26, 1
    %p294 = por %p292, %p293
    %p295 = scmp.ne.s32.totalorder %s284, %s285
    %p296 = scmp.eq.s32.totalorder %s26, 0
    %p297 = por %p295, %p296
    %p298 = scmp.ne.s32.totalorder %s284, %s285
    %p299 = scmp.eq.s32.totalorder %s27, 1
    %p300 = por %p298, %p299
    %p302 = scmp.ne.s32.totalorder %s285, %s301
    %p303 = scmp.eq.s32.totalorder %s27, 0
    %p304 = por %p302, %p303
    %s305 = sadd.s32 %s28, %s29
    %s306 = sadd.s32 %s47, %s43
    %s307 = ssub.s32 %s305, %s306
    %p308 = scmp.eq.s32.totalorder %s307, 0
    %s310 = sadd.s32 %s309, 1
    %s311 = scalar_select %p308, %s309, %s310
    %p314 = pneg %p308
    %p315 = scmp.eq.s32.totalorder %s21, 1
    %p316 = por %p314, %p315
    %p317 = scmp.ne.s32.totalorder %s309, %s312
    %p318 = scmp.eq.s32.totalorder %s21, 0
    %p319 = por %p317, %p318
    %p320 = scmp.ne.s32.totalorder %s309, %s312
    %p321 = scmp.eq.s32.totalorder %s26, 1
    %p322 = por %p320, %p321
    %p323 = scmp.ne.s32.totalorder %s312, %s313
    %p324 = scmp.eq.s32.totalorder %s26, 0
    %p325 = por %p323, %p324
    %p326 = scmp.ne.s32.totalorder %s312, %s313
    %p327 = scmp.eq.s32.totalorder %s27, 1
    %p328 = por %p326, %p327
    %p330 = scmp.ne.s32.totalorder %s313, %s329
    %p331 = scmp.eq.s32.totalorder %s27, 0
    %p332 = por %p330, %p331
    %s333 = sadd.s32 %s28, %s29
    %s334 = sadd.s32 %s47, %s43
    %s335 = ssub.s32 %s333, %s334
    %p336 = scmp.eq.s32.totalorder %s335, 0
    %s338 = sadd.s32 %s337, 1
    %s339 = scalar_select %p336, %s337, %s338
    %p342 = pneg %p336
    %p343 = scmp.eq.s32.totalorder %s21, 1
    %p344 = por %p342, %p343
    %p345 = scmp.ne.s32.totalorder %s337, %s340
    %p346 = scmp.eq.s32.totalorder %s21, 0
    %p347 = por %p345, %p346
    %p348 = scmp.ne.s32.totalorder %s337, %s340
    %p349 = scmp.eq.s32.totalorder %s26, 1
    %p350 = por %p348, %p349
    %p351 = scmp.ne.s32.totalorder %s340, %s341
    %p352 = scmp.eq.s32.totalorder %s26, 0
    %p353 = por %p351, %p352
    %p354 = scmp.ne.s32.totalorder %s340, %s341
    %p355 = scmp.eq.s32.totalorder %s27, 1
    %p356 = por %p354, %p355
    %p358 = scmp.ne.s32.totalorder %s341, %s357
    %p359 = scmp.eq.s32.totalorder %s27, 0
    %p360 = por %p358, %p359
    %s361 = sadd.s32 %s28, %s29
    %s362 = sadd.s32 %s47, %s43
    %s363 = ssub.s32 %s361, %s362
    %p364 = scmp.eq.s32.totalorder %s363, 0
    %s366 = sadd.s32 %s365, 1
    %s367 = scalar_select %p364, %s365, %s366
    %p370 = pneg %p364
    %p371 = scmp.eq.s32.totalorder %s21, 1
    %p372 = por %p370, %p371
    %p373 = scmp.ne.s32.totalorder %s365, %s368
    %p374 = scmp.eq.s32.totalorder %s21, 0
    %p375 = por %p373, %p374
    %p376 = scmp.ne.s32.totalorder %s365, %s368
    %p377 = scmp.eq.s32.totalorder %s26, 1
    %p378 = por %p376, %p377
    %p379 = scmp.ne.s32.totalorder %s368, %s369
    %p380 = scmp.eq.s32.totalorder %s26, 0
    %p381 = por %p379, %p380
    %p382 = scmp.ne.s32.totalorder %s368, %s369
    %p383 = scmp.eq.s32.totalorder %s27, 1
    %p384 = por %p382, %p383
    %p386 = scmp.ne.s32.totalorder %s369, %s385
    %p387 = scmp.eq.s32.totalorder %s27, 0
    %p388 = por %p386, %p387
    %s389 = sadd.s32 %s28, %s29
    %s390 = sadd.s32 %s47, %s43
    %s391 = ssub.s32 %s389, %s390
    %p392 = scmp.eq.s32.totalorder %s391, 0
    %s394 = sadd.s32 %s393, 1
    %s395 = scalar_select %p392, %s393, %s394
    %p398 = pneg %p392
    %p399 = scmp.eq.s32.totalorder %s21, 1
    %p400 = por %p398, %p399
    %p401 = scmp.ne.s32.totalorder %s393, %s396
    %p402 = scmp.eq.s32.totalorder %s21, 0
    %p403 = por %p401, %p402
    %p404 = scmp.ne.s32.totalorder %s393, %s396
    %p405 = scmp.eq.s32.totalorder %s26, 1
    %p406 = por %p404, %p405
    %p407 = scmp.ne.s32.totalorder %s396, %s397
    %p408 = scmp.eq.s32.totalorder %s26, 0
    %p409 = por %p407, %p408
    %p410 = scmp.ne.s32.totalorder %s396, %s397
    %p411 = scmp.eq.s32.totalorder %s27, 1
    %p412 = por %p410, %p411
    %p414 = scmp.ne.s32.totalorder %s397, %s413
    %p415 = scmp.eq.s32.totalorder %s27, 0
    %p416 = por %p414, %p415
    %s417 = sadd.s32 %s28, %s29
    %s418 = sadd.s32 %s47, %s43
    %s419 = ssub.s32 %s417, %s418
    %p420 = scmp.eq.s32.totalorder %s419, 0
    %s422 = sadd.s32 %s421, 1
    %s423 = scalar_select %p420, %s421, %s422
    %p426 = pneg %p420
    %p427 = scmp.eq.s32.totalorder %s21, 1
    %p428 = por %p426, %p427
    %p429 = scmp.ne.s32.totalorder %s421, %s424
    %p430 = scmp.eq.s32.totalorder %s21, 0
    %p431 = por %p429, %p430
    %p432 = scmp.ne.s32.totalorder %s421, %s424
    %p433 = scmp.eq.s32.totalorder %s26, 1
    %p434 = por %p432, %p433
    %p435 = scmp.ne.s32.totalorder %s424, %s425
    %p436 = scmp.eq.s32.totalorder %s26, 0
    %p437 = por %p435, %p436
    %p438 = scmp.ne.s32.totalorder %s424, %s425
    %p439 = scmp.eq.s32.totalorder %s27, 1
    %p440 = por %p438, %p439
    %p442 = scmp.ne.s32.totalorder %s425, %s441
    %p443 = scmp.eq.s32.totalorder %s27, 0
    %p444 = por %p442, %p443
    %s445 = sadd.s32 %s28, %s29
    %s446 = sadd.s32 %s47, %s43
    %s447 = ssub.s32 %s445, %s446
    %p448 = scmp.eq.s32.totalorder %s447, 0
    %s450 = sadd.s32 %s449, 1
    %s451 = scalar_select %p448, %s449, %s450
    %p454 = pneg %p448
    %p455 = scmp.eq.s32.totalorder %s21, 1
    %p456 = por %p454, %p455
    %p457 = scmp.ne.s32.totalorder %s449, %s452
    %p458 = scmp.eq.s32.totalorder %s21, 0
    %p459 = por %p457, %p458
    %p460 = scmp.ne.s32.totalorder %s449, %s452
    %p461 = scmp.eq.s32.totalorder %s26, 1
    %p462 = por %p460, %p461
    %p463 = scmp.ne.s32.totalorder %s452, %s453
    %p464 = scmp.eq.s32.totalorder %s26, 0
    %p465 = por %p463, %p464
    %p466 = scmp.ne.s32.totalorder %s452, %s453
    %p467 = scmp.eq.s32.totalorder %s27, 1
    %p468 = por %p466, %p467
    %p470 = scmp.ne.s32.totalorder %s453, %s469
    %p471 = scmp.eq.s32.totalorder %s27, 0
    %p472 = por %p470, %p471
    %p473 = scmp.le.s32.totalorder 1, %s21
    %p474 = scmp.lt.s32.totalorder %s21, 3
    %p475 = pnand %p473, %p474
    %p476 = pneg %p475
    // Predicated region
    $region9: #{_forward_impl.9} parent=5 // pred_check
      _
    $region10: #{_forward_impl.9} parent=5 // pred_check_branch
      %478 = sbr.rel (%p475) target = $region12
    $region11: #{_forward_impl.9} parent=5 // pred_region
      %s479 = ssub.s32 %s21, 1
      // Predicated region
      $region13: #{_forward_impl.9} parent=11 // pred_check
        %p480 = pneg %p241
      $region14: #{_forward_impl.9} parent=11 // pred_check_branch
        %482 = sbr.rel (%p480) target = $region16
      $region15: #{_forward_impl.9} parent=11 // pred_region
        _
      $region16: #{_forward_impl.9} parent=11 // pred_fallthru
        _
    $region12: #{_forward_impl.9} parent=5 // pred_fallthru
      _
    %p483 = scmp.lt.s32.totalorder %s21, 2
    // Predicated region
    $region17: #{_forward_impl.9} parent=5 // pred_check
      %p484 = pneg %p483
    $region18: #{_forward_impl.9} parent=5 // pred_check_branch
      %486 = sbr.rel (%p484) target = $region20
    $region19: #{_forward_impl.9} parent=5 // pred_region
      // Predicated region
      $region21: #{_forward_impl.9} parent=19 // pred_check
        %p487 = pneg %p64
      $region22: #{_forward_impl.9} parent=19 // pred_check_branch
        %489 = sbr.rel (%p487) target = $region24
      $region23: #{_forward_impl.9} parent=19 // pred_region
        %s490 = sadd.s32 %s29, %s30
        %s491 = smul.u32 2, %s490
        %p492 = scmp.lt.s32.totalorder %s28, 1
        %s493 = scalar_select %p492, %s28, 1
        %p494 = scmp.lt.s32.totalorder %s491, 1
        %s495 = scalar_select %p494, %s491, 1
        %s496 = smul.addr %s493, 6
        %s497 = sadd.s32 %s495, %s496
        %s498 = smul.addr %s497, 4
        %s499 = scalar_lea.vmem %s0, %s498
        %s500 = sadd.s32 %s29, %s30
        %s501 = smul.u32 2, %s500
      $region24: #{_forward_impl.9} parent=19 // pred_fallthru
        _
      // Predicated region
      $region25: #{_forward_impl.9} parent=19 // pred_check
        %p502 = pneg %p94
      $region26: #{_forward_impl.9} parent=19 // pred_check_branch
        %504 = sbr.rel (%p502) target = $region28
      $region27: #{_forward_impl.9} parent=19 // pred_region
        %s505 = sadd.s32 %s29, %s30
        %s506 = smul.u32 2, %s505
        %p507 = scmp.lt.s32.totalorder %s28, 1
        %s508 = scalar_select %p507, %s28, 1
        %p509 = scmp.lt.s32.totalorder %s506, 1
        %s510 = scalar_select %p509, %s506, 1
        %s511 = smul.addr %s508, 6
        %s512 = sadd.s32 %s510, %s511
        %s513 = smul.addr %s512, 4
        %s514 = scalar_lea.vmem %s1, %s513
        %s515 = sadd.s32 %s29, %s30
        %s516 = smul.u32 2, %s515
      $region28: #{_forward_impl.9} parent=19 // pred_fallthru
        _
      // Predicated region
      $region29: #{_forward_impl.9} parent=19 // pred_check
        %p517 = pneg %p124
      $region30: #{_forward_impl.9} parent=19 // pred_check_branch
        %519 = sbr.rel (%p517) target = $region32
      $region31: #{_forward_impl.9} parent=19 // pred_region
        %s520 = sadd.s32 %s29, %s30
        %s521 = smul.u32 2, %s520
        %p522 = scmp.lt.s32.totalorder %s28, 1
        %s523 = scalar_select %p522, %s28, 1
        %p524 = scmp.lt.s32.totalorder %s521, 1
        %s525 = scalar_select %p524, %s521, 1
        %s526 = smul.addr %s523, 2
        %s527 = sadd.s32 %s525, %s526
        %s528 = scalar_lea.vmem %s2, %s527
        %s529 = sadd.s32 %s29, %s30
        %s530 = smul.u32 2, %s529
      $region32: #{_forward_impl.9} parent=19 // pred_fallthru
        _
      // Predicated region
      $region33: #{_forward_impl.9} parent=19 // pred_check
        %p531 = pneg %p154
      $region34: #{_forward_impl.9} parent=19 // pred_check_branch
        %533 = sbr.rel (%p531) target = $region36
      $region35: #{_forward_impl.9} parent=19 // pred_region
        %s534 = sadd.s32 %s29, %s30
        %s535 = smul.u32 2, %s534
        %p536 = scmp.lt.s32.totalorder %s28, 1
        %s537 = scalar_select %p536, %s28, 1
        %p538 = scmp.lt.s32.totalorder %s535, 1
        %s539 = scalar_select %p538, %s535, 1
        %s540 = smul.addr %s537, 2
        %s541 = sadd.s32 %s539, %s540
        %s542 = scalar_lea.vmem %s3, %s541
        %s543 = sadd.s32 %s29, %s30
        %s544 = smul.u32 2, %s543
      $region36: #{_forward_impl.9} parent=19 // pred_fallthru
        _
      // Predicated region
      $region37: #{_forward_impl.9} parent=19 // pred_check
        %p545 = pneg %p184
      $region38: #{_forward_impl.9} parent=19 // pred_check_branch
        %547 = sbr.rel (%p545) target = $region40
      $region39: #{_forward_impl.9} parent=19 // pred_region
        %s548 = sadd.s32 %s29, %s30
        %s549 = smul.u32 2, %s548
        %p550 = scmp.lt.s32.totalorder %s28, 1
        %s551 = scalar_select %p550, %s28, 1
        %p552 = scmp.lt.s32.totalorder %s549, 1
        %s553 = scalar_select %p552, %s549, 1
        %s554 = smul.addr %s551, 2
        %s555 = sadd.s32 %s553, %s554
        %s556 = scalar_lea.vmem %s4, %s555
        %s557 = sadd.s32 %s29, %s30
        %s558 = smul.u32 2, %s557
      $region40: #{_forward_impl.9} parent=19 // pred_fallthru
        _
      // Predicated region
      $region41: #{_forward_impl.9} parent=19 // pred_check
        %p559 = pneg %p214
      $region42: #{_forward_impl.9} parent=19 // pred_check_branch
        %561 = sbr.rel (%p559) target = $region44
      $region43: #{_forward_impl.9} parent=19 // pred_region
        %s562 = sadd.s32 %s29, %s30
        %s563 = smul.u32 2, %s562
        %p564 = scmp.lt.s32.totalorder %s28, 1
        %s565 = scalar_select %p564, %s28, 1
        %p566 = scmp.lt.s32.totalorder %s563, 1
        %s567 = scalar_select %p566, %s563, 1
        %s568 = smul.addr %s565, 2
        %s569 = sadd.s32 %s567, %s568
        %s570 = scalar_lea.vmem %s5, %s569
        %s571 = sadd.s32 %s29, %s30
        %s572 = smul.u32 2, %s571
      $region44: #{_forward_impl.9} parent=19 // pred_fallthru
        _
    $region20: #{_forward_impl.9} parent=5 // pred_fallthru
      _
    %p573 = scmp.le.s32.totalorder 1, %s21
    %p574 = scmp.lt.s32.totalorder %s21, 3
    %p575 = pnand %p573, %p574
    %p576 = pneg %p575
    // Predicated region
    $region45: #{_forward_impl.9} parent=5 // pred_check
      _
    $region46: #{_forward_impl.9} parent=5 // pred_check_branch
      %578 = sbr.rel (%p575) target = $region48
    $region47: #{_forward_impl.9} parent=5 // pred_region
      %s579 = ssub.s32 %s21, 1
      %s580 = sadd.s32 %s32, %s33
      %s581 = smul.u32 2, %s580
      %p582 = scmp.lt.s32.totalorder %s31, 1
      %s583 = scalar_select %p582, %s31, 1
      %p584 = scmp.lt.s32.totalorder %s581, 1
      %s585 = scalar_select %p584, %s581, 1
      %s586 = smul.addr %s583, 6
      %s587 = sadd.s32 %s585, %s586
      %s588 = smul.addr %s587, 4
      %s589 = scalar_lea.vmem %s0, %s588
      %p590 = pneg %p70
      %p591 = pneg %p67
      %s592 = sadd.s32 %s32, %s33
      %s593 = smul.u32 2, %s592
      %p594 = scmp.lt.s32.totalorder %s31, 1
      %s595 = scalar_select %p594, %s31, 1
      %p596 = scmp.lt.s32.totalorder %s593, 1
      %s597 = scalar_select %p596, %s593, 1
      %s598 = smul.addr %s595, 6
      %s599 = sadd.s32 %s597, %s598
      %s600 = smul.addr %s599, 4
      %s601 = scalar_lea.vmem %s1, %s600
      %p602 = pneg %p100
      %p603 = pneg %p97
      %s604 = sadd.s32 %s32, %s33
      %s605 = smul.u32 2, %s604
      %p606 = scmp.lt.s32.totalorder %s31, 1
      %s607 = scalar_select %p606, %s31, 1
      %p608 = scmp.lt.s32.totalorder %s605, 1
      %s609 = scalar_select %p608, %s605, 1
      %s610 = smul.addr %s607, 2
      %s611 = sadd.s32 %s609, %s610
      %s612 = scalar_lea.vmem %s2, %s611
      %p613 = pneg %p130
      %p614 = pneg %p127
      %s615 = sadd.s32 %s32, %s33
      %s616 = smul.u32 2, %s615
      %p617 = scmp.lt.s32.totalorder %s31, 1
      %s618 = scalar_select %p617, %s31, 1
      %p619 = scmp.lt.s32.totalorder %s616, 1
      %s620 = scalar_select %p619, %s616, 1
      %s621 = smul.addr %s618, 2
      %s622 = sadd.s32 %s620, %s621
      %s623 = scalar_lea.vmem %s3, %s622
      %p624 = pneg %p160
      %p625 = pneg %p157
      %s626 = sadd.s32 %s32, %s33
      %s627 = smul.u32 2, %s626
      %p628 = scmp.lt.s32.totalorder %s31, 1
      %s629 = scalar_select %p628, %s31, 1
      %p630 = scmp.lt.s32.totalorder %s627, 1
      %s631 = scalar_select %p630, %s627, 1
      %s632 = smul.addr %s629, 2
      %s633 = sadd.s32 %s631, %s632
      %s634 = scalar_lea.vmem %s4, %s633
      %p635 = pneg %p190
      %p636 = pneg %p187
      %s637 = sadd.s32 %s32, %s33
      %s638 = smul.u32 2, %s637
      %p639 = scmp.lt.s32.totalorder %s31, 1
      %s640 = scalar_select %p639, %s31, 1
      %p641 = scmp.lt.s32.totalorder %s638, 1
      %s642 = scalar_select %p641, %s638, 1
      %s643 = smul.addr %s640, 2
      %s644 = sadd.s32 %s642, %s643
      %s645 = scalar_lea.vmem %s5, %s644
      %p646 = pneg %p220
      %p647 = pneg %p217
      %p648 = pneg %p241
      %p649 = pneg %p238
      %p650 = pneg %p269
      %p651 = pneg %p266
      %s652 = sadd.s32 %s31, %s32
      %p653 = scmp.lt.s32.totalorder %s652, 1
      %s654 = scalar_select %p653, %s652, 1
      %s655 = scalar_lea.vmem %s7, %s654
      %p656 = pneg %p297
      %p657 = pneg %p294
      %s658 = sadd.s32 %s31, %s32
      %p659 = scmp.lt.s32.totalorder %s658, 1
      %s660 = scalar_select %p659, %s658, 1
      %s661 = scalar_lea.vmem %s8, %s660
      %p662 = pneg %p325
      %p663 = pneg %p322
      %s664 = sadd.s32 %s31, %s32
      %p665 = scmp.lt.s32.totalorder %s664, 1
      %s666 = scalar_select %p665, %s664, 1
      %s667 = scalar_lea.vmem %s9, %s666
      %p668 = pneg %p353
      %p669 = pneg %p350
      %s670 = sadd.s32 %s31, %s32
      %p671 = scmp.lt.s32.totalorder %s670, 1
      %s672 = scalar_select %p671, %s670, 1
      %s673 = scalar_lea.vmem %s10, %s672
      %p674 = pneg %p381
      %p675 = pneg %p378
      %s676 = sadd.s32 %s31, %s32
      %p677 = scmp.lt.s32.totalorder %s676, 1
      %s678 = scalar_select %p677, %s676, 1
      %s679 = scalar_lea.vmem %s11, %s678
      %p680 = pneg %p409
      %p681 = pneg %p406
      %s682 = sadd.s32 %s31, %s32
      %p683 = scmp.lt.s32.totalorder %s682, 1
      %s684 = scalar_select %p683, %s682, 1
      %s685 = scalar_lea.vmem %s12, %s684
      %p686 = pneg %p437
      %p687 = pneg %p434
      %s688 = sadd.s32 %s31, %s32
      %p689 = scmp.lt.s32.totalorder %s688, 1
      %s690 = scalar_select %p689, %s688, 1
      %s691 = scalar_lea.vmem %s13, %s690
      %p692 = pneg %p465
      %p693 = pneg %p462
      %s694 = sadd.s32 %s31, %s32
      %p695 = scmp.lt.s32.totalorder %s694, 1
      %s696 = scalar_select %p695, %s694, 1
      %s697 = scalar_lea.vmem %s14, %s696
      %s698 = sadd.s32 %s32, %s33
      %s699 = smul.u32 2, %s698
      %p700 = scmp.lt.s32.totalorder %s31, 1
      %s701 = scalar_select %p700, %s31, 1
      %p702 = scmp.lt.s32.totalorder %s699, 1
      %s703 = scalar_select %p702, %s699, 1
      %s704 = smul.addr %s701, 6
      %s705 = sadd.s32 %s703, %s704
      %s706 = smul.addr %s705, 4
      %s707 = scalar_lea.vmem %s0, %s706
      %s708 = sadd.s32 %s32, %s33
      %s709 = smul.u32 2, %s708
      %s710 = sadd.s32 %s32, %s33
      %s711 = smul.u32 2, %s710
      %p712 = scmp.lt.s32.totalorder %s31, 1
      %s713 = scalar_select %p712, %s31, 1
      %p714 = scmp.lt.s32.totalorder %s711, 1
      %s715 = scalar_select %p714, %s711, 1
      %s716 = smul.addr %s713, 6
      %s717 = sadd.s32 %s715, %s716
      %s718 = smul.addr %s717, 4
      %s719 = scalar_lea.vmem %s1, %s718
      %s720 = sadd.s32 %s32, %s33
      %s721 = smul.u32 2, %s720
      %s722 = sadd.s32 %s32, %s33
      %s723 = smul.u32 2, %s722
      %p724 = scmp.lt.s32.totalorder %s31, 1
      %s725 = scalar_select %p724, %s31, 1
      %p726 = scmp.lt.s32.totalorder %s723, 1
      %s727 = scalar_select %p726, %s723, 1
      %s728 = smul.addr %s725, 2
      %s729 = sadd.s32 %s727, %s728
      %s730 = scalar_lea.vmem %s2, %s729
      %s731 = sadd.s32 %s32, %s33
      %s732 = smul.u32 2, %s731
      %s733 = sadd.s32 %s32, %s33
      %s734 = smul.u32 2, %s733
      %p735 = scmp.lt.s32.totalorder %s31, 1
      %s736 = scalar_select %p735, %s31, 1
      %p737 = scmp.lt.s32.totalorder %s734, 1
      %s738 = scalar_select %p737, %s734, 1
      %s739 = smul.addr %s736, 2
      %s740 = sadd.s32 %s738, %s739
      %s741 = scalar_lea.vmem %s3, %s740
      %s742 = sadd.s32 %s32, %s33
      %s743 = smul.u32 2, %s742
      %s744 = sadd.s32 %s32, %s33
      %s745 = smul.u32 2, %s744
      %p746 = scmp.lt.s32.totalorder %s31, 1
      %s747 = scalar_select %p746, %s31, 1
      %p748 = scmp.lt.s32.totalorder %s745, 1
      %s749 = scalar_select %p748, %s745, 1
      %s750 = smul.addr %s747, 2
      %s751 = sadd.s32 %s749, %s750
      %s752 = scalar_lea.vmem %s4, %s751
      %s753 = sadd.s32 %s32, %s33
      %s754 = smul.u32 2, %s753
      %s755 = sadd.s32 %s32, %s33
      %s756 = smul.u32 2, %s755
      %p757 = scmp.lt.s32.totalorder %s31, 1
      %s758 = scalar_select %p757, %s31, 1
      %p759 = scmp.lt.s32.totalorder %s756, 1
      %s760 = scalar_select %p759, %s756, 1
      %s761 = smul.addr %s758, 2
      %s762 = sadd.s32 %s760, %s761
      %s763 = scalar_lea.vmem %s5, %s762
      %s764 = sadd.s32 %s32, %s33
      %s765 = smul.u32 2, %s764
      %s766 = sadd.s32 %s31, %s32
      %p767 = scmp.lt.s32.totalorder %s766, 1
      %s768 = scalar_select %p767, %s766, 1
      %s769 = scalar_lea.vmem %s7, %s768
      %s770 = sadd.s32 %s31, %s32
      %s771 = sadd.s32 %s31, %s32
      %p772 = scmp.lt.s32.totalorder %s771, 1
      %s773 = scalar_select %p772, %s771, 1
      %s774 = scalar_lea.vmem %s8, %s773
      %s775 = sadd.s32 %s31, %s32
      %s776 = sadd.s32 %s31, %s32
      %p777 = scmp.lt.s32.totalorder %s776, 1
      %s778 = scalar_select %p777, %s776, 1
      %s779 = scalar_lea.vmem %s9, %s778
      %s780 = sadd.s32 %s31, %s32
      %s781 = sadd.s32 %s31, %s32
      %p782 = scmp.lt.s32.totalorder %s781, 1
      %s783 = scalar_select %p782, %s781, 1
      %s784 = scalar_lea.vmem %s10, %s783
      %s785 = sadd.s32 %s31, %s32
      %s786 = sadd.s32 %s31, %s32
      %p787 = scmp.lt.s32.totalorder %s786, 1
      %s788 = scalar_select %p787, %s786, 1
      %s789 = scalar_lea.vmem %s11, %s788
      %s790 = sadd.s32 %s31, %s32
      %s791 = sadd.s32 %s31, %s32
      %p792 = scmp.lt.s32.totalorder %s791, 1
      %s793 = scalar_select %p792, %s791, 1
      %s794 = scalar_lea.vmem %s12, %s793
      %s795 = sadd.s32 %s31, %s32
      %s796 = sadd.s32 %s31, %s32
      %p797 = scmp.lt.s32.totalorder %s796, 1
      %s798 = scalar_select %p797, %s796, 1
      %s799 = scalar_lea.vmem %s13, %s798
      %s800 = sadd.s32 %s31, %s32
      %s801 = sadd.s32 %s31, %s32
      %p802 = scmp.lt.s32.totalorder %s801, 1
      %s803 = scalar_select %p802, %s801, 1
      %s804 = scalar_lea.vmem %s14, %s803
      %s805 = sadd.s32 %s31, %s32
      %p806 = scmp.eq.s32.totalorder %s33, 0
      // Predicated region
      $region49: #{_forward_impl.9} parent=47 // pred_check
        %p807 = pneg %p806
      $region50: #{_forward_impl.9} parent=47 // pred_check_branch
        %809 = sbr.rel (%p807) target = $region52
      $region51: #{_forward_impl.9} parent=47 // pred_region
        %vm810 = vcmask 0
        %811 = vst.msk [vmem:[%s769] sm:$0x1] %vm810, 0.0
        %812 = vst.msk [vmem:[%s774] sm:$0x1] %vm810, 0.0
        %813 = vst.msk [vmem:[%s779] sm:$0x1] %vm810, 0.0
        %814 = vst.msk [vmem:[%s784] sm:$0x1] %vm810, 0.0
        %815 = vst.msk [vmem:[%s789] sm:$0x1] %vm810, 0.0
        %816 = vst.msk [vmem:[%s794] sm:$0x1] %vm810, 0.0
        %817 = vst.msk [vmem:[%s799] sm:$0x1] %vm810, 0.0
        %818 = vst.msk [vmem:[%s804] sm:$0x1] %vm810, 0.0
      $region52: #{_forward_impl.9} parent=47 // pred_fallthru
        _
      %v819 = vld [vmem:[%s707] sm:$0xff]
      %v820 = vld [vmem:[%s707 + $0x8] sm:$0xff]
      %v821 = vld [vmem:[%s707 + $0x10] sm:$0x33]
      %v822 = vunpack.c.l.bf16 %v819
      %v823 = vunpack.c.h.bf16 %v819
      %v824 = vunpack.c.l.bf16 %v820
      %v825 = vunpack.c.h.bf16 %v820
      %v826 = vunpack.c.l.bf16 %v821
      %v827 = vunpack.c.h.bf16 %v821
      %v828 = vld [vmem:[%s719] sm:$0xff]
      %v829 = vld [vmem:[%s719 + $0x8] sm:$0xff]
      %v830 = vld [vmem:[%s719 + $0x10] sm:$0x33]
      %v831 = vunpack.c.l.bf16 %v828
      %v832 = vunpack.c.h.bf16 %v828
      %v833 = vunpack.c.l.bf16 %v829
      %v834 = vunpack.c.h.bf16 %v829
      %v835 = vunpack.c.l.bf16 %v830
      %v836 = vunpack.c.h.bf16 %v830
      %v837 = vld [vmem:[%s730] sm:$0x3]
      %v838 = vunpack.c.l.bf16 %v837
      %v839 = vld [vmem:[%s741] sm:$0x3]
      %v840 = vunpack.c.l.bf16 %v839
      %v841 = vld [vmem:[%s752] sm:$0x3]
      %v842 = vld [vmem:[%s763] sm:$0x3]
      %v843 = vld [vmem:[%s6] sm:$0x3]
      %vm844 = vcmp.ne.s32.totalorder %v841, 255
      %vm845 = vcmask 1042432
      %v846 = vsel %vm845, %v826, -inf
      %v847 = vmax.f32 %v822, %v846
      %v848 = vmax.f32 %v847, %v824
      %v849 = vrot.slane %v848, 4
      %v850 = vmax.f32 %v848, %v849
      %v851 = vrot.slane %v850, 2
      %v852 = vmax.f32 %v850, %v851
      %v853 = vrot.slane %v852, 1
      %v854 = vmax.f32 %v852, %v853
      %v855 = vsel %vm845, %v827, -inf
      %v856 = vmax.f32 %v823, %v855
      %v857 = vmax.f32 %v856, %v825
      %v858 = vrot.slane %v857, 4
      %v859 = vmax.f32 %v857, %v858
      %v860 = vrot.slane %v859, 2
      %v861 = vmax.f32 %v859, %v860
      %v862 = vrot.slane %v861, 1
      %v863 = vmax.f32 %v861, %v862
      %v864 = vsub.f32 %v822, %v854
      %v865 = vsub.f32 %v823, %v863
      %v866 = vsub.f32 %v824, %v854
      %v867 = vsub.f32 %v825, %v863
      %v868 = vsub.f32 %v826, %v854
      %v869 = vsub.f32 %v827, %v863
      %v870 = vmul.f32 %v864, 1.442695
      %v871 = vpow.pop %v870
      %v872 = vmul.f32 %v865, 1.442695
      %v873 = vpow.pop %v872
      %v874 = vmul.f32 %v866, 1.442695
      %v875 = vpow.pop %v874
      %v876 = vmul.f32 %v867, 1.442695
      %v877 = vpow.pop %v876
      %v878 = vmul.f32 %v868, 1.442695
      %v879 = vpow.pop %v878
      %v880 = vmul.f32 %v869, 1.442695
      %v881 = vpow.pop %v880
      %v882 = vadd.f32 %v871, %v875
      %v883 = vsel %vm845, %v879, 0.0
      %v884 = vadd.f32 %v882, %v883
      %v885 = vrot.slane %v884, 4
      %v886 = vadd.f32 %v884, %v885
      %v887 = vrot.slane %v886, 2
      %v888 = vadd.f32 %v886, %v887
      %v889 = vrot.slane %v888, 1
      %v890 = vadd.f32 %v888, %v889
      %v891 = vadd.f32 %v873, %v877
      %v892 = vsel %vm845, %v881, 0.0
      %v893 = vadd.f32 %v891, %v892
      %v894 = vrot.slane %v893, 4
      %v895 = vadd.f32 %v893, %v894
      %v896 = vrot.slane %v895, 2
      %v897 = vadd.f32 %v895, %v896
      %v898 = vrot.slane %v897, 1
      %v899 = vadd.f32 %v897, %v898
      %v900 = vlog2.pop %v890
      %v901 = vmul.f32 %v900, 0.6931472
      %v902 = vlog2.pop %v899
      %v903 = vmul.f32 %v902, 0.6931472
      %v904 = vadd.f32 %v854, %v901
      %v905 = vadd.f32 %v863, %v903
      %v906 = vlaneseq
      %v907 = vshrl.u32 %v906, 7
      %v908 = vadd.s32 %v907, 8
      %v909 = vadd.s32 %v907, 16
      %v910 = vperm.slane %v841, 0
      %v911 = vperm.slane %v841, 1
      %vm912 = vcmp.eq.s32.totalorder %v907, %v910
      %vm913 = vcmp.eq.s32.totalorder %v907, %v911
      %vm914 = vcmp.eq.s32.totalorder %v908, %v910
      %vm915 = vcmp.eq.s32.totalorder %v908, %v911
      %vm916 = vcmp.eq.s32.totalorder %v909, %v910
      %vm917 = vcmp.eq.s32.totalorder %v909, %v911
      %v918 = vsel %vm912, %v822, 0.0
      %v919 = vsel %vm913, %v823, 0.0
      %v920 = vsel %vm914, %v824, 0.0
      %v921 = vsel %vm915, %v825, 0.0
      %v922 = vsel %vm916, %v826, 0.0
      %v923 = vsel %vm917, %v827, 0.0
      %v924 = vadd.f32 %v918, %v920
      %v925 = vsel %vm845, %v922, 0.0
      %v926 = vadd.f32 %v924, %v925
      %v927 = vrot.slane %v926, 4
      %v928 = vadd.f32 %v926, %v927
      %v929 = vrot.slane %v928, 2
      %v930 = vadd.f32 %v928, %v929
      %v931 = vrot.slane %v930, 1
      %v932 = vadd.f32 %v930, %v931
      %v933 = vadd.f32 %v919, %v921
      %v934 = vsel %vm845, %v923, 0.0
      %v935 = vadd.f32 %v933, %v934
      %v936 = vrot.slane %v935, 4
      %v937 = vadd.f32 %v935, %v936
      %v938 = vrot.slane %v937, 2
      %v939 = vadd.f32 %v937, %v938
      %v940 = vrot.slane %v939, 1
      %v941 = vadd.f32 %v939, %v940
      %v942 = vsub.f32 %v904, %v932
      %v943 = vsub.f32 %v905, %v941
      %v946 = vrot.slane %v943, 7
      %vm947 = vcmask 1040384
      %v948 = vsel %vm947, %v942, %v946
      %v950 = vsel %vm844, %v948, 0.0
      %v952 = vperm.slane %v950, 0
      %v953 = vperm.slane %v950, 1
      %v956 = vsel %vm947, %v952, 0.0
      %v957 = vsel %vm947, %v953, 0.0
      %v958 = vadd.f32 %v956, %v957
      %959 = vadd.xlane.f32.xlu0 %v958
      %v960 = vpop.xlane.xlu0 %959
      %v961 = vrot.slane %v960, 4
      %v962 = vadd.f32 %v960, %v961
      %v963 = vrot.slane %v962, 2
      %v964 = vadd.f32 %v962, %v963
      %v965 = vrot.slane %v964, 1
      %v966 = vadd.f32 %v964, %v965
      %s967 = vtos %v966
      %v968 = vsel %vm844, 1.0, 0.0
      %v970 = vperm.slane %v968, 0
      %v971 = vperm.slane %v968, 1
      %v974 = vsel %vm947, %v970, 0.0
      %v975 = vsel %vm947, %v971, 0.0
      %v976 = vadd.f32 %v974, %v975
      %977 = vadd.xlane.f32.xlu0 %v976
      %v978 = vpop.xlane.xlu0 %977
      %v979 = vrot.slane %v978, 4
      %v980 = vadd.f32 %v978, %v979
      %v981 = vrot.slane %v980, 2
      %v982 = vadd.f32 %v980, %v981
      %v983 = vrot.slane %v982, 1
      %v984 = vadd.f32 %v982, %v983
      %s985 = vtos %v984
      %v986 = vld [vmem:[%s769] sm:$0x1]
      %v987 = vstv %s967
      %v988 = vadd.f32 %v986, %v987
      %vm989 = vcmask 0
      %990 = vst.msk [vmem:[%s769] sm:$0x1] %vm989, %v988
      %v991 = vld [vmem:[%s774] sm:$0x1]
      %v992 = vstv %s985
      %v993 = vadd.f32 %v991, %v992
      %994 = vst.msk [vmem:[%s774] sm:$0x1] %vm989, %v993
      %v996 = vrot.slane %v838, 7
      %v997 = vrot.slane %v996, 2
      %v999 = vsub.f32 %v838, %v997
      %v1000 = vmul.f32 %v999, 1.442695
      %v1001 = vpow.pop %v1000
      %v1002 = vadd.f32 %v1001, 1.0
      %v1003 = vrcp.pop %v1002
      %v1004 = vmul.f32 %v1003, 0.8
      %v1005 = vmul.f32 %v840, 0.2
      %v1006 = vadd.f32 %v1004, %v1005
      %v1007 = vsub.f32 %v831, %v822
      %v1008 = vsub.f32 %v832, %v823
      %v1009 = vsub.f32 %v833, %v824
      %v1010 = vsub.f32 %v834, %v825
      %v1011 = vsub.f32 %v835, %v826
      %v1012 = vsub.f32 %v836, %v827
      %v1014 = vperm.slane %v1006, 0
      %v1015 = vperm.slane %v1006, 2
      %v1018 = vperm.slane %v1014, 0
      %v1019 = vperm.slane %v1015, 0
      %v1020 = vmul.f32 %v1007, %v1018
      %v1021 = vmul.f32 %v1008, %v1019
      %v1022 = vmul.f32 %v1009, %v1018
      %v1023 = vmul.f32 %v1010, %v1019
      %v1024 = vmul.f32 %v1011, %v1018
      %v1025 = vmul.f32 %v1012, %v1019
      %v1026 = vadd.f32 %v822, %v1020
      %v1027 = vadd.f32 %v823, %v1021
      %v1028 = vadd.f32 %v824, %v1022
      %v1029 = vadd.f32 %v825, %v1023
      %v1030 = vadd.f32 %v826, %v1024
      %v1031 = vadd.f32 %v827, %v1025
      %v1032 = vsel %vm845, %v1030, -inf
      %v1033 = vmax.f32 %v1026, %v1032
      %v1034 = vmax.f32 %v1033, %v1028
      %v1035 = vrot.slane %v1034, 4
      %v1036 = vmax.f32 %v1034, %v1035
      %v1037 = vrot.slane %v1036, 2
      %v1038 = vmax.f32 %v1036, %v1037
      %v1039 = vrot.slane %v1038, 1
      %v1040 = vmax.f32 %v1038, %v1039
      %v1041 = vsel %vm845, %v1031, -inf
      %v1042 = vmax.f32 %v1027, %v1041
      %v1043 = vmax.f32 %v1042, %v1029
      %v1044 = vrot.slane %v1043, 4
      %v1045 = vmax.f32 %v1043, %v1044
      %v1046 = vrot.slane %v1045, 2
      %v1047 = vmax.f32 %v1045, %v1046
      %v1048 = vrot.slane %v1047, 1
      %v1049 = vmax.f32 %v1047, %v1048
      %v1050 = vsub.f32 %v1026, %v1040
      %v1051 = vsub.f32 %v1027, %v1049
      %v1052 = vsub.f32 %v1028, %v1040
      %v1053 = vsub.f32 %v1029, %v1049
      %v1054 = vsub.f32 %v1030, %v1040
      %v1055 = vsub.f32 %v1031, %v1049
      %v1056 = vmul.f32 %v1050, 1.442695
      %v1057 = vpow.pop %v1056
      %v1058 = vmul.f32 %v1051, 1.442695
      %v1059 = vpow.pop %v1058
      %v1060 = vmul.f32 %v1052, 1.442695
      %v1061 = vpow.pop %v1060
      %v1062 = vmul.f32 %v1053, 1.442695
      %v1063 = vpow.pop %v1062
      %v1064 = vmul.f32 %v1054, 1.442695
      %v1065 = vpow.pop %v1064
      %v1066 = vmul.f32 %v1055, 1.442695
      %v1067 = vpow.pop %v1066
      %v1068 = vadd.f32 %v1057, %v1061
      %v1069 = vsel %vm845, %v1065, 0.0
      %v1070 = vadd.f32 %v1068, %v1069
      %v1071 = vrot.slane %v1070, 4
      %v1072 = vadd.f32 %v1070, %v1071
      %v1073 = vrot.slane %v1072, 2
      %v1074 = vadd.f32 %v1072, %v1073
      %v1075 = vrot.slane %v1074, 1
      %v1076 = vadd.f32 %v1074, %v1075
      %v1077 = vadd.f32 %v1059, %v1063
      %v1078 = vsel %vm845, %v1067, 0.0
      %v1079 = vadd.f32 %v1077, %v1078
      %v1080 = vrot.slane %v1079, 4
      %v1081 = vadd.f32 %v1079, %v1080
      %v1082 = vrot.slane %v1081, 2
      %v1083 = vadd.f32 %v1081, %v1082
      %v1084 = vrot.slane %v1083, 1
      %v1085 = vadd.f32 %v1083, %v1084
      %v1086 = vlog2.pop %v1076
      %v1087 = vmul.f32 %v1086, 0.6931472
      %v1088 = vlog2.pop %v1085
      %v1089 = vmul.f32 %v1088, 0.6931472
      %v1090 = vadd.f32 %v1040, %v1087
      %v1091 = vadd.f32 %v1049, %v1089
      %v1092 = vsel %vm912, %v1026, 0.0
      %v1093 = vsel %vm913, %v1027, 0.0
      %v1094 = vsel %vm914, %v1028, 0.0
      %v1095 = vsel %vm915, %v1029, 0.0
      %v1096 = vsel %vm916, %v1030, 0.0
      %v1097 = vsel %vm917, %v1031, 0.0
      %v1098 = vadd.f32 %v1092, %v1094
      %v1099 = vsel %vm845, %v1096, 0.0
      %v1100 = vadd.f32 %v1098, %v1099
      %v1101 = vrot.slane %v1100, 4
      %v1102 = vadd.f32 %v1100, %v1101
      %v1103 = vrot.slane %v1102, 2
      %v1104 = vadd.f32 %v1102, %v1103
      %v1105 = vrot.slane %v1104, 1
      %v1106 = vadd.f32 %v1104, %v1105
      %v1107 = vadd.f32 %v1093, %v1095
      %v1108 = vsel %vm845, %v1097, 0.0
      %v1109 = vadd.f32 %v1107, %v1108
      %v1110 = vrot.slane %v1109, 4
      %v1111 = vadd.f32 %v1109, %v1110
      %v1112 = vrot.slane %v1111, 2
      %v1113 = vadd.f32 %v1111, %v1112
      %v1114 = vrot.slane %v1113, 1
      %v1115 = vadd.f32 %v1113, %v1114
      %v1116 = vsub.f32 %v1090, %v1106
      %v1117 = vsub.f32 %v1091, %v1115
      %v1120 = vrot.slane %v1117, 7
      %v1121 = vsel %vm947, %v1116, %v1120
      %v1123 = vsel %vm844, %v1121, 0.0
      %v1125 = vperm.slane %v1123, 0
      %v1126 = vperm.slane %v1123, 1
      %v1129 = vsel %vm947, %v1125, 0.0
      %v1130 = vsel %vm947, %v1126, 0.0
      %v1131 = vadd.f32 %v1129, %v1130
      %1132 = vadd.xlane.f32.xlu0 %v1131
      %v1133 = vpop.xlane.xlu0 %1132
      %v1134 = vrot.slane %v1133, 4
      %v1135 = vadd.f32 %v1133, %v1134
      %v1136 = vrot.slane %v1135, 2
      %v1137 = vadd.f32 %v1135, %v1136
      %v1138 = vrot.slane %v1137, 1
      %v1139 = vadd.f32 %v1137, %v1138
      %s1140 = vtos %v1139
      %v1141 = vld [vmem:[%s779] sm:$0x1]
      %v1142 = vstv %s1140
      %v1143 = vadd.f32 %v1141, %v1142
      %1144 = vst.msk [vmem:[%s779] sm:$0x1] %vm989, %v1143
      %v1145 = vld [vmem:[%s784] sm:$0x1]
      %v1146 = vadd.f32 %v1145, %v992
      %1147 = vst.msk [vmem:[%s784] sm:$0x1] %vm989, %v1146
      %vm1148 = vcmp.ne.s32.totalorder %v842, 255
      %1149 = vst [vmem:[#allocation1] ss:$4 sm:$0xff] %v838
      %v1150 = vld.sshfl [vmem:[#allocation1] sm:$0xff pattern:$0x73625140]
      %v1151 = vld.sshfl [vmem:[#allocation1 + $0x8] sm:$0xff pattern:$0x73625140]
      %vm1154 = vcmask 1041408
      %v1155 = vsel %vm1154, %v1150, -inf
      %v1156 = vrot.slane %v1155, 4
      %v1157 = vmax.f32 %v1155, %v1156
      %v1158 = vrot.slane %v1157, 2
      %v1159 = vmax.f32 %v1157, %v1158
      %v1160 = vrot.slane %v1159, 1
      %v1161 = vmax.f32 %v1159, %v1160
      %v1162 = vsel %vm1154, %v1151, -inf
      %v1163 = vrot.slane %v1162, 4
      %v1164 = vmax.f32 %v1162, %v1163
      %v1165 = vrot.slane %v1164, 2
      %v1166 = vmax.f32 %v1164, %v1165
      %v1167 = vrot.slane %v1166, 1
      %v1168 = vmax.f32 %v1166, %v1167
      %v1171 = vrot.slane %v1168, 6
      %v1172 = vsel %vm1154, %v1161, %v1171
      %v1174 = vsub.f32 %v838, %v1172
      %v1175 = vmul.f32 %v1174, 1.442695
      %v1176 = vpow.pop %v1175
      %1178 = vst [vmem:[#allocation1] ss:$4 sm:$0xff] %v1176
      %v1179 = vld.sshfl [vmem:[#allocation1] sm:$0xff pattern:$0x73625140]
      %v1180 = vld.sshfl [vmem:[#allocation1 + $0x8] sm:$0xff pattern:$0x73625140]
      %v1183 = vsel %vm1154, %v1179, 0.0
      %v1184 = vrot.slane %v1183, 4
      %v1185 = vadd.f32 %v1183, %v1184
      %v1186 = vrot.slane %v1185, 2
      %v1187 = vadd.f32 %v1185, %v1186
      %v1188 = vrot.slane %v1187, 1
      %v1189 = vadd.f32 %v1187, %v1188
      %v1190 = vsel %vm1154, %v1180, 0.0
      %v1191 = vrot.slane %v1190, 4
      %v1192 = vadd.f32 %v1190, %v1191
      %v1193 = vrot.slane %v1192, 2
      %v1194 = vadd.f32 %v1192, %v1193
      %v1195 = vrot.slane %v1194, 1
      %v1196 = vadd.f32 %v1194, %v1195
      %v1197 = vlog2.pop %v1189
      %v1198 = vmul.f32 %v1197, 0.6931472
      %v1199 = vlog2.pop %v1196
      %v1200 = vmul.f32 %v1199, 0.6931472
      %v1201 = vadd.f32 %v1161, %v1198
      %v1202 = vadd.f32 %v1168, %v1200
      %v1203 = vperm.slane %v842, 0
      %v1204 = vperm.slane %v842, 1
      %vm1205 = vcmp.eq.s32.totalorder %v907, %v1203
      %vm1206 = vcmp.eq.s32.totalorder %v907, %v1204
      %1207 = vst [vmem:[#allocation1] ss:$4 sm:$0xff] %v838
      %v1208 = vld.sshfl [vmem:[#allocation1] sm:$0xff pattern:$0x73625140]
      %v1209 = vld.sshfl [vmem:[#allocation1 + $0x8] sm:$0xff pattern:$0x73625140]
      %v1212 = vsel %vm1205, %v1208, 0.0
      %v1213 = vsel %vm1206, %v1209, 0.0
      %v1214 = vsel %vm1154, %v1212, 0.0
      %v1215 = vrot.slane %v1214, 4
      %v1216 = vadd.f32 %v1214, %v1215
      %v1217 = vrot.slane %v1216, 2
      %v1218 = vadd.f32 %v1216, %v1217
      %v1219 = vrot.slane %v1218, 1
      %v1220 = vadd.f32 %v1218, %v1219
      %v1221 = vsel %vm1154, %v1213, 0.0
      %v1222 = vrot.slane %v1221, 4
      %v1223 = vadd.f32 %v1221, %v1222
      %v1224 = vrot.slane %v1223, 2
      %v1225 = vadd.f32 %v1223, %v1224
      %v1226 = vrot.slane %v1225, 1
      %v1227 = vadd.f32 %v1225, %v1226
      %1229 = vset.pattern.permute.xlu0 0
      %1230 = vperm.xlu0 %1229, %v843
      %v1231 = vpop.permute.xlu0 %1230
      %v1233 = vsel %vm1205, %v1231, 0.0
      %v1234 = vsel %vm1206, %v1231, 0.0
      %v1235 = vsel %vm1154, %v1233, 0.0
      %v1236 = vrot.slane %v1235, 4
      %v1237 = vadd.f32 %v1235, %v1236
      %v1238 = vrot.slane %v1237, 2
      %v1239 = vadd.f32 %v1237, %v1238
      %v1240 = vrot.slane %v1239, 1
      %v1241 = vadd.f32 %v1239, %v1240
      %v1242 = vsel %vm1154, %v1234, 0.0
      %v1243 = vrot.slane %v1242, 4
      %v1244 = vadd.f32 %v1242, %v1243
      %v1245 = vrot.slane %v1244, 2
      %v1246 = vadd.f32 %v1244, %v1245
      %v1247 = vrot.slane %v1246, 1
      %v1248 = vadd.f32 %v1246, %v1247
      %v1249 = vsub.f32 %v1201, %v1220
      %v1250 = vsub.f32 %v1202, %v1227
      %v1251 = vmul.f32 %v1249, %v1241
      %v1252 = vmul.f32 %v1250, %v1248
      %v1255 = vrot.slane %v1252, 7
      %v1256 = vsel %vm947, %v1251, %v1255
      %v1258 = vsel %vm1148, %v1256, 0.0
      %v1260 = vperm.slane %v1258, 0
      %v1261 = vperm.slane %v1258, 1
      %v1264 = vsel %vm947, %v1260, 0.0
      %v1265 = vsel %vm947, %v1261, 0.0
      %v1266 = vadd.f32 %v1264, %v1265
      %1267 = vadd.xlane.f32.xlu0 %v1266
      %v1268 = vpop.xlane.xlu0 %1267
      %v1269 = vrot.slane %v1268, 4
      %v1270 = vadd.f32 %v1268, %v1269
      %v1271 = vrot.slane %v1270, 2
      %v1272 = vadd.f32 %v1270, %v1271
      %v1273 = vrot.slane %v1272, 1
      %v1274 = vadd.f32 %v1272, %v1273
      %s1275 = vtos %v1274
      %v1278 = vrot.slane %v1248, 7
      %v1279 = vsel %vm947, %v1241, %v1278
      %v1281 = vsel %vm1148, %v1279, 0.0
      %v1283 = vperm.slane %v1281, 0
      %v1284 = vperm.slane %v1281, 1
      %v1287 = vsel %vm947, %v1283, 0.0
      %v1288 = vsel %vm947, %v1284, 0.0
      %v1289 = vadd.f32 %v1287, %v1288
      %1290 = vadd.xlane.f32.xlu0 %v1289
      %v1291 = vpop.xlane.xlu0 %1290
      %v1292 = vrot.slane %v1291, 4
      %v1293 = vadd.f32 %v1291, %v1292
      %v1294 = vrot.slane %v1293, 2
      %v1295 = vadd.f32 %v1293, %v1294
      %v1296 = vrot.slane %v1295, 1
      %v1297 = vadd.f32 %v1295, %v1296
      %s1298 = vtos %v1297
      %v1299 = vld [vmem:[%s789] sm:$0x1]
      %v1300 = vstv %s1275
      %v1301 = vadd.f32 %v1299, %v1300
      %1302 = vst.msk [vmem:[%s789] sm:$0x1] %vm989, %v1301
      %v1303 = vld [vmem:[%s794] sm:$0x1]
      %v1304 = vstv %s1298
      %v1305 = vadd.f32 %v1303, %v1304
      %1306 = vst.msk [vmem:[%s794] sm:$0x1] %vm989, %v1305
      %vm1308 = vcmp.gt.f32.partialorder %v838, %v996
      %v1309 = vsel %vm1308, 1, 0
      %v1310 = vperm.slane %v1309, 1
      %v1311 = vperm.slane %v1309, 3
      %v1312 = vperm.slane %v1310, 1
      %v1313 = vperm.slane %v1311, 1
      %vm1314 = vcmp.eq.s32.totalorder %v1312, 1
      %vm1315 = vcmp.eq.s32.totalorder %v1313, 1
      %v1316 = vsel %vm1314, %v831, 0.0
      %v1317 = vsel %vm1315, %v832, 0.0
      %v1318 = vsel %vm1314, %v833, 0.0
      %v1319 = vsel %vm1315, %v834, 0.0
      %v1320 = vsel %vm1314, %v835, 0.0
      %v1321 = vsel %vm1315, %v836, 0.0
      %v1323 = vunpack.c.l.s4 857870592
      %v1324 = vunpack.c.0.s8 %v1323
      %v1325 = vperm.slane %v841, %v1324
      %v1326 = vsel %vm1308, %v1325, 0
      %vm1327 = vcmp.ne.s32.totalorder %v1326, 0
      %v1328 = vsel %vm845, %v1320, -inf
      %v1329 = vmax.f32 %v1316, %v1328
      %v1330 = vmax.f32 %v1329, %v1318
      %v1331 = vrot.slane %v1330, 4
      %v1332 = vmax.f32 %v1330, %v1331
      %v1333 = vrot.slane %v1332, 2
      %v1334 = vmax.f32 %v1332, %v1333
      %v1335 = vrot.slane %v1334, 1
      %v1336 = vmax.f32 %v1334, %v1335
      %v1337 = vsel %vm845, %v1321, -inf
      %v1338 = vmax.f32 %v1317, %v1337
      %v1339 = vmax.f32 %v1338, %v1319
      %v1340 = vrot.slane %v1339, 4
      %v1341 = vmax.f32 %v1339, %v1340
      %v1342 = vrot.slane %v1341, 2
      %v1343 = vmax.f32 %v1341, %v1342
      %v1344 = vrot.slane %v1343, 1
      %v1345 = vmax.f32 %v1343, %v1344
      %v1346 = vsub.f32 %v1316, %v1336
      %v1347 = vsub.f32 %v1317, %v1345
      %v1348 = vsub.f32 %v1318, %v1336
      %v1349 = vsub.f32 %v1319, %v1345
      %v1350 = vsub.f32 %v1320, %v1336
      %v1351 = vsub.f32 %v1321, %v1345
      %v1352 = vmul.f32 %v1346, 1.442695
      %v1353 = vpow.pop %v1352
      %v1354 = vmul.f32 %v1347, 1.442695
      %v1355 = vpow.pop %v1354
      %v1356 = vmul.f32 %v1348, 1.442695
      %v1357 = vpow.pop %v1356
      %v1358 = vmul.f32 %v1349, 1.442695
      %v1359 = vpow.pop %v1358
      %v1360 = vmul.f32 %v1350, 1.442695
      %v1361 = vpow.pop %v1360
      %v1362 = vmul.f32 %v1351, 1.442695
      %v1363 = vpow.pop %v1362
      %v1364 = vadd.f32 %v1353, %v1357
      %v1365 = vsel %vm845, %v1361, 0.0
      %v1366 = vadd.f32 %v1364, %v1365
      %v1367 = vrot.slane %v1366, 4
      %v1368 = vadd.f32 %v1366, %v1367
      %v1369 = vrot.slane %v1368, 2
      %v1370 = vadd.f32 %v1368, %v1369
      %v1371 = vrot.slane %v1370, 1
      %v1372 = vadd.f32 %v1370, %v1371
      %v1373 = vadd.f32 %v1355, %v1359
      %v1374 = vsel %vm845, %v1363, 0.0
      %v1375 = vadd.f32 %v1373, %v1374
      %v1376 = vrot.slane %v1375, 4
      %v1377 = vadd.f32 %v1375, %v1376
      %v1378 = vrot.slane %v1377, 2
      %v1379 = vadd.f32 %v1377, %v1378
      %v1380 = vrot.slane %v1379, 1
      %v1381 = vadd.f32 %v1379, %v1380
      %v1382 = vlog2.pop %v1372
      %v1383 = vmul.f32 %v1382, 0.6931472
      %v1384 = vlog2.pop %v1381
      %v1385 = vmul.f32 %v1384, 0.6931472
      %v1386 = vadd.f32 %v1336, %v1383
      %v1387 = vadd.f32 %v1345, %v1385
      %v1388 = vperm.slane %v1326, 1
      %v1389 = vperm.slane %v1326, 3
      %v1390 = vperm.slane %v1388, 1
      %v1391 = vperm.slane %v1389, 1
      %vm1392 = vcmp.eq.s32.totalorder %v907, %v1390
      %vm1393 = vcmp.eq.s32.totalorder %v907, %v1391
      %vm1394 = vcmp.eq.s32.totalorder %v908, %v1390
      %vm1395 = vcmp.eq.s32.totalorder %v908, %v1391
      %vm1396 = vcmp.eq.s32.totalorder %v909, %v1390
      %vm1397 = vcmp.eq.s32.totalorder %v909, %v1391
      %v1398 = vsel %vm1392, %v1316, 0.0
      %v1399 = vsel %vm1393, %v1317, 0.0
      %v1400 = vsel %vm1394, %v1318, 0.0
      %v1401 = vsel %vm1395, %v1319, 0.0
      %v1402 = vsel %vm1396, %v1320, 0.0
      %v1403 = vsel %vm1397, %v1321, 0.0
      %v1404 = vadd.f32 %v1398, %v1400
      %v1405 = vsel %vm845, %v1402, 0.0
      %v1406 = vadd.f32 %v1404, %v1405
      %v1407 = vrot.slane %v1406, 4
      %v1408 = vadd.f32 %v1406, %v1407
      %v1409 = vrot.slane %v1408, 2
      %v1410 = vadd.f32 %v1408, %v1409
      %v1411 = vrot.slane %v1410, 1
      %v1412 = vadd.f32 %v1410, %v1411
      %v1413 = vadd.f32 %v1399, %v1401
      %v1414 = vsel %vm845, %v1403, 0.0
      %v1415 = vadd.f32 %v1413, %v1414
      %v1416 = vrot.slane %v1415, 4
      %v1417 = vadd.f32 %v1415, %v1416
      %v1418 = vrot.slane %v1417, 2
      %v1419 = vadd.f32 %v1417, %v1418
      %v1420 = vrot.slane %v1419, 1
      %v1421 = vadd.f32 %v1419, %v1420
      %v1422 = vsub.f32 %v1386, %v1412
      %v1423 = vsub.f32 %v1387, %v1421
      %v1426 = vrot.slane %v1423, 6
      %v1427 = vsel %vm1154, %v1422, %v1426
      %v1428 = vrot.slane %v1427, 7
      %v1430 = vsel %vm1327, %v1428, 0.0
      %v1432 = vperm.slane %v1430, 1
      %v1433 = vperm.slane %v1430, 3
      %v1436 = vsel %vm947, %v1432, 0.0
      %v1437 = vsel %vm947, %v1433, 0.0
      %v1438 = vadd.f32 %v1436, %v1437
      %1439 = vadd.xlane.f32.xlu0 %v1438
      %v1440 = vpop.xlane.xlu0 %1439
      %v1441 = vrot.slane %v1440, 4
      %v1442 = vadd.f32 %v1440, %v1441
      %v1443 = vrot.slane %v1442, 2
      %v1444 = vadd.f32 %v1442, %v1443
      %v1445 = vrot.slane %v1444, 1
      %v1446 = vadd.f32 %v1444, %v1445
      %s1447 = vtos %v1446
      %v1448 = vsel %vm1327, 1.0, 0.0
      %v1450 = vperm.slane %v1448, 1
      %v1451 = vperm.slane %v1448, 3
      %v1454 = vsel %vm947, %v1450, 0.0
      %v1455 = vsel %vm947, %v1451, 0.0
      %v1456 = vadd.f32 %v1454, %v1455
      %1457 = vadd.xlane.f32.xlu0 %v1456
      %v1458 = vpop.xlane.xlu0 %1457
      %v1459 = vrot.slane %v1458, 4
      %v1460 = vadd.f32 %v1458, %v1459
      %v1461 = vrot.slane %v1460, 2
      %v1462 = vadd.f32 %v1460, %v1461
      %v1463 = vrot.slane %v1462, 1
      %v1464 = vadd.f32 %v1462, %v1463
      %s1465 = vtos %v1464
      %v1466 = vld [vmem:[%s799] sm:$0x1]
      %v1467 = vstv %s1447
      %v1468 = vadd.f32 %v1466, %v1467
      %1469 = vst.msk [vmem:[%s799] sm:$0x1] %vm989, %v1468
      %v1470 = vld [vmem:[%s804] sm:$0x1]
      %v1471 = vstv %s1465
      %v1472 = vadd.f32 %v1470, %v1471
      %1473 = vst.msk [vmem:[%s804] sm:$0x1] %vm989, %v1472
      %s1474 = sadd.s32 %s31, %s32
      %p1475 = scmp.lt.s32.totalorder %s1474, 1
      %s1476 = scalar_select %p1475, %s1474, 1
      %s1477 = scalar_lea.vmem %s7, %s1476
      %s1478 = sadd.s32 %s31, %s32
      %p1479 = scmp.lt.s32.totalorder %s1478, 1
      %s1480 = scalar_select %p1479, %s1478, 1
      %s1481 = scalar_lea.vmem %s8, %s1480
      %s1482 = sadd.s32 %s31, %s32
      %p1483 = scmp.lt.s32.totalorder %s1482, 1
      %s1484 = scalar_select %p1483, %s1482, 1
      %s1485 = scalar_lea.vmem %s9, %s1484
      %s1486 = sadd.s32 %s31, %s32
      %p1487 = scmp.lt.s32.totalorder %s1486, 1
      %s1488 = scalar_select %p1487, %s1486, 1
      %s1489 = scalar_lea.vmem %s10, %s1488
      %s1490 = sadd.s32 %s31, %s32
      %p1491 = scmp.lt.s32.totalorder %s1490, 1
      %s1492 = scalar_select %p1491, %s1490, 1
      %s1493 = scalar_lea.vmem %s11, %s1492
      %s1494 = sadd.s32 %s31, %s32
      %p1495 = scmp.lt.s32.totalorder %s1494, 1
      %s1496 = scalar_select %p1495, %s1494, 1
      %s1497 = scalar_lea.vmem %s12, %s1496
      %s1498 = sadd.s32 %s31, %s32
      %p1499 = scmp.lt.s32.totalorder %s1498, 1
      %s1500 = scalar_select %p1499, %s1498, 1
      %s1501 = scalar_lea.vmem %s13, %s1500
      %s1502 = sadd.s32 %s31, %s32
      %p1503 = scmp.lt.s32.totalorder %s1502, 1
      %s1504 = scalar_select %p1503, %s1502, 1
      %s1505 = scalar_lea.vmem %s14, %s1504
      // Predicated region
      $region53: #{_forward_impl.9} parent=47 // pred_check
        %p1506 = pneg %p266
      $region54: #{_forward_impl.9} parent=47 // pred_check_branch
        %1508 = sbr.rel (%p1506) target = $region56
      $region55: #{_forward_impl.9} parent=47 // pred_region
        %s1509 = sadd.s32 %s31, %s32
      $region56: #{_forward_impl.9} parent=47 // pred_fallthru
        _
      // Predicated region
      $region57: #{_forward_impl.9} parent=47 // pred_check
        %p1510 = pneg %p294
      $region58: #{_forward_impl.9} parent=47 // pred_check_branch
        %1512 = sbr.rel (%p1510) target = $region60
      $region59: #{_forward_impl.9} parent=47 // pred_region
        %s1513 = sadd.s32 %s31, %s32
      $region60: #{_forward_impl.9} parent=47 // pred_fallthru
        _
      // Predicated region
      $region61: #{_forward_impl.9} parent=47 // pred_check
        %p1514 = pneg %p322
      $region62: #{_forward_impl.9} parent=47 // pred_check_branch
        %1516 = sbr.rel (%p1514) target = $region64
      $region63: #{_forward_impl.9} parent=47 // pred_region
        %s1517 = sadd.s32 %s31, %s32
      $region64: #{_forward_impl.9} parent=47 // pred_fallthru
        _
      // Predicated region
      $region65: #{_forward_impl.9} parent=47 // pred_check
        %p1518 = pneg %p350
      $region66: #{_forward_impl.9} parent=47 // pred_check_branch
        %1520 = sbr.rel (%p1518) target = $region68
      $region67: #{_forward_impl.9} parent=47 // pred_region
        %s1521 = sadd.s32 %s31, %s32
      $region68: #{_forward_impl.9} parent=47 // pred_fallthru
        _
      // Predicated region
      $region69: #{_forward_impl.9} parent=47 // pred_check
        %p1522 = pneg %p378
      $region70: #{_forward_impl.9} parent=47 // pred_check_branch
        %1524 = sbr.rel (%p1522) target = $region72
      $region71: #{_forward_impl.9} parent=47 // pred_region
        %s1525 = sadd.s32 %s31, %s32
      $region72: #{_forward_impl.9} parent=47 // pred_fallthru
        _
      // Predicated region
      $region73: #{_forward_impl.9} parent=47 // pred_check
        %p1526 = pneg %p406
      $region74: #{_forward_impl.9} parent=47 // pred_check_branch
        %1528 = sbr.rel (%p1526) target = $region76
      $region75: #{_forward_impl.9} parent=47 // pred_region
        %s1529 = sadd.s32 %s31, %s32
      $region76: #{_forward_impl.9} parent=47 // pred_fallthru
        _
      // Predicated region
      $region77: #{_forward_impl.9} parent=47 // pred_check
        %p1530 = pneg %p434
      $region78: #{_forward_impl.9} parent=47 // pred_check_branch
        %1532 = sbr.rel (%p1530) target = $region80
      $region79: #{_forward_impl.9} parent=47 // pred_region
        %s1533 = sadd.s32 %s31, %s32
      $region80: #{_forward_impl.9} parent=47 // pred_fallthru
        _
      // Predicated region
      $region81: #{_forward_impl.9} parent=47 // pred_check
        %p1534 = pneg %p462
      $region82: #{_forward_impl.9} parent=47 // pred_check_branch
        %1536 = sbr.rel (%p1534) target = $region84
      $region83: #{_forward_impl.9} parent=47 // pred_region
        %s1537 = sadd.s32 %s31, %s32
      $region84: #{_forward_impl.9} parent=47 // pred_fallthru
        _
    $region48: #{_forward_impl.9} parent=5 // pred_fallthru
      _
    %p1538 = scmp.le.s32.totalorder 2, %s21
    // Predicated region
    $region85: #{_forward_impl.9} parent=5 // pred_check
      %p1539 = pneg %p1538
    $region86: #{_forward_impl.9} parent=5 // pred_check_branch
      %1541 = sbr.rel (%p1539) target = $region88
    $region87: #{_forward_impl.9} parent=5 // pred_region
      %s1542 = ssub.s32 %s21, 2
      // Predicated region
      $region89: #{_forward_impl.9} parent=87 // pred_check
        %p1543 = pneg %p272
      $region90: #{_forward_impl.9} parent=87 // pred_check_branch
        %1545 = sbr.rel (%p1543) target = $region92
      $region91: #{_forward_impl.9} parent=87 // pred_region
        %s1546 = sadd.s32 %s34, %s35
        %p1547 = scmp.lt.s32.totalorder %s1546, 1
        %s1548 = scalar_select %p1547, %s1546, 1
        %s1549 = scalar_lea.vmem %s7, %s1548
      $region92: #{_forward_impl.9} parent=87 // pred_fallthru
        _
      // Predicated region
      $region93: #{_forward_impl.9} parent=87 // pred_check
        %p1550 = pneg %p300
      $region94: #{_forward_impl.9} parent=87 // pred_check_branch
        %1552 = sbr.rel (%p1550) target = $region96
      $region95: #{_forward_impl.9} parent=87 // pred_region
        %s1553 = sadd.s32 %s34, %s35
        %p1554 = scmp.lt.s32.totalorder %s1553, 1
        %s1555 = scalar_select %p1554, %s1553, 1
        %s1556 = scalar_lea.vmem %s8, %s1555
      $region96: #{_forward_impl.9} parent=87 // pred_fallthru
        _
      // Predicated region
      $region97: #{_forward_impl.9} parent=87 // pred_check
        %p1557 = pneg %p328
      $region98: #{_forward_impl.9} parent=87 // pred_check_branch
        %1559 = sbr.rel (%p1557) target = $region100
      $region99: #{_forward_impl.9} parent=87 // pred_region
        %s1560 = sadd.s32 %s34, %s35
        %p1561 = scmp.lt.s32.totalorder %s1560, 1
        %s1562 = scalar_select %p1561, %s1560, 1
        %s1563 = scalar_lea.vmem %s9, %s1562
      $region100: #{_forward_impl.9} parent=87 // pred_fallthru
        _
      // Predicated region
      $region101: #{_forward_impl.9} parent=87 // pred_check
        %p1564 = pneg %p356
      $region102: #{_forward_impl.9} parent=87 // pred_check_branch
        %1566 = sbr.rel (%p1564) target = $region104
      $region103: #{_forward_impl.9} parent=87 // pred_region
        %s1567 = sadd.s32 %s34, %s35
        %p1568 = scmp.lt.s32.totalorder %s1567, 1
        %s1569 = scalar_select %p1568, %s1567, 1
        %s1570 = scalar_lea.vmem %s10, %s1569
      $region104: #{_forward_impl.9} parent=87 // pred_fallthru
        _
      // Predicated region
      $region105: #{_forward_impl.9} parent=87 // pred_check
        %p1571 = pneg %p384
      $region106: #{_forward_impl.9} parent=87 // pred_check_branch
        %1573 = sbr.rel (%p1571) target = $region108
      $region107: #{_forward_impl.9} parent=87 // pred_region
        %s1574 = sadd.s32 %s34, %s35
        %p1575 = scmp.lt.s32.totalorder %s1574, 1
        %s1576 = scalar_select %p1575, %s1574, 1
        %s1577 = scalar_lea.vmem %s11, %s1576
      $region108: #{_forward_impl.9} parent=87 // pred_fallthru
        _
      // Predicated region
      $region109: #{_forward_impl.9} parent=87 // pred_check
        %p1578 = pneg %p412
      $region110: #{_forward_impl.9} parent=87 // pred_check_branch
        %1580 = sbr.rel (%p1578) target = $region112
      $region111: #{_forward_impl.9} parent=87 // pred_region
        %s1581 = sadd.s32 %s34, %s35
        %p1582 = scmp.lt.s32.totalorder %s1581, 1
        %s1583 = scalar_select %p1582, %s1581, 1
        %s1584 = scalar_lea.vmem %s12, %s1583
      $region112: #{_forward_impl.9} parent=87 // pred_fallthru
        _
      // Predicated region
      $region113: #{_forward_impl.9} parent=87 // pred_check
        %p1585 = pneg %p440
      $region114: #{_forward_impl.9} parent=87 // pred_check_branch
        %1587 = sbr.rel (%p1585) target = $region116
      $region115: #{_forward_impl.9} parent=87 // pred_region
        %s1588 = sadd.s32 %s34, %s35
        %p1589 = scmp.lt.s32.totalorder %s1588, 1
        %s1590 = scalar_select %p1589, %s1588, 1
        %s1591 = scalar_lea.vmem %s13, %s1590
      $region116: #{_forward_impl.9} parent=87 // pred_fallthru
        _
      // Predicated region
      $region117: #{_forward_impl.9} parent=87 // pred_check
        %p1592 = pneg %p468
      $region118: #{_forward_impl.9} parent=87 // pred_check_branch
        %1594 = sbr.rel (%p1592) target = $region120
      $region119: #{_forward_impl.9} parent=87 // pred_region
        %s1595 = sadd.s32 %s34, %s35
        %p1596 = scmp.lt.s32.totalorder %s1595, 1
        %s1597 = scalar_select %p1596, %s1595, 1
        %s1598 = scalar_lea.vmem %s14, %s1597
      $region120: #{_forward_impl.9} parent=87 // pred_fallthru
        _
    $region88: #{_forward_impl.9} parent=5 // pred_fallthru
      _
  $region6: #{_forward_impl.9} parent=0 // loop_footer
    %s25 = sadd.s32 1, %s21
  $region7: #{_forward_impl.9} parent=0 // loop_footer_branch
    %20 = sbr.rel target = $region3
  $region8: #{_forward_impl.9} parent=0 // loop_exit
    _

</llo_original>
